<compile_context>
chip_gen: v6e
topology: v6e:2x2x1
jax: 0.10.0
libtpu: 0.0.40
codegen_flags: <defaults>
</compile_context>

<pallas_src>
import jax
import jax.numpy as jnp
from jax.experimental import pallas as pl
from jax.experimental.pallas import tpu as pltpu

NEG_INF = -1e30  # large negative instead of -inf; exp() underflows to exactly 0


# --------------------------------------------------------------------------
# Kernel A: fused projections + energies + joint softmax + AV + partial combine
# --------------------------------------------------------------------------
def _cca_attention_kernel(gamma_ref, x_hw_ref, x_wh_ref, w_ref, b_ref,
                          part_ref, gouth_ref):
    H = x_hw_ref.shape[1]
    W = x_hw_ref.shape[2]
    C = x_hw_ref.shape[3]
    Cq = (w_ref.shape[1] - C) // 2
    bf = jnp.bfloat16

    g = gamma_ref[0]

    x_hw = x_hw_ref[0]          # (H, W, C)  f32  (kept f32 for the residual)
    x_wh = x_wh_ref[0]          # (W, H, C)  bf16 (matmul-only copy)
    w_all = w_ref[...]          # (C, C+2Cq) bf16, columns = [Wv | Wq | Wk]
    b_all = b_ref[...]          # (1, C+2Cq) f32

    def project(x2d_bf16):      # one fused 1x1-conv matmul per layout
        return jnp.dot(x2d_bf16, w_all,
                       preferred_element_type=jnp.float32) + b_all

    qkv_w = project(x_hw.astype(bf).reshape(H * W, C))   # (H*W, C+2Cq) f32
    qkv_h = project(x_wh.reshape(W * H, C))              # (W*H, C+2Cq) f32

    v_w = qkv_w[:, :C].reshape(H, W, C)
    q_w = qkv_w[:, C:C + Cq].reshape(H, W, Cq)
    k_w = qkv_w[:, C + Cq:].reshape(H, W, Cq)

    v_h = qkv_h[:, :C].reshape(W, H, C)
    q_h = qkv_h[:, C:C + Cq].reshape(W, H, Cq)
    k_h = qkv_h[:, C + Cq:].reshape(W, H, Cq)

    # Energies: e_h attends along the column (batch = w), e_w along the row.
    e_h = jnp.einsum('wic,wjc->wij', q_h.astype(bf), k_h.astype(bf),
                     preferred_element_type=jnp.float32)       # (W, H, H)
    e_w = jnp.einsum('hic,hjc->hij', q_w.astype(bf), k_w.astype(bf),
                     preferred_element_type=jnp.float32)       # (H, W, W)

    # -inf on the (h1 == h2) diagonal (the pixel itself is covered by e_w).
    ii = jax.lax.broadcasted_iota(jnp.int32, (W, H, H), 1)
    jj = jax.lax.broadcasted_iota(jnp.int32, (W, H, H), 2)
    e_h = jnp.where(ii == jj, NEG_INF, e_h)

    # Joint softmax over the concatenated (H + W) logits: shared max / denom.
    m_h = jnp.max(e_h, axis=-1)            # (W, H)
    m_w = jnp.max(e_w, axis=-1)            # (H, W)
    m = jnp.maximum(m_h.T, m_w)            # (H, W)
    m_t = m.T                              # (W, H)

    p_h = jnp.exp(e_h - m_t[:, :, None])   # (W, H, H)
    p_w = jnp.exp(e_w - m[:, :, None])     # (H, W, W)

    denom = jnp.sum(p_h, axis=-1).T + jnp.sum(p_w, axis=-1)    # (H, W)
    inv = pl.reciprocal(denom, approx=True)                    # EUP slot
    inv_t = inv.T                                              # (W, H)

    attn_h = (p_h * inv_t[:, :, None]).astype(bf)   # (W, H, H)
    attn_w = (p_w * inv[:, :, None]).astype(bf)     # (H, W, W)

    out_h = jnp.einsum('wij,wjc->wic', attn_h, v_h.astype(bf),
                       preferred_element_type=jnp.float32)     # (W, H, C)
    out_w = jnp.einsum('hij,hjc->hic', attn_w, v_w.astype(bf),
                       preferred_element_type=jnp.float32)     # (H, W, C)

    # Partial combine fused here; the height-branch term needs a (W,H)->(H,W)
    # relayout that Mosaic can't do in-kernel, so it's emitted separately.
    part_ref[0] = (g * out_w + x_hw).astype(part_ref.dtype)    # (H, W, C)
    gouth_ref[0] = (g * out_h).astype(gouth_ref.dtype)         # (W, H, C)


# --------------------------------------------------------------------------
# Kernel B: lane-dense residual add  out = (gamma*out_w + x) + gamma*out_h
# --------------------------------------------------------------------------
def _cca_residual_kernel(part_ref, goh_ref, o_ref):
    o_ref[...] = part_ref[...] + goh_ref[...]


# --------------------------------------------------------------------------
# Wrapper
# --------------------------------------------------------------------------
def criss_cross_attention(x, params):
    """x: (b, C, H, W) float32, NCHW like the PyTorch module."""
    Wq, bq, Wk, bk, Wv, bv, gamma = params
    b, C, H, W = x.shape
    Cq = Wq.shape[0]

    x_hw = jnp.transpose(x, (0, 2, 3, 1))                        # (b,H,W,C) f32
    x_wh = jnp.transpose(x, (0, 3, 2, 1)).astype(jnp.bfloat16)   # (b,W,H,C) bf16

    # Fused projection weight [Wv | Wq | Wk] in bf16, biases in f32.
    w_all = jnp.concatenate([Wv.T, Wq.T, Wk.T], axis=1).astype(jnp.bfloat16)
    b_all = jnp.concatenate([bv, bq, bk]).reshape(1, C + 2 * Cq).astype(jnp.float32)

    gamma_arr = jnp.asarray(gamma, jnp.float32).reshape(1)

    # Advisory cost estimate (per-forward totals).
    proj_flops = 2 * 2 * H * W * C * (C + 2 * Cq)
    energy_flops = 2 * Cq * (W * H * H + H * W * W)
    av_flops = 2 * C * (W * H * H + H * W * W)
    cost = pl.CostEstimate(
        flops=int(b * (proj_flops + energy_flops + av_flops)),
        transcendentals=int(b * (W * H * H + H * W * W + H * W)),
        bytes_accessed=int(b * (H * W * C * 4 + W * H * C * 2
                                + 2 * H * W * C * 4)
                           + C * (C + 2 * Cq) * 2 + (C + 2 * Cq) * 4))

    out_part, gout_h = pl.pallas_call(
        _cca_attention_kernel,
        out_shape=(jax.ShapeDtypeStruct((b, H, W, C), jnp.float32),
                   jax.ShapeDtypeStruct((b, W, H, C), jnp.float32)),
        grid=(b,),
        in_specs=[
            pl.BlockSpec(memory_space=pltpu.MemorySpace.SMEM),        # gamma
            pl.BlockSpec((1, H, W, C), lambda i: (i, 0, 0, 0)),       # x_hw f32
            pl.BlockSpec((1, W, H, C), lambda i: (i, 0, 0, 0)),       # x_wh bf16
            pl.BlockSpec((C, C + 2 * Cq), lambda i: (0, 0)),          # W_all
            pl.BlockSpec((1, C + 2 * Cq), lambda i: (0, 0)),          # b_all
        ],
        out_specs=(pl.BlockSpec((1, H, W, C), lambda i: (i, 0, 0, 0)),
                   pl.BlockSpec((1, W, H, C), lambda i: (i, 0, 0, 0))),
        compiler_params=pltpu.CompilerParams(
            dimension_semantics=("parallel",)),
        cost_estimate=cost,
    )(gamma_arr, x_hw, x_wh, w_all, b_all)

    # XLA glue: relayout gamma*out_h to (b,H,W,C) and flatten both operands to
    # a lane-dense (b, H, W*C) view for the residual kernel.
    gout_h_t = jnp.transpose(gout_h, (0, 2, 1, 3)).reshape(b, H, W * C)
    part2 = out_part.reshape(b, H, W * C)

    out2 = pl.pallas_call(
        _cca_residual_kernel,
        out_shape=jax.ShapeDtypeStruct((b, H, W * C), jnp.float32),
        grid=(b,),
        in_specs=[pl.BlockSpec((1, H, W * C), lambda i: (i, 0, 0)),
                  pl.BlockSpec((1, H, W * C), lambda i: (i, 0, 0))],
        out_specs=pl.BlockSpec((1, H, W * C), lambda i: (i, 0, 0)),
        compiler_params=pltpu.CompilerParams(
            dimension_semantics=("parallel",)),
        input_output_aliases={0: 0},     # write result in place of `part2`
    )(part2, gout_h_t)

    out_nhwc = out2.reshape(b, H, W, C)
    return jnp.transpose(out_nhwc, (0, 3, 1, 2))   # back to NCHW


# --------------------------------------------------------------------------
# Pure-JAX reference (mirrors the PyTorch forward exactly, NCHW)
# --------------------------------------------------------------------------
def reference_forward(x, params):
    Wq, bq, Wk, bk, Wv, bv, gamma = params
    b, C, h, w = x.shape

    def conv1x1(xx, wgt, bias):
        return jnp.einsum('bchw,oc->bohw', xx, wgt) + bias[None, :, None, None]

    q = conv1x1(x, Wq, bq)
    k = conv1x1(x, Wk, bk)
    v = conv1x1(x, Wv, bv)

    e_h = jnp.einsum('bciw,bcjw->biwj', q, k)              # (b, h1, w, h2)
    eye = jnp.eye(h, dtype=bool)
    e_h = jnp.where(eye[None, :, None, :], -jnp.inf, e_h)
    e_w = jnp.einsum('bchi,bchj->bhij', q, k)              # (b, h, w1, w2)

    attn = jax.nn.softmax(jnp.concatenate([e_h, e_w], axis=-1), axis=-1)
    attn_h = attn[..., :h]
    attn_w = attn[..., h:]

    out_h = jnp.einsum('bcjw,biwj->bciw', v, attn_h)
    out_w = jnp.einsum('bchj,bhij->bchi', v, attn_w)
    return gamma * (out_h + out_w) + x


# --------------------------------------------------------------------------
def init_params(key, in_dim):
    cq = in_dim // 8
    ks = jax.random.split(key, 6)
    scale = 0.1
    Wq = scale * jax.random.normal(ks[0], (cq, in_dim), jnp.float32)
    bq = scale * jax.random.normal(ks[1], (cq,), jnp.float32)
    Wk = scale * jax.random.normal(ks[2], (cq, in_dim), jnp.float32)
    bk = scale * jax.random.normal(ks[3], (cq,), jnp.float32)
    Wv = scale * jax.random.normal(ks[4], (in_dim, in_dim), jnp.float32)
    bv = scale * jax.random.normal(ks[5], (in_dim,), jnp.float32)
    # nn.Module initializes gamma to 0 (output == x); use a nonzero
    # deterministic value so the attention path is actually exercised.
    gamma = jnp.float32(0.5)
    return (Wq, bq, Wk, bk, Wv, bv, gamma)


if __name__ == "__main__":
    key = jax.random.PRNGKey(0)
    kx, kp = jax.random.split(key)

    B, C, H, W = 2, 64, 16, 8
    x = jax.random.normal(kx, (B, C, H, W), jnp.float32)
    params = init_params(kp, C)

    out = jax.block_until_ready(criss_cross_attention(x, params))

    # f32 "ground-truth" reference; the kernel runs its matmuls in bf16 with
    # f32 accumulation, so compare at bf16-level tolerance.
    with jax.default_matmul_precision("highest"):
        ref = jax.block_until_ready(reference_forward(x, params))

    assert out.shape == x.shape and out.dtype == x.dtype
    max_err = float(jnp.max(jnp.abs(out - ref)))
    if not bool(jnp.allclose(out, ref, atol=5e-2, rtol=5e-2)):
        raise AssertionError(f"mismatch vs reference, max abs err = {max_err}")

    print("KERNEL_OK")
</pallas_src>

<mosaic_0001>
module attributes {stable_mosaic.version = 11 : i64} {
  func.func @_cca_attention_kernel(%arg0: i32, %arg1: memref<1xf32, #tpu.memory_space<smem>>, %arg2: memref<1x16x8x64xf32, #tpu.memory_space<vmem>>, %arg3: memref<1x8x16x64xbf16, #tpu.memory_space<vmem>>, %arg4: memref<64x80xbf16, #tpu.memory_space<vmem>>, %arg5: memref<1x80xf32, #tpu.memory_space<vmem>>, %arg6: memref<1x16x8x64xf32, #tpu.memory_space<vmem>>, %arg7: memref<1x8x16x64xf32, #tpu.memory_space<vmem>>) attributes {dimension_semantics = [#tpu.dimension_semantics<parallel>], iteration_bounds = array<i64: 2>, scalar_prefetch = 0 : i64, scratch_operands = 0 : i64, tpu.core_type = #tpu.core_type<tc>, window_params = [{transform_indices = @transform_0, window_bounds = array<i64: 1>}, {transform_indices = @transform_1, window_bounds = array<i64: 1, 16, 8, 64>}, {transform_indices = @transform_2, window_bounds = array<i64: 1, 8, 16, 64>}, {pipeline_mode = #tpu.pipeline_mode<synchronous>, transform_indices = @transform_3, window_bounds = array<i64: 64, 80>}, {pipeline_mode = #tpu.pipeline_mode<synchronous>, transform_indices = @transform_4, window_bounds = array<i64: 1, 80>}, {transform_indices = @transform_5, window_bounds = array<i64: 1, 16, 8, 64>}, {transform_indices = @transform_6, window_bounds = array<i64: 1, 8, 16, 64>}]} {
    %c0 = arith.constant 0 : index
    %0 = memref.load %arg1[%c0] : memref<1xf32, #tpu.memory_space<smem>>
    %c0_0 = arith.constant 0 : index
    %c0_1 = arith.constant 0 : index
    %c0_2 = arith.constant 0 : index
    %c0_3 = arith.constant 0 : index
    %1 = vector.load %arg2[%c0_0, %c0_1, %c0_2, %c0_3] : memref<1x16x8x64xf32, #tpu.memory_space<vmem>>, vector<1x16x8x64xf32>
    %2 = vector.shape_cast %1 : vector<1x16x8x64xf32> to vector<16x8x64xf32>
    %c0_4 = arith.constant 0 : index
    %c0_5 = arith.constant 0 : index
    %c0_6 = arith.constant 0 : index
    %c0_7 = arith.constant 0 : index
    %3 = vector.load %arg3[%c0_4, %c0_5, %c0_6, %c0_7] : memref<1x8x16x64xbf16, #tpu.memory_space<vmem>>, vector<1x8x16x64xbf16>
    %4 = vector.shape_cast %3 : vector<1x8x16x64xbf16> to vector<8x16x64xbf16>
    %c0_8 = arith.constant 0 : index
    %c0_9 = arith.constant 0 : index
    %5 = vector.load %arg4[%c0_8, %c0_9] : memref<64x80xbf16, #tpu.memory_space<vmem>>, vector<64x80xbf16>
    %c0_10 = arith.constant 0 : index
    %c0_11 = arith.constant 0 : index
    %6 = vector.load %arg5[%c0_10, %c0_11] : memref<1x80xf32, #tpu.memory_space<vmem>>, vector<1x80xf32>
    %7 = arith.truncf %2 : vector<16x8x64xf32> to vector<16x8x64xbf16>
    %8 = vector.shape_cast %7 : vector<16x8x64xbf16> to vector<128x64xbf16>
    %cst = arith.constant dense<0.000000e+00> : vector<128x80xf32>
    %9 = tpu.matmul %8, %5, %cst {dimension_numbers = #tpu.dot_dimension_numbers<[1], [0], [0], [1], [0, 0, 1, 1], [], []>} : vector<128x64xbf16>, vector<64x80xbf16>, vector<128x80xf32> -> vector<128x80xf32>
    %10 = vector.broadcast %6 : vector<1x80xf32> to vector<128x80xf32>
    %11 = arith.addf %9, %10 : vector<128x80xf32>
    %12 = vector.shape_cast %4 : vector<8x16x64xbf16> to vector<128x64xbf16>
    %cst_12 = arith.constant dense<0.000000e+00> : vector<128x80xf32>
    %13 = tpu.matmul %12, %5, %cst_12 {dimension_numbers = #tpu.dot_dimension_numbers<[1], [0], [0], [1], [0, 0, 1, 1], [], []>} : vector<128x64xbf16>, vector<64x80xbf16>, vector<128x80xf32> -> vector<128x80xf32>
    %14 = vector.broadcast %6 : vector<1x80xf32> to vector<128x80xf32>
    %15 = arith.addf %13, %14 : vector<128x80xf32>
    %16 = vector.extract_strided_slice %11 {offsets = [0, 0], sizes = [128, 64], strides = [1, 1]} : vector<128x80xf32> to vector<128x64xf32>
    %17 = vector.shape_cast %16 : vector<128x64xf32> to vector<16x8x64xf32>
    %18 = vector.extract_strided_slice %11 {offsets = [0, 64], sizes = [128, 8], strides = [1, 1]} : vector<128x80xf32> to vector<128x8xf32>
    %19 = vector.shape_cast %18 : vector<128x8xf32> to vector<16x8x8xf32>
    %20 = vector.extract_strided_slice %11 {offsets = [0, 72], sizes = [128, 8], strides = [1, 1]} : vector<128x80xf32> to vector<128x8xf32>
    %21 = vector.shape_cast %20 : vector<128x8xf32> to vector<16x8x8xf32>
    %22 = vector.extract_strided_slice %15 {offsets = [0, 0], sizes = [128, 64], strides = [1, 1]} : vector<128x80xf32> to vector<128x64xf32>
    %23 = vector.shape_cast %22 : vector<128x64xf32> to vector<8x16x64xf32>
    %24 = vector.extract_strided_slice %15 {offsets = [0, 64], sizes = [128, 8], strides = [1, 1]} : vector<128x80xf32> to vector<128x8xf32>
    %25 = vector.shape_cast %24 : vector<128x8xf32> to vector<8x16x8xf32>
    %26 = vector.extract_strided_slice %15 {offsets = [0, 72], sizes = [128, 8], strides = [1, 1]} : vector<128x80xf32> to vector<128x8xf32>
    %27 = vector.shape_cast %26 : vector<128x8xf32> to vector<8x16x8xf32>
    %28 = arith.truncf %25 : vector<8x16x8xf32> to vector<8x16x8xbf16>
    %29 = arith.truncf %27 : vector<8x16x8xf32> to vector<8x16x8xbf16>
    "tpu.trace_start"() <{level = 10 : i32, message = "wic,wjc->wij"}> : () -> ()
    %cst_13 = arith.constant dense<0.000000e+00> : vector<8x16x16xf32>
    %30 = tpu.matmul %28, %29, %cst_13 {dimension_numbers = #tpu.dot_dimension_numbers<[2], [2], [1], [1], [0, 0, 0, 1, 1, 1], [0], [0]>} : vector<8x16x8xbf16>, vector<8x16x8xbf16>, vector<8x16x16xf32> -> vector<8x16x16xf32>
    "tpu.trace_stop"() : () -> ()
    %31 = arith.truncf %19 : vector<16x8x8xf32> to vector<16x8x8xbf16>
    %32 = arith.truncf %21 : vector<16x8x8xf32> to vector<16x8x8xbf16>
    "tpu.trace_start"() <{level = 10 : i32, message = "hic,hjc->hij"}> : () -> ()
    %cst_14 = arith.constant dense<0.000000e+00> : vector<16x8x8xf32>
    %33 = tpu.matmul %31, %32, %cst_14 {dimension_numbers = #tpu.dot_dimension_numbers<[2], [2], [1], [1], [0, 0, 0, 1, 1, 1], [0], [0]>} : vector<16x8x8xbf16>, vector<16x8x8xbf16>, vector<16x8x8xf32> -> vector<16x8x8xf32>
    "tpu.trace_stop"() : () -> ()
    %34 = tpu.iota {dimensions = array<i32: 1>} : vector<8x16x16xi32>
    %35 = tpu.iota {dimensions = array<i32: 2>} : vector<8x16x16xi32>
    %36 = arith.cmpi eq, %34, %35 : vector<8x16x16xi32>
    %cst_15 = arith.constant -1.000000e+30 : f32
    %37 = vector.broadcast %cst_15 : f32 to vector<8x16x16xf32>
    %38 = arith.select %36, %37, %30 : vector<8x16x16xi1>, vector<8x16x16xf32>
    %cst_16 = arith.constant dense<0xFF800000> : vector<8x16xf32>
    %39 = vector.multi_reduction <maximumf>, %38, %cst_16 [2] : vector<8x16x16xf32> to vector<8x16xf32>
    %cst_17 = arith.constant dense<0xFF800000> : vector<16x8xf32>
    %40 = vector.multi_reduction <maximumf>, %33, %cst_17 [2] : vector<16x8x8xf32> to vector<16x8xf32>
    %41 = tpu.transpose %39, [1, 0] : vector<8x16xf32> -> vector<16x8xf32>
    %42 = arith.maximumf %41, %40 : vector<16x8xf32>
    %43 = tpu.transpose %42, [1, 0] : vector<16x8xf32> -> vector<8x16xf32>
    %44 = vector.shape_cast %43 : vector<8x16xf32> to vector<8x16x1xf32>
    %45 = vector.broadcast %44 : vector<8x16x1xf32> to vector<8x16x16xf32>
    %46 = arith.subf %38, %45 : vector<8x16x16xf32>
    %47 = math.exp %46 : vector<8x16x16xf32>
    %48 = vector.shape_cast %42 : vector<16x8xf32> to vector<16x8x1xf32>
    %49 = vector.broadcast %48 : vector<16x8x1xf32> to vector<16x8x8xf32>
    %50 = arith.subf %33, %49 : vector<16x8x8xf32>
    %51 = math.exp %50 : vector<16x8x8xf32>
    %cst_18 = arith.constant dense<0.000000e+00> : vector<8x16xf32>
    %52 = vector.multi_reduction <add>, %47, %cst_18 [2] : vector<8x16x16xf32> to vector<8x16xf32>
    %53 = tpu.transpose %52, [1, 0] : vector<8x16xf32> -> vector<16x8xf32>
    %cst_19 = arith.constant dense<0.000000e+00> : vector<16x8xf32>
    %54 = vector.multi_reduction <add>, %51, %cst_19 [2] : vector<16x8x8xf32> to vector<16x8xf32>
    %55 = arith.addf %53, %54 : vector<16x8xf32>
    %56 = tpu.reciprocal %55 {approx = true} : vector<16x8xf32> -> vector<16x8xf32>
    %57 = tpu.transpose %56, [1, 0] : vector<16x8xf32> -> vector<8x16xf32>
    %58 = vector.shape_cast %57 : vector<8x16xf32> to vector<8x16x1xf32>
    %59 = vector.broadcast %58 : vector<8x16x1xf32> to vector<8x16x16xf32>
    %60 = arith.mulf %47, %59 : vector<8x16x16xf32>
    %61 = arith.truncf %60 : vector<8x16x16xf32> to vector<8x16x16xbf16>
    %62 = vector.shape_cast %56 : vector<16x8xf32> to vector<16x8x1xf32>
    %63 = vector.broadcast %62 : vector<16x8x1xf32> to vector<16x8x8xf32>
    %64 = arith.mulf %51, %63 : vector<16x8x8xf32>
    %65 = arith.truncf %64 : vector<16x8x8xf32> to vector<16x8x8xbf16>
    %66 = arith.truncf %23 : vector<8x16x64xf32> to vector<8x16x64xbf16>
    "tpu.trace_start"() <{level = 10 : i32, message = "wij,wjc->wic"}> : () -> ()
    %cst_20 = arith.constant dense<0.000000e+00> : vector<8x16x64xf32>
    %67 = tpu.matmul %61, %66, %cst_20 {dimension_numbers = #tpu.dot_dimension_numbers<[2], [1], [1], [2], [0, 0, 0, 1, 1, 2], [0], [0]>} : vector<8x16x16xbf16>, vector<8x16x64xbf16>, vector<8x16x64xf32> -> vector<8x16x64xf32>
    "tpu.trace_stop"() : () -> ()
    %68 = arith.truncf %17 : vector<16x8x64xf32> to vector<16x8x64xbf16>
    "tpu.trace_start"() <{level = 10 : i32, message = "hij,hjc->hic"}> : () -> ()
    %cst_21 = arith.constant dense<0.000000e+00> : vector<16x8x64xf32>
    %69 = tpu.matmul %65, %68, %cst_21 {dimension_numbers = #tpu.dot_dimension_numbers<[2], [1], [1], [2], [0, 0, 0, 1, 1, 2], [0], [0]>} : vector<16x8x8xbf16>, vector<16x8x64xbf16>, vector<16x8x64xf32> -> vector<16x8x64xf32>
    "tpu.trace_stop"() : () -> ()
    %70 = vector.broadcast %0 : f32 to vector<16x8x64xf32>
    %71 = arith.mulf %70, %69 : vector<16x8x64xf32>
    %72 = arith.addf %71, %2 : vector<16x8x64xf32>
    %c0_22 = arith.constant 0 : index
    %c0_23 = arith.constant 0 : index
    %c0_24 = arith.constant 0 : index
    %c0_25 = arith.constant 0 : index
    %73 = vector.load %arg6[%c0_22, %c0_23, %c0_24, %c0_25] : memref<1x16x8x64xf32, #tpu.memory_space<vmem>>, vector<1x16x8x64xf32>
    %74 = vector.shape_cast %73 : vector<1x16x8x64xf32> to vector<16x8x64xf32>
    %75 = vector.shape_cast %72 : vector<16x8x64xf32> to vector<1x16x8x64xf32>
    tpu.vector_store %arg6[%c0_22, %c0_23, %c0_24, %c0_25], %75 {strides = array<i32>} : memref<1x16x8x64xf32, #tpu.memory_space<vmem>>, vector<1x16x8x64xf32>,
    %76 = vector.broadcast %0 : f32 to vector<8x16x64xf32>
    %77 = arith.mulf %76, %67 : vector<8x16x64xf32>
    %c0_26 = arith.constant 0 : index
    %c0_27 = arith.constant 0 : index
    %c0_28 = arith.constant 0 : index
    %c0_29 = arith.constant 0 : index
    %78 = vector.load %arg7[%c0_26, %c0_27, %c0_28, %c0_29] : memref<1x8x16x64xf32, #tpu.memory_space<vmem>>, vector<1x8x16x64xf32>
    %79 = vector.shape_cast %78 : vector<1x8x16x64xf32> to vector<8x16x64xf32>
    %80 = vector.shape_cast %77 : vector<8x16x64xf32> to vector<1x8x16x64xf32>
    tpu.vector_store %arg7[%c0_26, %c0_27, %c0_28, %c0_29], %80 {strides = array<i32>} : memref<1x8x16x64xf32, #tpu.memory_space<vmem>>, vector<1x8x16x64xf32>,
    return
  }
  func.func @transform_0(%arg0: i32) -> i32 {
    %c0_i32 = arith.constant 0 : i32
    %c0_i32_0 = arith.constant 0 : i32
    return %c0_i32 : i32
  }
  func.func @transform_1(%arg0: i32) -> (i32, i32, i32, i32) {
    %c0_i32 = arith.constant 0 : i32
    %c0_i32_0 = arith.constant 0 : i32
    %c0_i32_1 = arith.constant 0 : i32
    %c0_i32_2 = arith.constant 0 : i32
    return %arg0, %c0_i32, %c0_i32_0, %c0_i32_1 : i32, i32, i32, i32
  }
  func.func @transform_2(%arg0: i32) -> (i32, i32, i32, i32) {
    %c0_i32 = arith.constant 0 : i32
    %c0_i32_0 = arith.constant 0 : i32
    %c0_i32_1 = arith.constant 0 : i32
    %c0_i32_2 = arith.constant 0 : i32
    return %arg0, %c0_i32, %c0_i32_0, %c0_i32_1 : i32, i32, i32, i32
  }
  func.func @transform_3(%arg0: i32) -> (i32, i32) {
    %c0_i32 = arith.constant 0 : i32
    %c0_i32_0 = arith.constant 0 : i32
    %c0_i32_1 = arith.constant 0 : i32
    return %c0_i32, %c0_i32_0 : i32, i32
  }
  func.func @transform_4(%arg0: i32) -> (i32, i32) {
    %c0_i32 = arith.constant 0 : i32
    %c0_i32_0 = arith.constant 0 : i32
    %c0_i32_1 = arith.constant 0 : i32
    return %c0_i32, %c0_i32_0 : i32, i32
  }
  func.func @transform_5(%arg0: i32) -> (i32, i32, i32, i32) {
    %c0_i32 = arith.constant 0 : i32
    %c0_i32_0 = arith.constant 0 : i32
    %c0_i32_1 = arith.constant 0 : i32
    %c0_i32_2 = arith.constant 0 : i32
    return %arg0, %c0_i32, %c0_i32_0, %c0_i32_1 : i32, i32, i32, i32
  }
  func.func @transform_6(%arg0: i32) -> (i32, i32, i32, i32) {
    %c0_i32 = arith.constant 0 : i32
    %c0_i32_0 = arith.constant 0 : i32
    %c0_i32_1 = arith.constant 0 : i32
    %c0_i32_2 = arith.constant 0 : i32
    return %arg0, %c0_i32, %c0_i32_0, %c0_i32_1 : i32, i32, i32, i32
  }
}

</mosaic_0001>

<llo_original>
// kernel: tpu_custom_call.1
$region0: #{tpu_custom_call.1}
  #allocation0 [shape = 'u32[]', space=smem, size = 0x4, offset = 0x4, fixed_abs, tag = 'smem constant byte address 0x4 - core index']
  #allocation1 [shape = 'u32[144,128]{1,0:T(1,128)}', space=vmem, size = 0x12000, scoped, tag = 'internal scratch']
  #allocation2 [shape = 'f32[1]{0:T(128)S(6)}', space=smem, size = 0x200, scoped, tag = 'scoped memory for tpu_custom_call.1']
  %s0 = inlined_call_operand.<no memory space> [shape: f32[1], index: 0, kind: input, shape index: {}]
  %s1 = inlined_call_operand.hbm [shape: f32[2,16,8,64], index: 1, kind: input, shape index: {}]
  %s2 = inlined_call_operand.hbm [shape: bf16[2,8,16,64], index: 2, kind: input, shape index: {}]
  %s3 = inlined_call_operand.hbm [shape: bf16[64,80], index: 3, kind: input, shape index: {}]
  %s4 = inlined_call_operand.vmem [shape: f32[1,80], index: 4, kind: input, shape index: {}]
  %s5 = inlined_call_operand.hbm [shape: f32[2,16,8,64], index: 5, kind: output, shape index: {0}]
  %s6 = inlined_call_operand.hbm [shape: f32[2,8,16,64], index: 6, kind: output, shape index: {1}]
  %7 = xla_tuple %s5, %s6
  %s8 = sld [smem:[#allocation0]]
  $region73: #{tpu_custom_call.1} parent=0
    _
  %s10 = ssub.s32 1, %s8
  %s11 = scalar_select 0, %s10, %s8
  %12 = sst [smem:[#allocation2]] %s0
  $region1: #{tpu_custom_call.1} parent=0
    #allocation3 [shape = 'u8[131072]{0}', space=vmem, size = 0x20000, scoped, tag = 'input window, operand 1']
    #allocation4 [shape = 's32[2]{0}', space=sflag, size = 0x8, scoped, tag = 'scoped memory for tpu_custom_call.1']
    #allocation5 [shape = 's32[2]{0}', space=sflag, size = 0x8, scoped, tag = 'scoped memory for tpu_custom_call.1']
    #allocation6 [shape = 'u8[65536]{0}', space=vmem, size = 0x10000, scoped, tag = 'input window, operand 2']
    #allocation7 [shape = 's32[2]{0}', space=sflag, size = 0x8, scoped, tag = 'scoped memory for tpu_custom_call.1']
    #allocation8 [shape = 'u8[16384]{0}', space=vmem, size = 0x4000, scoped, tag = 'input window, operand 3, single buffered']
    #allocation9 [shape = 'u8[131072]{0}', space=vmem, size = 0x20000, scoped, tag = 'output window, operand 0']
    #allocation10 [shape = 'u8[131072]{0}', space=vmem, size = 0x20000, scoped, tag = 'output window, operand 1']
    #allocation11 [shape = 's32[2]{0}', space=sflag, size = 0x8, scoped, tag = 'scoped memory for tpu_custom_call.1']
    %13 = vsyncpa [#allocation4], 0
    %s14 = scalar_lea.sflag [#allocation4], 1
    %15 = vsyncpa %s14, 0
    %16 = vsyncpa [#allocation7], 0
    %s17 = scalar_lea.sflag [#allocation7], 1
    %18 = vsyncpa %s17, 0
    %19 = vsyncpa [#allocation5], 0
    %s20 = scalar_lea.sflag [#allocation5], 1
    %21 = vsyncpa %s20, 0
    %22 = vsyncpa [#allocation11], 0
    %s23 = scalar_lea.sflag [#allocation11], 1
    %24 = vsyncpa %s23, 0
    loop: start=0, step=1, limit=4
    $region2: #{tpu_custom_call.1} parent=1 // loop_pre_header
      _
    $region3: #{tpu_custom_call.1} parent=1 // loop_header
      %s26 = sphi 0, %s30
      %p27 = scmp.ge.s32.totalorder %s26, 4
      %s34 = sphi 0, %s34
      %s36 = sphi 0, %s34
      %s37 = sphi 0, %s36
      %s51 = sphi 0, %s37
      %s57 = sphi 0, %s59
      %s60 = sphi 0, %s57
      %s61 = sphi 0, %s60
      %s77 = sphi 0, %s61
      %s83 = sphi 0, %s85
      %s86 = sphi 0, %s83
      %s87 = sphi 0, %s86
      %s103 = sphi 0, %s87
      %s107 = sphi 0, %s107
      %s109 = sphi 0, %s107
      %s110 = sphi 0, %s109
      %s124 = sphi 0, %s110
      %s128 = sphi 0, %s128
      %s130 = sphi 0, %s128
      %s131 = sphi 0, %s130
      %s145 = sphi 0, %s131
      %s151 = sphi 0, %s153
      %s154 = sphi 0, %s151
      %s155 = sphi 0, %s154
      %s171 = sphi 0, %s155
      %s177 = sphi 0, %s179
      %s180 = sphi 0, %s177
      %s181 = sphi 0, %s180
      %s197 = sphi 0, %s181
    $region4: #{tpu_custom_call.1} parent=1 // loop_header_branch
      %29 = sbr.rel (%p27) target = $region8
    $region5: #{tpu_custom_call.1} parent=1 // loop_body
      %s31 = ssub.s32 %s26, 1
      %s32 = ssub.s32 %s26, 2
      %s33 = sadd.s32 %s26, 1
      %s35 = sadd.s32 %s34, 1
      %p38 = scmp.eq.s32.totalorder %s26, 1
      %p39 = scmp.ne.s32.totalorder %s34, %s36
      %p40 = scmp.eq.s32.totalorder %s26, 0
      %p41 = por %p39, %p40
      %p42 = scmp.ne.s32.totalorder %s34, %s36
      %p43 = scmp.eq.s32.totalorder %s31, 1
      %p44 = por %p42, %p43
      %p45 = scmp.ne.s32.totalorder %s36, %s37
      %p46 = scmp.eq.s32.totalorder %s31, 0
      %p47 = por %p45, %p46
      %p48 = scmp.ne.s32.totalorder %s36, %s37
      %p49 = scmp.eq.s32.totalorder %s32, 1
      %p50 = por %p48, %p49
      %p52 = scmp.ne.s32.totalorder %s37, %s51
      %p53 = scmp.eq.s32.totalorder %s32, 0
      %p54 = por %p52, %p53
      %s55 = ssub.s32 %s26, %s33
      %p56 = scmp.eq.s32.totalorder %s55, 0
      %s58 = sadd.s32 %s57, 1
      %s59 = scalar_select %p56, %s57, %s58
      %p62 = pneg %p56
      %p63 = scmp.eq.s32.totalorder %s26, 1
      %p64 = por %p62, %p63
      %p65 = scmp.ne.s32.totalorder %s57, %s60
      %p66 = scmp.eq.s32.totalorder %s26, 0
      %p67 = por %p65, %p66
      %p68 = scmp.ne.s32.totalorder %s57, %s60
      %p69 = scmp.eq.s32.totalorder %s31, 1
      %p70 = por %p68, %p69
      %p71 = scmp.ne.s32.totalorder %s60, %s61
      %p72 = scmp.eq.s32.totalorder %s31, 0
      %p73 = por %p71, %p72
      %p74 = scmp.ne.s32.totalorder %s60, %s61
      %p75 = scmp.eq.s32.totalorder %s32, 1
      %p76 = por %p74, %p75
      %p78 = scmp.ne.s32.totalorder %s61, %s77
      %p79 = scmp.eq.s32.totalorder %s32, 0
      %p80 = por %p78, %p79
      %s81 = ssub.s32 %s26, %s33
      %p82 = scmp.eq.s32.totalorder %s81, 0
      %s84 = sadd.s32 %s83, 1
      %s85 = scalar_select %p82, %s83, %s84
      %p88 = pneg %p82
      %p89 = scmp.eq.s32.totalorder %s26, 1
      %p90 = por %p88, %p89
      %p91 = scmp.ne.s32.totalorder %s83, %s86
      %p92 = scmp.eq.s32.totalorder %s26, 0
      %p93 = por %p91, %p92
      %p94 = scmp.ne.s32.totalorder %s83, %s86
      %p95 = scmp.eq.s32.totalorder %s31, 1
      %p96 = por %p94, %p95
      %p97 = scmp.ne.s32.totalorder %s86, %s87
      %p98 = scmp.eq.s32.totalorder %s31, 0
      %p99 = por %p97, %p98
      %p100 = scmp.ne.s32.totalorder %s86, %s87
      %p101 = scmp.eq.s32.totalorder %s32, 1
      %p102 = por %p100, %p101
      %p104 = scmp.ne.s32.totalorder %s87, %s103
      %p105 = scmp.eq.s32.totalorder %s32, 0
      %p106 = por %p104, %p105
      %s108 = sadd.s32 %s107, 1
      %p111 = scmp.eq.s32.totalorder %s26, 1
      %p112 = scmp.ne.s32.totalorder %s107, %s109
      %p113 = scmp.eq.s32.totalorder %s26, 0
      %p114 = por %p112, %p113
      %p115 = scmp.ne.s32.totalorder %s107, %s109
      %p116 = scmp.eq.s32.totalorder %s31, 1
      %p117 = por %p115, %p116
      %p118 = scmp.ne.s32.totalorder %s109, %s110
      %p119 = scmp.eq.s32.totalorder %s31, 0
      %p120 = por %p118, %p119
      %p121 = scmp.ne.s32.totalorder %s109, %s110
      %p122 = scmp.eq.s32.totalorder %s32, 1
      %p123 = por %p121, %p122
      %p125 = scmp.ne.s32.totalorder %s110, %s124
      %p126 = scmp.eq.s32.totalorder %s32, 0
      %p127 = por %p125, %p126
      %s129 = sadd.s32 %s128, 1
      %p132 = scmp.eq.s32.totalorder %s26, 1
      %p133 = scmp.ne.s32.totalorder %s128, %s130
      %p134 = scmp.eq.s32.totalorder %s26, 0
      %p135 = por %p133, %p134
      %p136 = scmp.ne.s32.totalorder %s128, %s130
      %p137 = scmp.eq.s32.totalorder %s31, 1
      %p138 = por %p136, %p137
      %p139 = scmp.ne.s32.totalorder %s130, %s131
      %p140 = scmp.eq.s32.totalorder %s31, 0
      %p141 = por %p139, %p140
      %p142 = scmp.ne.s32.totalorder %s130, %s131
      %p143 = scmp.eq.s32.totalorder %s32, 1
      %p144 = por %p142, %p143
      %p146 = scmp.ne.s32.totalorder %s131, %s145
      %p147 = scmp.eq.s32.totalorder %s32, 0
      %p148 = por %p146, %p147
      %s149 = ssub.s32 %s26, %s33
      %p150 = scmp.eq.s32.totalorder %s149, 0
      %s152 = sadd.s32 %s151, 1
      %s153 = scalar_select %p150, %s151, %s152
      %p156 = pneg %p150
      %p157 = scmp.eq.s32.totalorder %s26, 1
      %p158 = por %p156, %p157
      %p159 = scmp.ne.s32.totalorder %s151, %s154
      %p160 = scmp.eq.s32.totalorder %s26, 0
      %p161 = por %p159, %p160
      %p162 = scmp.ne.s32.totalorder %s151, %s154
      %p163 = scmp.eq.s32.totalorder %s31, 1
      %p164 = por %p162, %p163
      %p165 = scmp.ne.s32.totalorder %s154, %s155
      %p166 = scmp.eq.s32.totalorder %s31, 0
      %p167 = por %p165, %p166
      %p168 = scmp.ne.s32.totalorder %s154, %s155
      %p169 = scmp.eq.s32.totalorder %s32, 1
      %p170 = por %p168, %p169
      %p172 = scmp.ne.s32.totalorder %s155, %s171
      %p173 = scmp.eq.s32.totalorder %s32, 0
      %p174 = por %p172, %p173
      %s175 = ssub.s32 %s26, %s33
      %p176 = scmp.eq.s32.totalorder %s175, 0
      %s178 = sadd.s32 %s177, 1
      %s179 = scalar_select %p176, %s177, %s178
      %p182 = pneg %p176
      %p183 = scmp.eq.s32.totalorder %s26, 1
      %p184 = por %p182, %p183
      %p185 = scmp.ne.s32.totalorder %s177, %s180
      %p186 = scmp.eq.s32.totalorder %s26, 0
      %p187 = por %p185, %p186
      %p188 = scmp.ne.s32.totalorder %s177, %s180
      %p189 = scmp.eq.s32.totalorder %s31, 1
      %p190 = por %p188, %p189
      %p191 = scmp.ne.s32.totalorder %s180, %s181
      %p192 = scmp.eq.s32.totalorder %s31, 0
      %p193 = por %p191, %p192
      %p194 = scmp.ne.s32.totalorder %s180, %s181
      %p195 = scmp.eq.s32.totalorder %s32, 1
      %p196 = por %p194, %p195
      %p198 = scmp.ne.s32.totalorder %s181, %s197
      %p199 = scmp.eq.s32.totalorder %s32, 0
      %p200 = por %p198, %p199
      %p201 = scmp.le.s32.totalorder 1, %s26
      %p202 = scmp.lt.s32.totalorder %s26, 3
      %p203 = pnand %p201, %p202
      %p204 = pneg %p203
      // Predicated region
      $region9: #{tpu_custom_call.1} parent=5 // pred_check
        _
      $region10: #{tpu_custom_call.1} parent=5 // pred_check_branch
        %206 = sbr.rel (%p203) target = $region12
      $region11: #{tpu_custom_call.1} parent=5 // pred_region
        %s207 = ssub.s32 %s26, 1
        // Predicated region
        $region13: #{tpu_custom_call.1} parent=11 // pred_check
          %p208 = pneg %p47
        $region14: #{tpu_custom_call.1} parent=11 // pred_check_branch
          %210 = sbr.rel (%p208) target = $region16
        $region15: #{tpu_custom_call.1} parent=11 // pred_region
          _
        $region16: #{tpu_custom_call.1} parent=11 // pred_fallthru
          _
        // Predicated region
        $region17: #{tpu_custom_call.1} parent=11 // pred_check
          %p211 = pneg %p120
        $region18: #{tpu_custom_call.1} parent=11 // pred_check_branch
          %213 = sbr.rel (%p211) target = $region20
        $region19: #{tpu_custom_call.1} parent=11 // pred_region
          %s215 = ssub.s32 512, 512
          %216 = vsyncadd [#allocation7], %s215
          %s217 = sshll.u32 [#allocation8], 4
          %s218 = int_to_ptr.vmem [resolvable:$true] %s217
          %223 = dma.hbm_to_vmem [thread:$0]  %s3, 512, %s218, [#allocation7], 64, 64, 4
        $region20: #{tpu_custom_call.1} parent=11 // pred_fallthru
          _
        // Predicated region
        $region21: #{tpu_custom_call.1} parent=11 // pred_check
          %p224 = pneg %p141
        $region22: #{tpu_custom_call.1} parent=11 // pred_check_branch
          %226 = sbr.rel (%p224) target = $region24
        $region23: #{tpu_custom_call.1} parent=11 // pred_region
          _
        $region24: #{tpu_custom_call.1} parent=11 // pred_fallthru
          _
      $region12: #{tpu_custom_call.1} parent=5 // pred_fallthru
        _
      %p227 = scmp.lt.s32.totalorder %s26, 2
      // Predicated region
      $region25: #{tpu_custom_call.1} parent=5 // pred_check
        %p228 = pneg %p227
      $region26: #{tpu_custom_call.1} parent=5 // pred_check_branch
        %230 = sbr.rel (%p228) target = $region28
      $region27: #{tpu_custom_call.1} parent=5 // pred_region
        // Predicated region
        $region29: #{tpu_custom_call.1} parent=27 // pred_check
          %p231 = pneg %p67
        $region30: #{tpu_custom_call.1} parent=27 // pred_check_branch
          %233 = sbr.rel (%p231) target = $region32
        $region31: #{tpu_custom_call.1} parent=27 // pred_region
          %s234 = sand.u32 %s57, 1
          %s235 = scalar_lea.sflag [#allocation4], %s234
          %s236 = sand.u32 %s57, 1
          %s237 = smul.addr %s236, 128
          %s238 = scalar_lea.vmem [#allocation3], %s237
          %s240 = ssub.s32 2048, 2048
          %241 = vsyncadd %s235, %s240
          %s242 = smul.addr %s26, 16
          %s243 = smul.addr %s242, 128
          %s244 = scalar_lea.hbm %s1, %s243
          %s245 = sshll.u32 %s238, 4
          %s246 = int_to_ptr.vmem [resolvable:$true] %s245
          %251 = dma.hbm_to_vmem [thread:$0]  %s244, 2048, %s246, %s235, 128, 128, 8
        $region32: #{tpu_custom_call.1} parent=27 // pred_fallthru
          _
        // Predicated region
        $region33: #{tpu_custom_call.1} parent=27 // pred_check
          %p252 = pneg %p93
        $region34: #{tpu_custom_call.1} parent=27 // pred_check_branch
          %254 = sbr.rel (%p252) target = $region36
        $region35: #{tpu_custom_call.1} parent=27 // pred_region
          %s255 = sand.u32 %s26, 1
          %s256 = scalar_lea.sflag [#allocation7], %s255
          %s257 = sand.u32 %s83, 1
          %s258 = smul.addr %s257, 64
          %s259 = scalar_lea.vmem [#allocation6], %s258
          %s261 = ssub.s32 1024, 1024
          %262 = vsyncadd %s256, %s261
          %s263 = smul.addr %s26, 16
          %s264 = smul.addr %s263, 64
          %s265 = scalar_lea.hbm %s2, %s264
          %s266 = sshll.u32 %s259, 4
          %s267 = int_to_ptr.vmem [resolvable:$true] %s266
          %272 = dma.hbm_to_vmem [thread:$0]  %s265, 1024, %s267, %s256, 64, 64, 4
        $region36: #{tpu_custom_call.1} parent=27 // pred_fallthru
          _
      $region28: #{tpu_custom_call.1} parent=5 // pred_fallthru
        _
      %p273 = scmp.le.s32.totalorder 1, %s26
      %p274 = scmp.lt.s32.totalorder %s26, 3
      %p275 = pnand %p273, %p274
      %p276 = pneg %p275
      // Predicated region
      $region37: #{tpu_custom_call.1} parent=5 // pred_check
        _
      $region38: #{tpu_custom_call.1} parent=5 // pred_check_branch
        %278 = sbr.rel (%p275) target = $region40
      $region39: #{tpu_custom_call.1} parent=5 // pred_region
        %s279 = ssub.s32 %s26, 1
        %s280 = sand.u32 %s60, 1
        %s281 = scalar_lea.sflag [#allocation4], %s280
        %s282 = sand.u32 %s60, 1
        %s283 = smul.addr %s282, 128
        %s284 = scalar_lea.vmem [#allocation3], %s283
        // Predicated region
        $region41: #{tpu_custom_call.1} parent=39 // pred_check
          %p285 = pneg %p73
        $region42: #{tpu_custom_call.1} parent=39 // pred_check_branch
          %287 = sbr.rel (%p285) target = $region44
        $region43: #{tpu_custom_call.1} parent=39 // pred_region
          %288 = dma.done %s281, 2048
        $region44: #{tpu_custom_call.1} parent=39 // pred_fallthru
          _
        %s289 = sand.u32 %s31, 1
        %s290 = scalar_lea.sflag [#allocation7], %s289
        %s291 = sand.u32 %s86, 1
        %s292 = smul.addr %s291, 64
        %s293 = scalar_lea.vmem [#allocation6], %s292
        // Predicated region
        $region45: #{tpu_custom_call.1} parent=39 // pred_check
          %p294 = pneg %p99
        $region46: #{tpu_custom_call.1} parent=39 // pred_check_branch
          %296 = sbr.rel (%p294) target = $region48
        $region47: #{tpu_custom_call.1} parent=39 // pred_region
          %297 = dma.done %s290, 1024
        $region48: #{tpu_custom_call.1} parent=39 // pred_fallthru
          _
        // Predicated region
        $region49: #{tpu_custom_call.1} parent=39 // pred_check
          %p298 = pneg %p120
        $region50: #{tpu_custom_call.1} parent=39 // pred_check_branch
          %300 = sbr.rel (%p298) target = $region52
        $region51: #{tpu_custom_call.1} parent=39 // pred_region
          %301 = dma.done [#allocation7], 512
        $region52: #{tpu_custom_call.1} parent=39 // pred_fallthru
          _
        %p302 = pneg %p47
        %p303 = pneg %p44
        %s304 = sand.u32 %s60, 1
        %s305 = scalar_lea.sflag [#allocation4], %s304
        %s306 = sand.u32 %s60, 1
        %s307 = smul.addr %s306, 128
        %s308 = scalar_lea.vmem [#allocation3], %s307
        %p309 = pneg %p73
        %p310 = pneg %p70
        %s311 = sand.u32 %s31, 1
        %s312 = scalar_lea.sflag [#allocation7], %s311
        %s313 = sand.u32 %s86, 1
        %s314 = smul.addr %s313, 64
        %s315 = scalar_lea.vmem [#allocation6], %s314
        %p316 = pneg %p99
        %p317 = pneg %p96
        %p318 = pneg %p120
        %p319 = pneg %p117
        %p320 = pneg %p141
        %p321 = pneg %p138
        %p322 = pneg %p167
        %p323 = pneg %p164
        %s324 = sand.u32 %s154, 1
        %s325 = scalar_lea.sflag [#allocation5], %s324
        %s326 = sand.u32 %s154, 1
        %s327 = smul.addr %s326, 128
        %s328 = scalar_lea.vmem [#allocation9], %s327
        %p329 = pneg %p193
        %p330 = pneg %p190
        %s331 = sand.u32 %s180, 1
        %s332 = scalar_lea.sflag [#allocation11], %s331
        %s333 = sand.u32 %s180, 1
        %s334 = smul.addr %s333, 128
        %s335 = scalar_lea.vmem [#allocation10], %s334
        %s337 = sld [smem:[#allocation2]]
        %v338 = vld [vmem:[%s284] sm:$0xff]
        %v339 = vld [vmem:[%s284 + $0x8] sm:$0xff]
        %v340 = vld [vmem:[%s284 + $0x10] sm:$0xff]
        %v341 = vld [vmem:[%s284 + $0x18] sm:$0xff]
        %v342 = vld [vmem:[%s284 + $0x20] sm:$0xff]
        %v343 = vld [vmem:[%s284 + $0x28] sm:$0xff]
        %v344 = vld [vmem:[%s284 + $0x30] sm:$0xff]
        %v345 = vld [vmem:[%s284 + $0x38] sm:$0xff]
        %v346 = vld [vmem:[%s284 + $0x40] sm:$0xff]
        %v347 = vld [vmem:[%s284 + $0x48] sm:$0xff]
        %v348 = vld [vmem:[%s284 + $0x50] sm:$0xff]
        %v349 = vld [vmem:[%s284 + $0x58] sm:$0xff]
        %v350 = vld [vmem:[%s284 + $0x60] sm:$0xff]
        %v351 = vld [vmem:[%s284 + $0x68] sm:$0xff]
        %v352 = vld [vmem:[%s284 + $0x70] sm:$0xff]
        %v353 = vld [vmem:[%s284 + $0x78] sm:$0xff]
        %v354 = vld [vmem:[%s293] sm:$0xf]
        %v355 = vld [vmem:[%s293 + $0x4] sm:$0xf]
        %v356 = vld [vmem:[%s293 + $0x8] sm:$0xf]
        %v357 = vld [vmem:[%s293 + $0xc] sm:$0xf]
        %v358 = vld [vmem:[%s293 + $0x10] sm:$0xf]
        %v359 = vld [vmem:[%s293 + $0x14] sm:$0xf]
        %v360 = vld [vmem:[%s293 + $0x18] sm:$0xf]
        %v361 = vld [vmem:[%s293 + $0x1c] sm:$0xf]
        %v362 = vld [vmem:[%s293 + $0x20] sm:$0xf]
        %v363 = vld [vmem:[%s293 + $0x24] sm:$0xf]
        %v364 = vld [vmem:[%s293 + $0x28] sm:$0xf]
        %v365 = vld [vmem:[%s293 + $0x2c] sm:$0xf]
        %v366 = vld [vmem:[%s293 + $0x30] sm:$0xf]
        %v367 = vld [vmem:[%s293 + $0x34] sm:$0xf]
        %v368 = vld [vmem:[%s293 + $0x38] sm:$0xf]
        %v369 = vld [vmem:[%s293 + $0x3c] sm:$0xf]
        %v370 = vld [vmem:[#allocation8] sm:$0xf]
        %v371 = vld [vmem:[#allocation8 + $0x4] sm:$0xf]
        %v372 = vld [vmem:[#allocation8 + $0x8] sm:$0xf]
        %v373 = vld [vmem:[#allocation8 + $0xc] sm:$0xf]
        %v374 = vld [vmem:[#allocation8 + $0x10] sm:$0xf]
        %v375 = vld [vmem:[#allocation8 + $0x14] sm:$0xf]
        %v376 = vld [vmem:[#allocation8 + $0x18] sm:$0xf]
        %v377 = vld [vmem:[#allocation8 + $0x1c] sm:$0xf]
        %v378 = vld [vmem:[%s4] sm:$0x1]
        %v379 = vpack.c.bf16 %v338, %v338
        %v380 = vpack.c.bf16 %v339, %v339
        %v381 = vpack.c.bf16 %v340, %v340
        %v382 = vpack.c.bf16 %v341, %v341
        %v383 = vpack.c.bf16 %v342, %v342
        %v384 = vpack.c.bf16 %v343, %v343
        %v385 = vpack.c.bf16 %v344, %v344
        %v386 = vpack.c.bf16 %v345, %v345
        %v387 = vpack.c.bf16 %v346, %v346
        %v388 = vpack.c.bf16 %v347, %v347
        %v389 = vpack.c.bf16 %v348, %v348
        %v390 = vpack.c.bf16 %v349, %v349
        %v391 = vpack.c.bf16 %v350, %v350
        %v392 = vpack.c.bf16 %v351, %v351
        %v393 = vpack.c.bf16 %v352, %v352
        %v394 = vpack.c.bf16 %v353, %v353
        %v396 = vlaneseq
        %v397 = vshrl.u32 %v396, 7
        %v398 = vsub.s32 0, %v397
        %v399 = vrot.slane %v378, %v398
        %v417 = vunpack.c.l.b16 %v379
        %v418 = vunpack.c.l.b16 %v380
        %v419 = vunpack.c.l.b16 %v381
        %v420 = vunpack.c.l.b16 %v382
        %v421 = vunpack.c.l.b16 %v383
        %v422 = vunpack.c.l.b16 %v384
        %v423 = vunpack.c.l.b16 %v385
        %v424 = vunpack.c.l.b16 %v386
        %v425 = vunpack.c.l.b16 %v387
        %v426 = vunpack.c.l.b16 %v388
        %v427 = vunpack.c.l.b16 %v389
        %v428 = vunpack.c.l.b16 %v390
        %v429 = vunpack.c.l.b16 %v391
        %v430 = vunpack.c.l.b16 %v392
        %v431 = vunpack.c.l.b16 %v393
        %v432 = vunpack.c.l.b16 %v394
        %v433 = vpack.c.b16 %v418, %v417
        %v434 = vpack.c.b16 %v420, %v419
        %v435 = vpack.c.b16 %v422, %v421
        %v436 = vpack.c.b16 %v424, %v423
        %v437 = vpack.c.b16 %v426, %v425
        %v438 = vpack.c.b16 %v428, %v427
        %v439 = vpack.c.b16 %v430, %v429
        %v440 = vpack.c.b16 %v432, %v431
        %v449 = vunpack.c.l.b16 %v370
        %v450 = vunpack.c.l.b16 %v371
        %v451 = vunpack.c.l.b16 %v372
        %v452 = vunpack.c.l.b16 %v373
        %v453 = vunpack.c.l.b16 %v374
        %v454 = vunpack.c.l.b16 %v375
        %v455 = vunpack.c.l.b16 %v376
        %v456 = vunpack.c.l.b16 %v377
        %v457 = vpack.c.b16 %v450, %v449
        %v458 = vpack.c.b16 %v452, %v451
        %v459 = vpack.c.b16 %v454, %v453
        %v460 = vpack.c.b16 %v456, %v455
        %vm465 = vcmask 523264
        %v467 = vsel %vm465, %v433, 0
        %v470 = vsel %vm465, %v434, 0
        %v473 = vsel %vm465, %v435, 0
        %v476 = vsel %vm465, %v436, 0
        %v479 = vsel %vm465, %v437, 0
        %v482 = vsel %vm465, %v438, 0
        %v485 = vsel %vm465, %v439, 0
        %v488 = vsel %vm465, %v440, 0
        %490 = vmatprep.subr.bf16.mxu0 0
        %491 = vmatpush1.bf16.msra.mxu0 0
        %492 = vmatprep.subr.bf16.mxu0 0
        %493 = vmatpush1.bf16.msra.mxu0 0
        %494 = vmatprep.subr.bf16.mxu0 0
        %495 = vmatpush1.bf16.msra.mxu0 0
        %496 = vmatprep.subr.bf16.mxu0 0
        %497 = vmatpush1.bf16.msra.mxu0 0
        %498 = vmatprep.subr.bf16.mxu0 0
        %499 = vmatpush1.bf16.msra.mxu0 %v460
        %500 = vmatprep.subr.bf16.mxu0 0
        %501 = vmatpush1.bf16.msra.mxu0 %v459
        %502 = vmatprep.subr.bf16.mxu0 0
        %503 = vmatpush1.bf16.msra.mxu0 %v458
        %504 = vmatprep.subr.bf16.mxu0 0
        %505 = vmatpush1.bf16.msra.mxu0 %v457
        %506 = vmatprep.subr.bf16.mxu0 0
        %507 = vmatpush2.bf16.msra.mxu0 0
        %508 = vmatprep.subr.bf16.mxu0 0
        %509 = vmatpush2.bf16.msra.mxu0 0
        %510 = vmatprep.subr.bf16.mxu0 0
        %511 = vmatpush2.bf16.msra.mxu0 0
        %512 = vmatprep.subr.bf16.mxu0 0
        %513 = vmatpush2.bf16.msra.mxu0 0
        %514 = vmatprep.subr.bf16.mxu0 0
        %515 = vmatpush2.bf16.msra.mxu0 0
        %516 = vmatprep.subr.bf16.mxu0 0
        %517 = vmatpush2.bf16.msra.mxu0 0
        %518 = vmatprep.subr.bf16.mxu0 0
        %519 = vmatpush2.bf16.msra.mxu0 0
        %520 = vmatprep.subr.bf16.mxu0 0
        %521 = vmatpush2.bf16.msra.mxu0 0
        %522 = vmatprep.mubr.bf16.mxu0 0
        %523 = vmatmul.mubr.bf16.gmra.mxu0 %v467
        %v524 = vpop.f32.mrf.mxu0
        %v525 = vadd.f32 %v399, %v524
        %v526 = vpop.f32.mrf.mxu0
        %v527 = vpop.f32.mrf.mxu0
        %v528 = vadd.f32 %v399, %v527
        %v529 = vpop.f32.mrf.mxu0
        %530 = vmatprep.mubr.bf16.mxu0 0
        %531 = vmatmul.mubr.bf16.gmra.mxu0 %v470
        %v532 = vpop.f32.mrf.mxu0
        %v533 = vadd.f32 %v399, %v532
        %v534 = vpop.f32.mrf.mxu0
        %v535 = vpop.f32.mrf.mxu0
        %v536 = vadd.f32 %v399, %v535
        %v537 = vpop.f32.mrf.mxu0
        %538 = vmatprep.mubr.bf16.mxu0 0
        %539 = vmatmul.mubr.bf16.gmra.mxu0 %v473
        %v540 = vpop.f32.mrf.mxu0
        %v541 = vadd.f32 %v399, %v540
        %v542 = vpop.f32.mrf.mxu0
        %v543 = vpop.f32.mrf.mxu0
        %v544 = vadd.f32 %v399, %v543
        %v545 = vpop.f32.mrf.mxu0
        %546 = vmatprep.mubr.bf16.mxu0 0
        %547 = vmatmul.mubr.bf16.gmra.mxu0 %v476
        %v548 = vpop.f32.mrf.mxu0
        %v549 = vadd.f32 %v399, %v548
        %v550 = vpop.f32.mrf.mxu0
        %v551 = vpop.f32.mrf.mxu0
        %v552 = vadd.f32 %v399, %v551
        %v553 = vpop.f32.mrf.mxu0
        %554 = vmatprep.mubr.bf16.mxu0 0
        %555 = vmatmul.mubr.bf16.gmra.mxu0 %v479
        %v556 = vpop.f32.mrf.mxu0
        %v557 = vadd.f32 %v399, %v556
        %v558 = vpop.f32.mrf.mxu0
        %v559 = vpop.f32.mrf.mxu0
        %v560 = vadd.f32 %v399, %v559
        %v561 = vpop.f32.mrf.mxu0
        %562 = vmatprep.mubr.bf16.mxu0 0
        %563 = vmatmul.mubr.bf16.gmra.mxu0 %v482
        %v564 = vpop.f32.mrf.mxu0
        %v565 = vadd.f32 %v399, %v564
        %v566 = vpop.f32.mrf.mxu0
        %v567 = vpop.f32.mrf.mxu0
        %v568 = vadd.f32 %v399, %v567
        %v569 = vpop.f32.mrf.mxu0
        %570 = vmatprep.mubr.bf16.mxu0 0
        %571 = vmatmul.mubr.bf16.gmra.mxu0 %v485
        %v572 = vpop.f32.mrf.mxu0
        %v573 = vadd.f32 %v399, %v572
        %v574 = vpop.f32.mrf.mxu0
        %v575 = vpop.f32.mrf.mxu0
        %v576 = vadd.f32 %v399, %v575
        %v577 = vpop.f32.mrf.mxu0
        %578 = vmatprep.mubr.bf16.mxu0 0
        %579 = vmatmul.mubr.bf16.gmra.mxu0 %v488
        %v580 = vpop.f32.mrf.mxu0
        %v581 = vadd.f32 %v399, %v580
        %v582 = vpop.f32.mrf.mxu0
        %v583 = vpop.f32.mrf.mxu0
        %v584 = vadd.f32 %v399, %v583
        %v585 = vpop.f32.mrf.mxu0
        %586 = vdwg.mxu0
        %v603 = vunpack.c.l.b16 %v354
        %v604 = vunpack.c.l.b16 %v355
        %v605 = vunpack.c.l.b16 %v356
        %v606 = vunpack.c.l.b16 %v357
        %v607 = vunpack.c.l.b16 %v358
        %v608 = vunpack.c.l.b16 %v359
        %v609 = vunpack.c.l.b16 %v360
        %v610 = vunpack.c.l.b16 %v361
        %v611 = vunpack.c.l.b16 %v362
        %v612 = vunpack.c.l.b16 %v363
        %v613 = vunpack.c.l.b16 %v364
        %v614 = vunpack.c.l.b16 %v365
        %v615 = vunpack.c.l.b16 %v366
        %v616 = vunpack.c.l.b16 %v367
        %v617 = vunpack.c.l.b16 %v368
        %v618 = vunpack.c.l.b16 %v369
        %v619 = vpack.c.b16 %v604, %v603
        %v620 = vpack.c.b16 %v606, %v605
        %v621 = vpack.c.b16 %v608, %v607
        %v622 = vpack.c.b16 %v610, %v609
        %v623 = vpack.c.b16 %v612, %v611
        %v624 = vpack.c.b16 %v614, %v613
        %v625 = vpack.c.b16 %v616, %v615
        %v626 = vpack.c.b16 %v618, %v617
        %v628 = vsel %vm465, %v619, 0
        %v631 = vsel %vm465, %v620, 0
        %v634 = vsel %vm465, %v621, 0
        %v637 = vsel %vm465, %v622, 0
        %v640 = vsel %vm465, %v623, 0
        %v643 = vsel %vm465, %v624, 0
        %v646 = vsel %vm465, %v625, 0
        %v649 = vsel %vm465, %v626, 0
        %651 = vmatprep.subr.bf16.mxu0 0
        %652 = vmatpush1.bf16.msra.mxu0 0
        %653 = vmatprep.subr.bf16.mxu0 0
        %654 = vmatpush1.bf16.msra.mxu0 0
        %655 = vmatprep.subr.bf16.mxu0 0
        %656 = vmatpush1.bf16.msra.mxu0 0
        %657 = vmatprep.subr.bf16.mxu0 0
        %658 = vmatpush1.bf16.msra.mxu0 0
        %659 = vmatprep.subr.bf16.mxu0 0
        %660 = vmatpush1.bf16.msra.mxu0 %v460
        %661 = vmatprep.subr.bf16.mxu0 0
        %662 = vmatpush1.bf16.msra.mxu0 %v459
        %663 = vmatprep.subr.bf16.mxu0 0
        %664 = vmatpush1.bf16.msra.mxu0 %v458
        %665 = vmatprep.subr.bf16.mxu0 0
        %666 = vmatpush1.bf16.msra.mxu0 %v457
        %667 = vmatprep.subr.bf16.mxu0 0
        %668 = vmatpush2.bf16.msra.mxu0 0
        %669 = vmatprep.subr.bf16.mxu0 0
        %670 = vmatpush2.bf16.msra.mxu0 0
        %671 = vmatprep.subr.bf16.mxu0 0
        %672 = vmatpush2.bf16.msra.mxu0 0
        %673 = vmatprep.subr.bf16.mxu0 0
        %674 = vmatpush2.bf16.msra.mxu0 0
        %675 = vmatprep.subr.bf16.mxu0 0
        %676 = vmatpush2.bf16.msra.mxu0 0
        %677 = vmatprep.subr.bf16.mxu0 0
        %678 = vmatpush2.bf16.msra.mxu0 0
        %679 = vmatprep.subr.bf16.mxu0 0
        %680 = vmatpush2.bf16.msra.mxu0 0
        %681 = vmatprep.subr.bf16.mxu0 0
        %682 = vmatpush2.bf16.msra.mxu0 0
        %683 = vmatprep.mubr.bf16.mxu0 0
        %684 = vmatmul.mubr.bf16.gmra.mxu0 %v628
        %v685 = vpop.f32.mrf.mxu0
        %v686 = vadd.f32 %v399, %v685
        %v687 = vpop.f32.mrf.mxu0
        %v688 = vpop.f32.mrf.mxu0
        %v689 = vadd.f32 %v399, %v688
        %v690 = vpop.f32.mrf.mxu0
        %691 = vmatprep.mubr.bf16.mxu0 0
        %692 = vmatmul.mubr.bf16.gmra.mxu0 %v631
        %v693 = vpop.f32.mrf.mxu0
        %v694 = vadd.f32 %v399, %v693
        %v695 = vpop.f32.mrf.mxu0
        %v696 = vpop.f32.mrf.mxu0
        %v697 = vadd.f32 %v399, %v696
        %v698 = vpop.f32.mrf.mxu0
        %699 = vmatprep.mubr.bf16.mxu0 0
        %700 = vmatmul.mubr.bf16.gmra.mxu0 %v634
        %v701 = vpop.f32.mrf.mxu0
        %v702 = vadd.f32 %v399, %v701
        %v703 = vpop.f32.mrf.mxu0
        %v704 = vpop.f32.mrf.mxu0
        %v705 = vadd.f32 %v399, %v704
        %v706 = vpop.f32.mrf.mxu0
        %707 = vmatprep.mubr.bf16.mxu0 0
        %708 = vmatmul.mubr.bf16.gmra.mxu0 %v637
        %v709 = vpop.f32.mrf.mxu0
        %v710 = vadd.f32 %v399, %v709
        %v711 = vpop.f32.mrf.mxu0
        %v712 = vpop.f32.mrf.mxu0
        %v713 = vadd.f32 %v399, %v712
        %v714 = vpop.f32.mrf.mxu0
        %715 = vmatprep.mubr.bf16.mxu0 0
        %716 = vmatmul.mubr.bf16.gmra.mxu0 %v640
        %v717 = vpop.f32.mrf.mxu0
        %v718 = vadd.f32 %v399, %v717
        %v719 = vpop.f32.mrf.mxu0
        %v720 = vpop.f32.mrf.mxu0
        %v721 = vadd.f32 %v399, %v720
        %v722 = vpop.f32.mrf.mxu0
        %723 = vmatprep.mubr.bf16.mxu0 0
        %724 = vmatmul.mubr.bf16.gmra.mxu0 %v643
        %v725 = vpop.f32.mrf.mxu0
        %v726 = vadd.f32 %v399, %v725
        %v727 = vpop.f32.mrf.mxu0
        %v728 = vpop.f32.mrf.mxu0
        %v729 = vadd.f32 %v399, %v728
        %v730 = vpop.f32.mrf.mxu0
        %731 = vmatprep.mubr.bf16.mxu0 0
        %732 = vmatmul.mubr.bf16.gmra.mxu0 %v646
        %v733 = vpop.f32.mrf.mxu0
        %v734 = vadd.f32 %v399, %v733
        %v735 = vpop.f32.mrf.mxu0
        %v736 = vpop.f32.mrf.mxu0
        %v737 = vadd.f32 %v399, %v736
        %v738 = vpop.f32.mrf.mxu0
        %739 = vmatprep.mubr.bf16.mxu0 0
        %740 = vmatmul.mubr.bf16.gmra.mxu0 %v649
        %v741 = vpop.f32.mrf.mxu0
        %v742 = vadd.f32 %v399, %v741
        %v743 = vpop.f32.mrf.mxu0
        %v744 = vpop.f32.mrf.mxu0
        %v745 = vadd.f32 %v399, %v744
        %v746 = vpop.f32.mrf.mxu0
        %747 = vdwg.mxu0
        %v748 = vpack.c.bf16 %v689, %v686
        %v749 = vpack.c.bf16 %v697, %v694
        %v750 = vpack.c.bf16 %v705, %v702
        %v751 = vpack.c.bf16 %v713, %v710
        %v752 = vpack.c.bf16 %v721, %v718
        %v753 = vpack.c.bf16 %v729, %v726
        %v754 = vpack.c.bf16 %v737, %v734
        %v755 = vpack.c.bf16 %v745, %v742
        %757 = vrot.lane.b32.xlu0 %v748, 64
        %v758 = vpop.permute.xlu0 %757
        %759 = vrot.lane.b32.xlu0 %v748, 56
        %v760 = vpop.permute.xlu0 %759
        %vm761 = vcmask 64512
        %v763 = vsel %vm761, %v758, 0
        %v766 = vsel %vm761, %v760, 0
        %768 = vmatprep.subr.bf16.mxu0 0
        %769 = vmatpush1.bf16.xpose.msra.mxu0 0
        %770 = vmatprep.subr.bf16.mxu0 0
        %771 = vmatpush1.bf16.xpose.msra.mxu0 0
        %772 = vmatprep.subr.bf16.mxu0 0
        %773 = vmatpush1.bf16.xpose.msra.mxu0 0
        %774 = vmatprep.subr.bf16.mxu0 0
        %775 = vmatpush1.bf16.xpose.msra.mxu0 0
        %776 = vmatprep.subr.bf16.mxu0 0
        %777 = vmatpush1.bf16.xpose.msra.mxu0 0
        %778 = vmatprep.subr.bf16.mxu0 0
        %779 = vmatpush1.bf16.xpose.msra.mxu0 0
        %780 = vmatprep.subr.bf16.mxu0 0
        %781 = vmatpush1.bf16.xpose.msra.mxu0 0
        %782 = vmatprep.subr.bf16.mxu0 0
        %783 = vmatpush1.bf16.xpose.msra.mxu0 %v766
        %784 = vmatprep.subr.bf16.mxu0 0
        %785 = vmatpush2.bf16.xpose.msra.mxu0 0
        %786 = vmatprep.subr.bf16.mxu0 0
        %787 = vmatpush2.bf16.xpose.msra.mxu0 0
        %788 = vmatprep.subr.bf16.mxu0 0
        %789 = vmatpush2.bf16.xpose.msra.mxu0 0
        %790 = vmatprep.subr.bf16.mxu0 0
        %791 = vmatpush2.bf16.xpose.msra.mxu0 0
        %792 = vmatprep.subr.bf16.mxu0 0
        %793 = vmatpush2.bf16.xpose.msra.mxu0 0
        %794 = vmatprep.subr.bf16.mxu0 0
        %795 = vmatpush2.bf16.xpose.msra.mxu0 0
        %796 = vmatprep.subr.bf16.mxu0 0
        %797 = vmatpush2.bf16.xpose.msra.mxu0 0
        %798 = vmatprep.subr.bf16.mxu0 0
        %799 = vmatpush2.bf16.xpose.msra.mxu0 0
        %800 = vmatprep.mubr.bf16.mxu0 0
        %801 = vmatmul.mubr.bf16.gmra.mxu0 %v763
        %v802 = vpop.f32.mrf.mxu0
        %v803 = vadd.f32 0.0, %v802
        %v804 = vpop.f32.mrf.mxu0
        %v805 = vpop.f32.mrf.mxu0
        %v806 = vadd.f32 0.0, %v805
        %v807 = vpop.f32.mrf.mxu0
        %808 = vdwg.mxu0
        %810 = vrot.lane.b32.xlu0 %v749, 64
        %v811 = vpop.permute.xlu0 %810
        %812 = vrot.lane.b32.xlu0 %v749, 56
        %v813 = vpop.permute.xlu0 %812
        %v815 = vsel %vm761, %v811, 0
        %v818 = vsel %vm761, %v813, 0
        %820 = vmatprep.subr.bf16.mxu0 0
        %821 = vmatpush1.bf16.xpose.msra.mxu0 0
        %822 = vmatprep.subr.bf16.mxu0 0
        %823 = vmatpush1.bf16.xpose.msra.mxu0 0
        %824 = vmatprep.subr.bf16.mxu0 0
        %825 = vmatpush1.bf16.xpose.msra.mxu0 0
        %826 = vmatprep.subr.bf16.mxu0 0
        %827 = vmatpush1.bf16.xpose.msra.mxu0 0
        %828 = vmatprep.subr.bf16.mxu0 0
        %829 = vmatpush1.bf16.xpose.msra.mxu0 0
        %830 = vmatprep.subr.bf16.mxu0 0
        %831 = vmatpush1.bf16.xpose.msra.mxu0 0
        %832 = vmatprep.subr.bf16.mxu0 0
        %833 = vmatpush1.bf16.xpose.msra.mxu0 0
        %834 = vmatprep.subr.bf16.mxu0 0
        %835 = vmatpush1.bf16.xpose.msra.mxu0 %v818
        %836 = vmatprep.subr.bf16.mxu0 0
        %837 = vmatpush2.bf16.xpose.msra.mxu0 0
        %838 = vmatprep.subr.bf16.mxu0 0
        %839 = vmatpush2.bf16.xpose.msra.mxu0 0
        %840 = vmatprep.subr.bf16.mxu0 0
        %841 = vmatpush2.bf16.xpose.msra.mxu0 0
        %842 = vmatprep.subr.bf16.mxu0 0
        %843 = vmatpush2.bf16.xpose.msra.mxu0 0
        %844 = vmatprep.subr.bf16.mxu0 0
        %845 = vmatpush2.bf16.xpose.msra.mxu0 0
        %846 = vmatprep.subr.bf16.mxu0 0
        %847 = vmatpush2.bf16.xpose.msra.mxu0 0
        %848 = vmatprep.subr.bf16.mxu0 0
        %849 = vmatpush2.bf16.xpose.msra.mxu0 0
        %850 = vmatprep.subr.bf16.mxu0 0
        %851 = vmatpush2.bf16.xpose.msra.mxu0 0
        %852 = vmatprep.mubr.bf16.mxu0 0
        %853 = vmatmul.mubr.bf16.gmra.mxu0 %v815
        %v854 = vpop.f32.mrf.mxu0
        %v855 = vadd.f32 0.0, %v854
        %v856 = vpop.f32.mrf.mxu0
        %v857 = vpop.f32.mrf.mxu0
        %v858 = vadd.f32 0.0, %v857
        %v859 = vpop.f32.mrf.mxu0
        %860 = vdwg.mxu0
        %862 = vrot.lane.b32.xlu0 %v750, 64
        %v863 = vpop.permute.xlu0 %862
        %864 = vrot.lane.b32.xlu0 %v750, 56
        %v865 = vpop.permute.xlu0 %864
        %v867 = vsel %vm761, %v863, 0
        %v870 = vsel %vm761, %v865, 0
        %872 = vmatprep.subr.bf16.mxu0 0
        %873 = vmatpush1.bf16.xpose.msra.mxu0 0
        %874 = vmatprep.subr.bf16.mxu0 0
        %875 = vmatpush1.bf16.xpose.msra.mxu0 0
        %876 = vmatprep.subr.bf16.mxu0 0
        %877 = vmatpush1.bf16.xpose.msra.mxu0 0
        %878 = vmatprep.subr.bf16.mxu0 0
        %879 = vmatpush1.bf16.xpose.msra.mxu0 0
        %880 = vmatprep.subr.bf16.mxu0 0
        %881 = vmatpush1.bf16.xpose.msra.mxu0 0
        %882 = vmatprep.subr.bf16.mxu0 0
        %883 = vmatpush1.bf16.xpose.msra.mxu0 0
        %884 = vmatprep.subr.bf16.mxu0 0
        %885 = vmatpush1.bf16.xpose.msra.mxu0 0
        %886 = vmatprep.subr.bf16.mxu0 0
        %887 = vmatpush1.bf16.xpose.msra.mxu0 %v870
        %888 = vmatprep.subr.bf16.mxu0 0
        %889 = vmatpush2.bf16.xpose.msra.mxu0 0
        %890 = vmatprep.subr.bf16.mxu0 0
        %891 = vmatpush2.bf16.xpose.msra.mxu0 0
        %892 = vmatprep.subr.bf16.mxu0 0
        %893 = vmatpush2.bf16.xpose.msra.mxu0 0
        %894 = vmatprep.subr.bf16.mxu0 0
        %895 = vmatpush2.bf16.xpose.msra.mxu0 0
        %896 = vmatprep.subr.bf16.mxu0 0
        %897 = vmatpush2.bf16.xpose.msra.mxu0 0
        %898 = vmatprep.subr.bf16.mxu0 0
        %899 = vmatpush2.bf16.xpose.msra.mxu0 0
        %900 = vmatprep.subr.bf16.mxu0 0
        %901 = vmatpush2.bf16.xpose.msra.mxu0 0
        %902 = vmatprep.subr.bf16.mxu0 0
        %903 = vmatpush2.bf16.xpose.msra.mxu0 0
        %904 = vmatprep.mubr.bf16.mxu0 0
        %905 = vmatmul.mubr.bf16.gmra.mxu0 %v867
        %v906 = vpop.f32.mrf.mxu0
        %v907 = vadd.f32 0.0, %v906
        %v908 = vpop.f32.mrf.mxu0
        %v909 = vpop.f32.mrf.mxu0
        %v910 = vadd.f32 0.0, %v909
        %v911 = vpop.f32.mrf.mxu0
        %912 = vdwg.mxu0
        %914 = vrot.lane.b32.xlu0 %v751, 64
        %v915 = vpop.permute.xlu0 %914
        %916 = vrot.lane.b32.xlu0 %v751, 56
        %v917 = vpop.permute.xlu0 %916
        %v919 = vsel %vm761, %v915, 0
        %v922 = vsel %vm761, %v917, 0
        %924 = vmatprep.subr.bf16.mxu0 0
        %925 = vmatpush1.bf16.xpose.msra.mxu0 0
        %926 = vmatprep.subr.bf16.mxu0 0
        %927 = vmatpush1.bf16.xpose.msra.mxu0 0
        %928 = vmatprep.subr.bf16.mxu0 0
        %929 = vmatpush1.bf16.xpose.msra.mxu0 0
        %930 = vmatprep.subr.bf16.mxu0 0
        %931 = vmatpush1.bf16.xpose.msra.mxu0 0
        %932 = vmatprep.subr.bf16.mxu0 0
        %933 = vmatpush1.bf16.xpose.msra.mxu0 0
        %934 = vmatprep.subr.bf16.mxu0 0
        %935 = vmatpush1.bf16.xpose.msra.mxu0 0
        %936 = vmatprep.subr.bf16.mxu0 0
        %937 = vmatpush1.bf16.xpose.msra.mxu0 0
        %938 = vmatprep.subr.bf16.mxu0 0
        %939 = vmatpush1.bf16.xpose.msra.mxu0 %v922
        %940 = vmatprep.subr.bf16.mxu0 0
        %941 = vmatpush2.bf16.xpose.msra.mxu0 0
        %942 = vmatprep.subr.bf16.mxu0 0
        %943 = vmatpush2.bf16.xpose.msra.mxu0 0
        %944 = vmatprep.subr.bf16.mxu0 0
        %945 = vmatpush2.bf16.xpose.msra.mxu0 0
        %946 = vmatprep.subr.bf16.mxu0 0
        %947 = vmatpush2.bf16.xpose.msra.mxu0 0
        %948 = vmatprep.subr.bf16.mxu0 0
        %949 = vmatpush2.bf16.xpose.msra.mxu0 0
        %950 = vmatprep.subr.bf16.mxu0 0
        %951 = vmatpush2.bf16.xpose.msra.mxu0 0
        %952 = vmatprep.subr.bf16.mxu0 0
        %953 = vmatpush2.bf16.xpose.msra.mxu0 0
        %954 = vmatprep.subr.bf16.mxu0 0
        %955 = vmatpush2.bf16.xpose.msra.mxu0 0
        %956 = vmatprep.mubr.bf16.mxu0 0
        %957 = vmatmul.mubr.bf16.gmra.mxu0 %v919
        %v958 = vpop.f32.mrf.mxu0
        %v959 = vadd.f32 0.0, %v958
        %v960 = vpop.f32.mrf.mxu0
        %v961 = vpop.f32.mrf.mxu0
        %v962 = vadd.f32 0.0, %v961
        %v963 = vpop.f32.mrf.mxu0
        %964 = vdwg.mxu0
        %966 = vrot.lane.b32.xlu0 %v752, 64
        %v967 = vpop.permute.xlu0 %966
        %968 = vrot.lane.b32.xlu0 %v752, 56
        %v969 = vpop.permute.xlu0 %968
        %v971 = vsel %vm761, %v967, 0
        %v974 = vsel %vm761, %v969, 0
        %976 = vmatprep.subr.bf16.mxu0 0
        %977 = vmatpush1.bf16.xpose.msra.mxu0 0
        %978 = vmatprep.subr.bf16.mxu0 0
        %979 = vmatpush1.bf16.xpose.msra.mxu0 0
        %980 = vmatprep.subr.bf16.mxu0 0
        %981 = vmatpush1.bf16.xpose.msra.mxu0 0
        %982 = vmatprep.subr.bf16.mxu0 0
        %983 = vmatpush1.bf16.xpose.msra.mxu0 0
        %984 = vmatprep.subr.bf16.mxu0 0
        %985 = vmatpush1.bf16.xpose.msra.mxu0 0
        %986 = vmatprep.subr.bf16.mxu0 0
        %987 = vmatpush1.bf16.xpose.msra.mxu0 0
        %988 = vmatprep.subr.bf16.mxu0 0
        %989 = vmatpush1.bf16.xpose.msra.mxu0 0
        %990 = vmatprep.subr.bf16.mxu0 0
        %991 = vmatpush1.bf16.xpose.msra.mxu0 %v974
        %992 = vmatprep.subr.bf16.mxu0 0
        %993 = vmatpush2.bf16.xpose.msra.mxu0 0
        %994 = vmatprep.subr.bf16.mxu0 0
        %995 = vmatpush2.bf16.xpose.msra.mxu0 0
        %996 = vmatprep.subr.bf16.mxu0 0
        %997 = vmatpush2.bf16.xpose.msra.mxu0 0
        %998 = vmatprep.subr.bf16.mxu0 0
        %999 = vmatpush2.bf16.xpose.msra.mxu0 0
        %1000 = vmatprep.subr.bf16.mxu0 0
        %1001 = vmatpush2.bf16.xpose.msra.mxu0 0
        %1002 = vmatprep.subr.bf16.mxu0 0
        %1003 = vmatpush2.bf16.xpose.msra.mxu0 0
        %1004 = vmatprep.subr.bf16.mxu0 0
        %1005 = vmatpush2.bf16.xpose.msra.mxu0 0
        %1006 = vmatprep.subr.bf16.mxu0 0
        %1007 = vmatpush2.bf16.xpose.msra.mxu0 0
        %1008 = vmatprep.mubr.bf16.mxu0 0
        %1009 = vmatmul.mubr.bf16.gmra.mxu0 %v971
        %v1010 = vpop.f32.mrf.mxu0
        %v1011 = vadd.f32 0.0, %v1010
        %v1012 = vpop.f32.mrf.mxu0
        %v1013 = vpop.f32.mrf.mxu0
        %v1014 = vadd.f32 0.0, %v1013
        %v1015 = vpop.f32.mrf.mxu0
        %1016 = vdwg.mxu0
        %1018 = vrot.lane.b32.xlu0 %v753, 64
        %v1019 = vpop.permute.xlu0 %1018
        %1020 = vrot.lane.b32.xlu0 %v753, 56
        %v1021 = vpop.permute.xlu0 %1020
        %v1023 = vsel %vm761, %v1019, 0
        %v1026 = vsel %vm761, %v1021, 0
        %1028 = vmatprep.subr.bf16.mxu0 0
        %1029 = vmatpush1.bf16.xpose.msra.mxu0 0
        %1030 = vmatprep.subr.bf16.mxu0 0
        %1031 = vmatpush1.bf16.xpose.msra.mxu0 0
        %1032 = vmatprep.subr.bf16.mxu0 0
        %1033 = vmatpush1.bf16.xpose.msra.mxu0 0
        %1034 = vmatprep.subr.bf16.mxu0 0
        %1035 = vmatpush1.bf16.xpose.msra.mxu0 0
        %1036 = vmatprep.subr.bf16.mxu0 0
        %1037 = vmatpush1.bf16.xpose.msra.mxu0 0
        %1038 = vmatprep.subr.bf16.mxu0 0
        %1039 = vmatpush1.bf16.xpose.msra.mxu0 0
        %1040 = vmatprep.subr.bf16.mxu0 0
        %1041 = vmatpush1.bf16.xpose.msra.mxu0 0
        %1042 = vmatprep.subr.bf16.mxu0 0
        %1043 = vmatpush1.bf16.xpose.msra.mxu0 %v1026
        %1044 = vmatprep.subr.bf16.mxu0 0
        %1045 = vmatpush2.bf16.xpose.msra.mxu0 0
        %1046 = vmatprep.subr.bf16.mxu0 0
        %1047 = vmatpush2.bf16.xpose.msra.mxu0 0
        %1048 = vmatprep.subr.bf16.mxu0 0
        %1049 = vmatpush2.bf16.xpose.msra.mxu0 0
        %1050 = vmatprep.subr.bf16.mxu0 0
        %1051 = vmatpush2.bf16.xpose.msra.mxu0 0
        %1052 = vmatprep.subr.bf16.mxu0 0
        %1053 = vmatpush2.bf16.xpose.msra.mxu0 0
        %1054 = vmatprep.subr.bf16.mxu0 0
        %1055 = vmatpush2.bf16.xpose.msra.mxu0 0
        %1056 = vmatprep.subr.bf16.mxu0 0
        %1057 = vmatpush2.bf16.xpose.msra.mxu0 0
        %1058 = vmatprep.subr.bf16.mxu0 0
        %1059 = vmatpush2.bf16.xpose.msra.mxu0 0
        %1060 = vmatprep.mubr.bf16.mxu0 0
        %1061 = vmatmul.mubr.bf16.gmra.mxu0 %v1023
        %v1062 = vpop.f32.mrf.mxu0
        %v1063 = vadd.f32 0.0, %v1062
        %v1064 = vpop.f32.mrf.mxu0
        %v1065 = vpop.f32.mrf.mxu0
        %v1066 = vadd.f32 0.0, %v1065
        %v1067 = vpop.f32.mrf.mxu0
        %1068 = vdwg.mxu0
        %1070 = vrot.lane.b32.xlu0 %v754, 64
        %v1071 = vpop.permute.xlu0 %1070
        %1072 = vrot.lane.b32.xlu0 %v754, 56
        %v1073 = vpop.permute.xlu0 %1072
        %v1075 = vsel %vm761, %v1071, 0
        %v1078 = vsel %vm761, %v1073, 0
        %1080 = vmatprep.subr.bf16.mxu0 0
        %1081 = vmatpush1.bf16.xpose.msra.mxu0 0
        %1082 = vmatprep.subr.bf16.mxu0 0
        %1083 = vmatpush1.bf16.xpose.msra.mxu0 0
        %1084 = vmatprep.subr.bf16.mxu0 0
        %1085 = vmatpush1.bf16.xpose.msra.mxu0 0
        %1086 = vmatprep.subr.bf16.mxu0 0
        %1087 = vmatpush1.bf16.xpose.msra.mxu0 0
        %1088 = vmatprep.subr.bf16.mxu0 0
        %1089 = vmatpush1.bf16.xpose.msra.mxu0 0
        %1090 = vmatprep.subr.bf16.mxu0 0
        %1091 = vmatpush1.bf16.xpose.msra.mxu0 0
        %1092 = vmatprep.subr.bf16.mxu0 0
        %1093 = vmatpush1.bf16.xpose.msra.mxu0 0
        %1094 = vmatprep.subr.bf16.mxu0 0
        %1095 = vmatpush1.bf16.xpose.msra.mxu0 %v1078
        %1096 = vmatprep.subr.bf16.mxu0 0
        %1097 = vmatpush2.bf16.xpose.msra.mxu0 0
        %1098 = vmatprep.subr.bf16.mxu0 0
        %1099 = vmatpush2.bf16.xpose.msra.mxu0 0
        %1100 = vmatprep.subr.bf16.mxu0 0
        %1101 = vmatpush2.bf16.xpose.msra.mxu0 0
        %1102 = vmatprep.subr.bf16.mxu0 0
        %1103 = vmatpush2.bf16.xpose.msra.mxu0 0
        %1104 = vmatprep.subr.bf16.mxu0 0
        %1105 = vmatpush2.bf16.xpose.msra.mxu0 0
        %1106 = vmatprep.subr.bf16.mxu0 0
        %1107 = vmatpush2.bf16.xpose.msra.mxu0 0
        %1108 = vmatprep.subr.bf16.mxu0 0
        %1109 = vmatpush2.bf16.xpose.msra.mxu0 0
        %1110 = vmatprep.subr.bf16.mxu0 0
        %1111 = vmatpush2.bf16.xpose.msra.mxu0 0
        %1112 = vmatprep.mubr.bf16.mxu0 0
        %1113 = vmatmul.mubr.bf16.gmra.mxu0 %v1075
        %v1114 = vpop.f32.mrf.mxu0
        %v1115 = vadd.f32 0.0, %v1114
        %v1116 = vpop.f32.mrf.mxu0
        %v1117 = vpop.f32.mrf.mxu0
        %v1118 = vadd.f32 0.0, %v1117
        %v1119 = vpop.f32.mrf.mxu0
        %1120 = vdwg.mxu0
        %1122 = vrot.lane.b32.xlu0 %v755, 64
        %v1123 = vpop.permute.xlu0 %1122
        %1124 = vrot.lane.b32.xlu0 %v755, 56
        %v1125 = vpop.permute.xlu0 %1124
        %v1127 = vsel %vm761, %v1123, 0
        %v1130 = vsel %vm761, %v1125, 0
        %1132 = vmatprep.subr.bf16.mxu0 0
        %1133 = vmatpush1.bf16.xpose.msra.mxu0 0
        %1134 = vmatprep.subr.bf16.mxu0 0
        %1135 = vmatpush1.bf16.xpose.msra.mxu0 0
        %1136 = vmatprep.subr.bf16.mxu0 0
        %1137 = vmatpush1.bf16.xpose.msra.mxu0 0
        %1138 = vmatprep.subr.bf16.mxu0 0
        %1139 = vmatpush1.bf16.xpose.msra.mxu0 0
        %1140 = vmatprep.subr.bf16.mxu0 0
        %1141 = vmatpush1.bf16.xpose.msra.mxu0 0
        %1142 = vmatprep.subr.bf16.mxu0 0
        %1143 = vmatpush1.bf16.xpose.msra.mxu0 0
        %1144 = vmatprep.subr.bf16.mxu0 0
        %1145 = vmatpush1.bf16.xpose.msra.mxu0 0
        %1146 = vmatprep.subr.bf16.mxu0 0
        %1147 = vmatpush1.bf16.xpose.msra.mxu0 %v1130
        %1148 = vmatprep.subr.bf16.mxu0 0
        %1149 = vmatpush2.bf16.xpose.msra.mxu0 0
        %1150 = vmatprep.subr.bf16.mxu0 0
        %1151 = vmatpush2.bf16.xpose.msra.mxu0 0
        %1152 = vmatprep.subr.bf16.mxu0 0
        %1153 = vmatpush2.bf16.xpose.msra.mxu0 0
        %1154 = vmatprep.subr.bf16.mxu0 0
        %1155 = vmatpush2.bf16.xpose.msra.mxu0 0
        %1156 = vmatprep.subr.bf16.mxu0 0
        %1157 = vmatpush2.bf16.xpose.msra.mxu0 0
        %1158 = vmatprep.subr.bf16.mxu0 0
        %1159 = vmatpush2.bf16.xpose.msra.mxu0 0
        %1160 = vmatprep.subr.bf16.mxu0 0
        %1161 = vmatpush2.bf16.xpose.msra.mxu0 0
        %1162 = vmatprep.subr.bf16.mxu0 0
        %1163 = vmatpush2.bf16.xpose.msra.mxu0 0
        %1164 = vmatprep.mubr.bf16.mxu0 0
        %1165 = vmatmul.mubr.bf16.gmra.mxu0 %v1127
        %v1166 = vpop.f32.mrf.mxu0
        %v1167 = vadd.f32 0.0, %v1166
        %v1168 = vpop.f32.mrf.mxu0
        %v1169 = vpop.f32.mrf.mxu0
        %v1170 = vadd.f32 0.0, %v1169
        %v1171 = vpop.f32.mrf.mxu0
        %1172 = vdwg.mxu0
        %v1173 = vpack.c.bf16 %v525, %v525
        %v1174 = vpack.c.bf16 %v528, %v528
        %v1175 = vpack.c.bf16 %v533, %v533
        %v1176 = vpack.c.bf16 %v536, %v536
        %v1177 = vpack.c.bf16 %v541, %v541
        %v1178 = vpack.c.bf16 %v544, %v544
        %v1179 = vpack.c.bf16 %v549, %v549
        %v1180 = vpack.c.bf16 %v552, %v552
        %v1181 = vpack.c.bf16 %v557, %v557
        %v1182 = vpack.c.bf16 %v560, %v560
        %v1183 = vpack.c.bf16 %v565, %v565
        %v1184 = vpack.c.bf16 %v568, %v568
        %v1185 = vpack.c.bf16 %v573, %v573
        %v1186 = vpack.c.bf16 %v576, %v576
        %v1187 = vpack.c.bf16 %v581, %v581
        %v1188 = vpack.c.bf16 %v584, %v584
        %1190 = vrot.lane.b32.xlu0 %v1173, 64
        %v1191 = vpop.permute.xlu0 %1190
        %1192 = vrot.lane.b32.xlu0 %v1173, 56
        %v1193 = vpop.permute.xlu0 %1192
        %v1195 = vsel %vm761, %v1191, 0
        %v1198 = vsel %vm761, %v1193, 0
        %1200 = vmatprep.subr.bf16.mxu0 0
        %1201 = vmatpush1.bf16.xpose.msra.mxu0 0
        %1202 = vmatprep.subr.bf16.mxu0 0
        %1203 = vmatpush1.bf16.xpose.msra.mxu0 0
        %1204 = vmatprep.subr.bf16.mxu0 0
        %1205 = vmatpush1.bf16.xpose.msra.mxu0 0
        %1206 = vmatprep.subr.bf16.mxu0 0
        %1207 = vmatpush1.bf16.xpose.msra.mxu0 0
        %1208 = vmatprep.subr.bf16.mxu0 0
        %1209 = vmatpush1.bf16.xpose.msra.mxu0 0
        %1210 = vmatprep.subr.bf16.mxu0 0
        %1211 = vmatpush1.bf16.xpose.msra.mxu0 0
        %1212 = vmatprep.subr.bf16.mxu0 0
        %1213 = vmatpush1.bf16.xpose.msra.mxu0 0
        %1214 = vmatprep.subr.bf16.mxu0 0
        %1215 = vmatpush1.bf16.xpose.msra.mxu0 %v1198
        %1216 = vmatprep.subr.bf16.mxu0 0
        %1217 = vmatpush2.bf16.xpose.msra.mxu0 0
        %1218 = vmatprep.subr.bf16.mxu0 0
        %1219 = vmatpush2.bf16.xpose.msra.mxu0 0
        %1220 = vmatprep.subr.bf16.mxu0 0
        %1221 = vmatpush2.bf16.xpose.msra.mxu0 0
        %1222 = vmatprep.subr.bf16.mxu0 0
        %1223 = vmatpush2.bf16.xpose.msra.mxu0 0
        %1224 = vmatprep.subr.bf16.mxu0 0
        %1225 = vmatpush2.bf16.xpose.msra.mxu0 0
        %1226 = vmatprep.subr.bf16.mxu0 0
        %1227 = vmatpush2.bf16.xpose.msra.mxu0 0
        %1228 = vmatprep.subr.bf16.mxu0 0
        %1229 = vmatpush2.bf16.xpose.msra.mxu0 0
        %1230 = vmatprep.subr.bf16.mxu0 0
        %1231 = vmatpush2.bf16.xpose.msra.mxu0 0
        %1232 = vmatprep.mubr.bf16.mxu0 0
        %1233 = vmatmul.mubr.bf16.gmra.mxu0 %v1195
        %v1234 = vpop.f32.mrf.mxu0
        %v1235 = vadd.f32 0.0, %v1234
        %v1236 = vpop.f32.mrf.mxu0
        %v1237 = vpop.f32.mrf.mxu0
        %v1238 = vpop.f32.mrf.mxu0
        %1239 = vdwg.mxu0
        %1241 = vrot.lane.b32.xlu0 %v1174, 64
        %v1242 = vpop.permute.xlu0 %1241
        %1243 = vrot.lane.b32.xlu0 %v1174, 56
        %v1244 = vpop.permute.xlu0 %1243
        %v1246 = vsel %vm761, %v1242, 0
        %v1249 = vsel %vm761, %v1244, 0
        %1251 = vmatprep.subr.bf16.mxu0 0
        %1252 = vmatpush1.bf16.xpose.msra.mxu0 0
        %1253 = vmatprep.subr.bf16.mxu0 0
        %1254 = vmatpush1.bf16.xpose.msra.mxu0 0
        %1255 = vmatprep.subr.bf16.mxu0 0
        %1256 = vmatpush1.bf16.xpose.msra.mxu0 0
        %1257 = vmatprep.subr.bf16.mxu0 0
        %1258 = vmatpush1.bf16.xpose.msra.mxu0 0
        %1259 = vmatprep.subr.bf16.mxu0 0
        %1260 = vmatpush1.bf16.xpose.msra.mxu0 0
        %1261 = vmatprep.subr.bf16.mxu0 0
        %1262 = vmatpush1.bf16.xpose.msra.mxu0 0
        %1263 = vmatprep.subr.bf16.mxu0 0
        %1264 = vmatpush1.bf16.xpose.msra.mxu0 0
        %1265 = vmatprep.subr.bf16.mxu0 0
        %1266 = vmatpush1.bf16.xpose.msra.mxu0 %v1249
        %1267 = vmatprep.subr.bf16.mxu0 0
        %1268 = vmatpush2.bf16.xpose.msra.mxu0 0
        %1269 = vmatprep.subr.bf16.mxu0 0
        %1270 = vmatpush2.bf16.xpose.msra.mxu0 0
        %1271 = vmatprep.subr.bf16.mxu0 0
        %1272 = vmatpush2.bf16.xpose.msra.mxu0 0
        %1273 = vmatprep.subr.bf16.mxu0 0
        %1274 = vmatpush2.bf16.xpose.msra.mxu0 0
        %1275 = vmatprep.subr.bf16.mxu0 0
        %1276 = vmatpush2.bf16.xpose.msra.mxu0 0
        %1277 = vmatprep.subr.bf16.mxu0 0
        %1278 = vmatpush2.bf16.xpose.msra.mxu0 0
        %1279 = vmatprep.subr.bf16.mxu0 0
        %1280 = vmatpush2.bf16.xpose.msra.mxu0 0
        %1281 = vmatprep.subr.bf16.mxu0 0
        %1282 = vmatpush2.bf16.xpose.msra.mxu0 0
        %1283 = vmatprep.mubr.bf16.mxu0 0
        %1284 = vmatmul.mubr.bf16.gmra.mxu0 %v1246
        %v1285 = vpop.f32.mrf.mxu0
        %v1286 = vadd.f32 0.0, %v1285
        %v1287 = vpop.f32.mrf.mxu0
        %v1288 = vpop.f32.mrf.mxu0
        %v1289 = vpop.f32.mrf.mxu0
        %1290 = vdwg.mxu0
        %1292 = vrot.lane.b32.xlu0 %v1175, 64
        %v1293 = vpop.permute.xlu0 %1292
        %1294 = vrot.lane.b32.xlu0 %v1175, 56
        %v1295 = vpop.permute.xlu0 %1294
        %v1297 = vsel %vm761, %v1293, 0
        %v1300 = vsel %vm761, %v1295, 0
        %1302 = vmatprep.subr.bf16.mxu0 0
        %1303 = vmatpush1.bf16.xpose.msra.mxu0 0
        %1304 = vmatprep.subr.bf16.mxu0 0
        %1305 = vmatpush1.bf16.xpose.msra.mxu0 0
        %1306 = vmatprep.subr.bf16.mxu0 0
        %1307 = vmatpush1.bf16.xpose.msra.mxu0 0
        %1308 = vmatprep.subr.bf16.mxu0 0
        %1309 = vmatpush1.bf16.xpose.msra.mxu0 0
        %1310 = vmatprep.subr.bf16.mxu0 0
        %1311 = vmatpush1.bf16.xpose.msra.mxu0 0
        %1312 = vmatprep.subr.bf16.mxu0 0
        %1313 = vmatpush1.bf16.xpose.msra.mxu0 0
        %1314 = vmatprep.subr.bf16.mxu0 0
        %1315 = vmatpush1.bf16.xpose.msra.mxu0 0
        %1316 = vmatprep.subr.bf16.mxu0 0
        %1317 = vmatpush1.bf16.xpose.msra.mxu0 %v1300
        %1318 = vmatprep.subr.bf16.mxu0 0
        %1319 = vmatpush2.bf16.xpose.msra.mxu0 0
        %1320 = vmatprep.subr.bf16.mxu0 0
        %1321 = vmatpush2.bf16.xpose.msra.mxu0 0
        %1322 = vmatprep.subr.bf16.mxu0 0
        %1323 = vmatpush2.bf16.xpose.msra.mxu0 0
        %1324 = vmatprep.subr.bf16.mxu0 0
        %1325 = vmatpush2.bf16.xpose.msra.mxu0 0
        %1326 = vmatprep.subr.bf16.mxu0 0
        %1327 = vmatpush2.bf16.xpose.msra.mxu0 0
        %1328 = vmatprep.subr.bf16.mxu0 0
        %1329 = vmatpush2.bf16.xpose.msra.mxu0 0
        %1330 = vmatprep.subr.bf16.mxu0 0
        %1331 = vmatpush2.bf16.xpose.msra.mxu0 0
        %1332 = vmatprep.subr.bf16.mxu0 0
        %1333 = vmatpush2.bf16.xpose.msra.mxu0 0
        %1334 = vmatprep.mubr.bf16.mxu0 0
        %1335 = vmatmul.mubr.bf16.gmra.mxu0 %v1297
        %v1336 = vpop.f32.mrf.mxu0
        %v1337 = vadd.f32 0.0, %v1336
        %v1338 = vpop.f32.mrf.mxu0
        %v1339 = vpop.f32.mrf.mxu0
        %v1340 = vpop.f32.mrf.mxu0
        %1341 = vdwg.mxu0
        %1343 = vrot.lane.b32.xlu0 %v1176, 64
        %v1344 = vpop.permute.xlu0 %1343
        %1345 = vrot.lane.b32.xlu0 %v1176, 56
        %v1346 = vpop.permute.xlu0 %1345
        %v1348 = vsel %vm761, %v1344, 0
        %v1351 = vsel %vm761, %v1346, 0
        %1353 = vmatprep.subr.bf16.mxu0 0
        %1354 = vmatpush1.bf16.xpose.msra.mxu0 0
        %1355 = vmatprep.subr.bf16.mxu0 0
        %1356 = vmatpush1.bf16.xpose.msra.mxu0 0
        %1357 = vmatprep.subr.bf16.mxu0 0
        %1358 = vmatpush1.bf16.xpose.msra.mxu0 0
        %1359 = vmatprep.subr.bf16.mxu0 0
        %1360 = vmatpush1.bf16.xpose.msra.mxu0 0
        %1361 = vmatprep.subr.bf16.mxu0 0
        %1362 = vmatpush1.bf16.xpose.msra.mxu0 0
        %1363 = vmatprep.subr.bf16.mxu0 0
        %1364 = vmatpush1.bf16.xpose.msra.mxu0 0
        %1365 = vmatprep.subr.bf16.mxu0 0
        %1366 = vmatpush1.bf16.xpose.msra.mxu0 0
        %1367 = vmatprep.subr.bf16.mxu0 0
        %1368 = vmatpush1.bf16.xpose.msra.mxu0 %v1351
        %1369 = vmatprep.subr.bf16.mxu0 0
        %1370 = vmatpush2.bf16.xpose.msra.mxu0 0
        %1371 = vmatprep.subr.bf16.mxu0 0
        %1372 = vmatpush2.bf16.xpose.msra.mxu0 0
        %1373 = vmatprep.subr.bf16.mxu0 0
        %1374 = vmatpush2.bf16.xpose.msra.mxu0 0
        %1375 = vmatprep.subr.bf16.mxu0 0
        %1376 = vmatpush2.bf16.xpose.msra.mxu0 0
        %1377 = vmatprep.subr.bf16.mxu0 0
        %1378 = vmatpush2.bf16.xpose.msra.mxu0 0
        %1379 = vmatprep.subr.bf16.mxu0 0
        %1380 = vmatpush2.bf16.xpose.msra.mxu0 0
        %1381 = vmatprep.subr.bf16.mxu0 0
        %1382 = vmatpush2.bf16.xpose.msra.mxu0 0
        %1383 = vmatprep.subr.bf16.mxu0 0
        %1384 = vmatpush2.bf16.xpose.msra.mxu0 0
        %1385 = vmatprep.mubr.bf16.mxu0 0
        %1386 = vmatmul.mubr.bf16.gmra.mxu0 %v1348
        %v1387 = vpop.f32.mrf.mxu0
        %v1388 = vadd.f32 0.0, %v1387
        %v1389 = vpop.f32.mrf.mxu0
        %v1390 = vpop.f32.mrf.mxu0
        %v1391 = vpop.f32.mrf.mxu0
        %1392 = vdwg.mxu0
        %1394 = vrot.lane.b32.xlu0 %v1177, 64
        %v1395 = vpop.permute.xlu0 %1394
        %1396 = vrot.lane.b32.xlu0 %v1177, 56
        %v1397 = vpop.permute.xlu0 %1396
        %v1399 = vsel %vm761, %v1395, 0
        %v1402 = vsel %vm761, %v1397, 0
        %1404 = vmatprep.subr.bf16.mxu0 0
        %1405 = vmatpush1.bf16.xpose.msra.mxu0 0
        %1406 = vmatprep.subr.bf16.mxu0 0
        %1407 = vmatpush1.bf16.xpose.msra.mxu0 0
        %1408 = vmatprep.subr.bf16.mxu0 0
        %1409 = vmatpush1.bf16.xpose.msra.mxu0 0
        %1410 = vmatprep.subr.bf16.mxu0 0
        %1411 = vmatpush1.bf16.xpose.msra.mxu0 0
        %1412 = vmatprep.subr.bf16.mxu0 0
        %1413 = vmatpush1.bf16.xpose.msra.mxu0 0
        %1414 = vmatprep.subr.bf16.mxu0 0
        %1415 = vmatpush1.bf16.xpose.msra.mxu0 0
        %1416 = vmatprep.subr.bf16.mxu0 0
        %1417 = vmatpush1.bf16.xpose.msra.mxu0 0
        %1418 = vmatprep.subr.bf16.mxu0 0
        %1419 = vmatpush1.bf16.xpose.msra.mxu0 %v1402
        %1420 = vmatprep.subr.bf16.mxu0 0
        %1421 = vmatpush2.bf16.xpose.msra.mxu0 0
        %1422 = vmatprep.subr.bf16.mxu0 0
        %1423 = vmatpush2.bf16.xpose.msra.mxu0 0
        %1424 = vmatprep.subr.bf16.mxu0 0
        %1425 = vmatpush2.bf16.xpose.msra.mxu0 0
        %1426 = vmatprep.subr.bf16.mxu0 0
        %1427 = vmatpush2.bf16.xpose.msra.mxu0 0
        %1428 = vmatprep.subr.bf16.mxu0 0
        %1429 = vmatpush2.bf16.xpose.msra.mxu0 0
        %1430 = vmatprep.subr.bf16.mxu0 0
        %1431 = vmatpush2.bf16.xpose.msra.mxu0 0
        %1432 = vmatprep.subr.bf16.mxu0 0
        %1433 = vmatpush2.bf16.xpose.msra.mxu0 0
        %1434 = vmatprep.subr.bf16.mxu0 0
        %1435 = vmatpush2.bf16.xpose.msra.mxu0 0
        %1436 = vmatprep.mubr.bf16.mxu0 0
        %1437 = vmatmul.mubr.bf16.gmra.mxu0 %v1399
        %v1438 = vpop.f32.mrf.mxu0
        %v1439 = vadd.f32 0.0, %v1438
        %v1440 = vpop.f32.mrf.mxu0
        %v1441 = vpop.f32.mrf.mxu0
        %v1442 = vpop.f32.mrf.mxu0
        %1443 = vdwg.mxu0
        %1445 = vrot.lane.b32.xlu0 %v1178, 64
        %v1446 = vpop.permute.xlu0 %1445
        %1447 = vrot.lane.b32.xlu0 %v1178, 56
        %v1448 = vpop.permute.xlu0 %1447
        %v1450 = vsel %vm761, %v1446, 0
        %v1453 = vsel %vm761, %v1448, 0
        %1455 = vmatprep.subr.bf16.mxu0 0
        %1456 = vmatpush1.bf16.xpose.msra.mxu0 0
        %1457 = vmatprep.subr.bf16.mxu0 0
        %1458 = vmatpush1.bf16.xpose.msra.mxu0 0
        %1459 = vmatprep.subr.bf16.mxu0 0
        %1460 = vmatpush1.bf16.xpose.msra.mxu0 0
        %1461 = vmatprep.subr.bf16.mxu0 0
        %1462 = vmatpush1.bf16.xpose.msra.mxu0 0
        %1463 = vmatprep.subr.bf16.mxu0 0
        %1464 = vmatpush1.bf16.xpose.msra.mxu0 0
        %1465 = vmatprep.subr.bf16.mxu0 0
        %1466 = vmatpush1.bf16.xpose.msra.mxu0 0
        %1467 = vmatprep.subr.bf16.mxu0 0
        %1468 = vmatpush1.bf16.xpose.msra.mxu0 0
        %1469 = vmatprep.subr.bf16.mxu0 0
        %1470 = vmatpush1.bf16.xpose.msra.mxu0 %v1453
        %1471 = vmatprep.subr.bf16.mxu0 0
        %1472 = vmatpush2.bf16.xpose.msra.mxu0 0
        %1473 = vmatprep.subr.bf16.mxu0 0
        %1474 = vmatpush2.bf16.xpose.msra.mxu0 0
        %1475 = vmatprep.subr.bf16.mxu0 0
        %1476 = vmatpush2.bf16.xpose.msra.mxu0 0
        %1477 = vmatprep.subr.bf16.mxu0 0
        %1478 = vmatpush2.bf16.xpose.msra.mxu0 0
        %1479 = vmatprep.subr.bf16.mxu0 0
        %1480 = vmatpush2.bf16.xpose.msra.mxu0 0
        %1481 = vmatprep.subr.bf16.mxu0 0
        %1482 = vmatpush2.bf16.xpose.msra.mxu0 0
        %1483 = vmatprep.subr.bf16.mxu0 0
        %1484 = vmatpush2.bf16.xpose.msra.mxu0 0
        %1485 = vmatprep.subr.bf16.mxu0 0
        %1486 = vmatpush2.bf16.xpose.msra.mxu0 0
        %1487 = vmatprep.mubr.bf16.mxu0 0
        %1488 = vmatmul.mubr.bf16.gmra.mxu0 %v1450
        %v1489 = vpop.f32.mrf.mxu0
        %v1490 = vadd.f32 0.0, %v1489
        %v1491 = vpop.f32.mrf.mxu0
        %v1492 = vpop.f32.mrf.mxu0
        %v1493 = vpop.f32.mrf.mxu0
        %1494 = vdwg.mxu0
        %1496 = vrot.lane.b32.xlu0 %v1179, 64
        %v1497 = vpop.permute.xlu0 %1496
        %1498 = vrot.lane.b32.xlu0 %v1179, 56
        %v1499 = vpop.permute.xlu0 %1498
        %v1501 = vsel %vm761, %v1497, 0
        %v1504 = vsel %vm761, %v1499, 0
        %1506 = vmatprep.subr.bf16.mxu0 0
        %1507 = vmatpush1.bf16.xpose.msra.mxu0 0
        %1508 = vmatprep.subr.bf16.mxu0 0
        %1509 = vmatpush1.bf16.xpose.msra.mxu0 0
        %1510 = vmatprep.subr.bf16.mxu0 0
        %1511 = vmatpush1.bf16.xpose.msra.mxu0 0
        %1512 = vmatprep.subr.bf16.mxu0 0
        %1513 = vmatpush1.bf16.xpose.msra.mxu0 0
        %1514 = vmatprep.subr.bf16.mxu0 0
        %1515 = vmatpush1.bf16.xpose.msra.mxu0 0
        %1516 = vmatprep.subr.bf16.mxu0 0
        %1517 = vmatpush1.bf16.xpose.msra.mxu0 0
        %1518 = vmatprep.subr.bf16.mxu0 0
        %1519 = vmatpush1.bf16.xpose.msra.mxu0 0
        %1520 = vmatprep.subr.bf16.mxu0 0
        %1521 = vmatpush1.bf16.xpose.msra.mxu0 %v1504
        %1522 = vmatprep.subr.bf16.mxu0 0
        %1523 = vmatpush2.bf16.xpose.msra.mxu0 0
        %1524 = vmatprep.subr.bf16.mxu0 0
        %1525 = vmatpush2.bf16.xpose.msra.mxu0 0
        %1526 = vmatprep.subr.bf16.mxu0 0
        %1527 = vmatpush2.bf16.xpose.msra.mxu0 0
        %1528 = vmatprep.subr.bf16.mxu0 0
        %1529 = vmatpush2.bf16.xpose.msra.mxu0 0
        %1530 = vmatprep.subr.bf16.mxu0 0
        %1531 = vmatpush2.bf16.xpose.msra.mxu0 0
        %1532 = vmatprep.subr.bf16.mxu0 0
        %1533 = vmatpush2.bf16.xpose.msra.mxu0 0
        %1534 = vmatprep.subr.bf16.mxu0 0
        %1535 = vmatpush2.bf16.xpose.msra.mxu0 0
        %1536 = vmatprep.subr.bf16.mxu0 0
        %1537 = vmatpush2.bf16.xpose.msra.mxu0 0
        %1538 = vmatprep.mubr.bf16.mxu0 0
        %1539 = vmatmul.mubr.bf16.gmra.mxu0 %v1501
        %v1540 = vpop.f32.mrf.mxu0
        %v1541 = vadd.f32 0.0, %v1540
        %v1542 = vpop.f32.mrf.mxu0
        %v1543 = vpop.f32.mrf.mxu0
        %v1544 = vpop.f32.mrf.mxu0
        %1545 = vdwg.mxu0
        %1547 = vrot.lane.b32.xlu0 %v1180, 64
        %v1548 = vpop.permute.xlu0 %1547
        %1549 = vrot.lane.b32.xlu0 %v1180, 56
        %v1550 = vpop.permute.xlu0 %1549
        %v1552 = vsel %vm761, %v1548, 0
        %v1555 = vsel %vm761, %v1550, 0
        %1557 = vmatprep.subr.bf16.mxu0 0
        %1558 = vmatpush1.bf16.xpose.msra.mxu0 0
        %1559 = vmatprep.subr.bf16.mxu0 0
        %1560 = vmatpush1.bf16.xpose.msra.mxu0 0
        %1561 = vmatprep.subr.bf16.mxu0 0
        %1562 = vmatpush1.bf16.xpose.msra.mxu0 0
        %1563 = vmatprep.subr.bf16.mxu0 0
        %1564 = vmatpush1.bf16.xpose.msra.mxu0 0
        %1565 = vmatprep.subr.bf16.mxu0 0
        %1566 = vmatpush1.bf16.xpose.msra.mxu0 0
        %1567 = vmatprep.subr.bf16.mxu0 0
        %1568 = vmatpush1.bf16.xpose.msra.mxu0 0
        %1569 = vmatprep.subr.bf16.mxu0 0
        %1570 = vmatpush1.bf16.xpose.msra.mxu0 0
        %1571 = vmatprep.subr.bf16.mxu0 0
        %1572 = vmatpush1.bf16.xpose.msra.mxu0 %v1555
        %1573 = vmatprep.subr.bf16.mxu0 0
        %1574 = vmatpush2.bf16.xpose.msra.mxu0 0
        %1575 = vmatprep.subr.bf16.mxu0 0
        %1576 = vmatpush2.bf16.xpose.msra.mxu0 0
        %1577 = vmatprep.subr.bf16.mxu0 0
        %1578 = vmatpush2.bf16.xpose.msra.mxu0 0
        %1579 = vmatprep.subr.bf16.mxu0 0
        %1580 = vmatpush2.bf16.xpose.msra.mxu0 0
        %1581 = vmatprep.subr.bf16.mxu0 0
        %1582 = vmatpush2.bf16.xpose.msra.mxu0 0
        %1583 = vmatprep.subr.bf16.mxu0 0
        %1584 = vmatpush2.bf16.xpose.msra.mxu0 0
        %1585 = vmatprep.subr.bf16.mxu0 0
        %1586 = vmatpush2.bf16.xpose.msra.mxu0 0
        %1587 = vmatprep.subr.bf16.mxu0 0
        %1588 = vmatpush2.bf16.xpose.msra.mxu0 0
        %1589 = vmatprep.mubr.bf16.mxu0 0
        %1590 = vmatmul.mubr.bf16.gmra.mxu0 %v1552
        %v1591 = vpop.f32.mrf.mxu0
        %v1592 = vadd.f32 0.0, %v1591
        %v1593 = vpop.f32.mrf.mxu0
        %v1594 = vpop.f32.mrf.mxu0
        %v1595 = vpop.f32.mrf.mxu0
        %1596 = vdwg.mxu0
        %1598 = vrot.lane.b32.xlu0 %v1181, 64
        %v1599 = vpop.permute.xlu0 %1598
        %1600 = vrot.lane.b32.xlu0 %v1181, 56
        %v1601 = vpop.permute.xlu0 %1600
        %v1603 = vsel %vm761, %v1599, 0
        %v1606 = vsel %vm761, %v1601, 0
        %1608 = vmatprep.subr.bf16.mxu0 0
        %1609 = vmatpush1.bf16.xpose.msra.mxu0 0
        %1610 = vmatprep.subr.bf16.mxu0 0
        %1611 = vmatpush1.bf16.xpose.msra.mxu0 0
        %1612 = vmatprep.subr.bf16.mxu0 0
        %1613 = vmatpush1.bf16.xpose.msra.mxu0 0
        %1614 = vmatprep.subr.bf16.mxu0 0
        %1615 = vmatpush1.bf16.xpose.msra.mxu0 0
        %1616 = vmatprep.subr.bf16.mxu0 0
        %1617 = vmatpush1.bf16.xpose.msra.mxu0 0
        %1618 = vmatprep.subr.bf16.mxu0 0
        %1619 = vmatpush1.bf16.xpose.msra.mxu0 0
        %1620 = vmatprep.subr.bf16.mxu0 0
        %1621 = vmatpush1.bf16.xpose.msra.mxu0 0
        %1622 = vmatprep.subr.bf16.mxu0 0
        %1623 = vmatpush1.bf16.xpose.msra.mxu0 %v1606
        %1624 = vmatprep.subr.bf16.mxu0 0
        %1625 = vmatpush2.bf16.xpose.msra.mxu0 0
        %1626 = vmatprep.subr.bf16.mxu0 0
        %1627 = vmatpush2.bf16.xpose.msra.mxu0 0
        %1628 = vmatprep.subr.bf16.mxu0 0
        %1629 = vmatpush2.bf16.xpose.msra.mxu0 0
        %1630 = vmatprep.subr.bf16.mxu0 0
        %1631 = vmatpush2.bf16.xpose.msra.mxu0 0
        %1632 = vmatprep.subr.bf16.mxu0 0
        %1633 = vmatpush2.bf16.xpose.msra.mxu0 0
        %1634 = vmatprep.subr.bf16.mxu0 0
        %1635 = vmatpush2.bf16.xpose.msra.mxu0 0
        %1636 = vmatprep.subr.bf16.mxu0 0
        %1637 = vmatpush2.bf16.xpose.msra.mxu0 0
        %1638 = vmatprep.subr.bf16.mxu0 0
        %1639 = vmatpush2.bf16.xpose.msra.mxu0 0
        %1640 = vmatprep.mubr.bf16.mxu0 0
        %1641 = vmatmul.mubr.bf16.gmra.mxu0 %v1603
        %v1642 = vpop.f32.mrf.mxu0
        %v1643 = vadd.f32 0.0, %v1642
        %v1644 = vpop.f32.mrf.mxu0
        %v1645 = vpop.f32.mrf.mxu0
        %v1646 = vpop.f32.mrf.mxu0
        %1647 = vdwg.mxu0
        %1649 = vrot.lane.b32.xlu0 %v1182, 64
        %v1650 = vpop.permute.xlu0 %1649
        %1651 = vrot.lane.b32.xlu0 %v1182, 56
        %v1652 = vpop.permute.xlu0 %1651
        %v1654 = vsel %vm761, %v1650, 0
        %v1657 = vsel %vm761, %v1652, 0
        %1659 = vmatprep.subr.bf16.mxu0 0
        %1660 = vmatpush1.bf16.xpose.msra.mxu0 0
        %1661 = vmatprep.subr.bf16.mxu0 0
        %1662 = vmatpush1.bf16.xpose.msra.mxu0 0
        %1663 = vmatprep.subr.bf16.mxu0 0
        %1664 = vmatpush1.bf16.xpose.msra.mxu0 0
        %1665 = vmatprep.subr.bf16.mxu0 0
        %1666 = vmatpush1.bf16.xpose.msra.mxu0 0
        %1667 = vmatprep.subr.bf16.mxu0 0
        %1668 = vmatpush1.bf16.xpose.msra.mxu0 0
        %1669 = vmatprep.subr.bf16.mxu0 0
        %1670 = vmatpush1.bf16.xpose.msra.mxu0 0
        %1671 = vmatprep.subr.bf16.mxu0 0
        %1672 = vmatpush1.bf16.xpose.msra.mxu0 0
        %1673 = vmatprep.subr.bf16.mxu0 0
        %1674 = vmatpush1.bf16.xpose.msra.mxu0 %v1657
        %1675 = vmatprep.subr.bf16.mxu0 0
        %1676 = vmatpush2.bf16.xpose.msra.mxu0 0
        %1677 = vmatprep.subr.bf16.mxu0 0
        %1678 = vmatpush2.bf16.xpose.msra.mxu0 0
        %1679 = vmatprep.subr.bf16.mxu0 0
        %1680 = vmatpush2.bf16.xpose.msra.mxu0 0
        %1681 = vmatprep.subr.bf16.mxu0 0
        %1682 = vmatpush2.bf16.xpose.msra.mxu0 0
        %1683 = vmatprep.subr.bf16.mxu0 0
        %1684 = vmatpush2.bf16.xpose.msra.mxu0 0
        %1685 = vmatprep.subr.bf16.mxu0 0
        %1686 = vmatpush2.bf16.xpose.msra.mxu0 0
        %1687 = vmatprep.subr.bf16.mxu0 0
        %1688 = vmatpush2.bf16.xpose.msra.mxu0 0
        %1689 = vmatprep.subr.bf16.mxu0 0
        %1690 = vmatpush2.bf16.xpose.msra.mxu0 0
        %1691 = vmatprep.mubr.bf16.mxu0 0
        %1692 = vmatmul.mubr.bf16.gmra.mxu0 %v1654
        %v1693 = vpop.f32.mrf.mxu0
        %v1694 = vadd.f32 0.0, %v1693
        %v1695 = vpop.f32.mrf.mxu0
        %v1696 = vpop.f32.mrf.mxu0
        %v1697 = vpop.f32.mrf.mxu0
        %1698 = vdwg.mxu0
        %1700 = vrot.lane.b32.xlu0 %v1183, 64
        %v1701 = vpop.permute.xlu0 %1700
        %1702 = vrot.lane.b32.xlu0 %v1183, 56
        %v1703 = vpop.permute.xlu0 %1702
        %v1705 = vsel %vm761, %v1701, 0
        %v1708 = vsel %vm761, %v1703, 0
        %1710 = vmatprep.subr.bf16.mxu0 0
        %1711 = vmatpush1.bf16.xpose.msra.mxu0 0
        %1712 = vmatprep.subr.bf16.mxu0 0
        %1713 = vmatpush1.bf16.xpose.msra.mxu0 0
        %1714 = vmatprep.subr.bf16.mxu0 0
        %1715 = vmatpush1.bf16.xpose.msra.mxu0 0
        %1716 = vmatprep.subr.bf16.mxu0 0
        %1717 = vmatpush1.bf16.xpose.msra.mxu0 0
        %1718 = vmatprep.subr.bf16.mxu0 0
        %1719 = vmatpush1.bf16.xpose.msra.mxu0 0
        %1720 = vmatprep.subr.bf16.mxu0 0
        %1721 = vmatpush1.bf16.xpose.msra.mxu0 0
        %1722 = vmatprep.subr.bf16.mxu0 0
        %1723 = vmatpush1.bf16.xpose.msra.mxu0 0
        %1724 = vmatprep.subr.bf16.mxu0 0
        %1725 = vmatpush1.bf16.xpose.msra.mxu0 %v1708
        %1726 = vmatprep.subr.bf16.mxu0 0
        %1727 = vmatpush2.bf16.xpose.msra.mxu0 0
        %1728 = vmatprep.subr.bf16.mxu0 0
        %1729 = vmatpush2.bf16.xpose.msra.mxu0 0
        %1730 = vmatprep.subr.bf16.mxu0 0
        %1731 = vmatpush2.bf16.xpose.msra.mxu0 0
        %1732 = vmatprep.subr.bf16.mxu0 0
        %1733 = vmatpush2.bf16.xpose.msra.mxu0 0
        %1734 = vmatprep.subr.bf16.mxu0 0
        %1735 = vmatpush2.bf16.xpose.msra.mxu0 0
        %1736 = vmatprep.subr.bf16.mxu0 0
        %1737 = vmatpush2.bf16.xpose.msra.mxu0 0
        %1738 = vmatprep.subr.bf16.mxu0 0
        %1739 = vmatpush2.bf16.xpose.msra.mxu0 0
        %1740 = vmatprep.subr.bf16.mxu0 0
        %1741 = vmatpush2.bf16.xpose.msra.mxu0 0
        %1742 = vmatprep.mubr.bf16.mxu0 0
        %1743 = vmatmul.mubr.bf16.gmra.mxu0 %v1705
        %v1744 = vpop.f32.mrf.mxu0
        %v1745 = vadd.f32 0.0, %v1744
        %v1746 = vpop.f32.mrf.mxu0
        %v1747 = vpop.f32.mrf.mxu0
        %v1748 = vpop.f32.mrf.mxu0
        %1749 = vdwg.mxu0
        %1751 = vrot.lane.b32.xlu0 %v1184, 64
        %v1752 = vpop.permute.xlu0 %1751
        %1753 = vrot.lane.b32.xlu0 %v1184, 56
        %v1754 = vpop.permute.xlu0 %1753
        %v1756 = vsel %vm761, %v1752, 0
        %v1759 = vsel %vm761, %v1754, 0
        %1761 = vmatprep.subr.bf16.mxu0 0
        %1762 = vmatpush1.bf16.xpose.msra.mxu0 0
        %1763 = vmatprep.subr.bf16.mxu0 0
        %1764 = vmatpush1.bf16.xpose.msra.mxu0 0
        %1765 = vmatprep.subr.bf16.mxu0 0
        %1766 = vmatpush1.bf16.xpose.msra.mxu0 0
        %1767 = vmatprep.subr.bf16.mxu0 0
        %1768 = vmatpush1.bf16.xpose.msra.mxu0 0
        %1769 = vmatprep.subr.bf16.mxu0 0
        %1770 = vmatpush1.bf16.xpose.msra.mxu0 0
        %1771 = vmatprep.subr.bf16.mxu0 0
        %1772 = vmatpush1.bf16.xpose.msra.mxu0 0
        %1773 = vmatprep.subr.bf16.mxu0 0
        %1774 = vmatpush1.bf16.xpose.msra.mxu0 0
        %1775 = vmatprep.subr.bf16.mxu0 0
        %1776 = vmatpush1.bf16.xpose.msra.mxu0 %v1759
        %1777 = vmatprep.subr.bf16.mxu0 0
        %1778 = vmatpush2.bf16.xpose.msra.mxu0 0
        %1779 = vmatprep.subr.bf16.mxu0 0
        %1780 = vmatpush2.bf16.xpose.msra.mxu0 0
        %1781 = vmatprep.subr.bf16.mxu0 0
        %1782 = vmatpush2.bf16.xpose.msra.mxu0 0
        %1783 = vmatprep.subr.bf16.mxu0 0
        %1784 = vmatpush2.bf16.xpose.msra.mxu0 0
        %1785 = vmatprep.subr.bf16.mxu0 0
        %1786 = vmatpush2.bf16.xpose.msra.mxu0 0
        %1787 = vmatprep.subr.bf16.mxu0 0
        %1788 = vmatpush2.bf16.xpose.msra.mxu0 0
        %1789 = vmatprep.subr.bf16.mxu0 0
        %1790 = vmatpush2.bf16.xpose.msra.mxu0 0
        %1791 = vmatprep.subr.bf16.mxu0 0
        %1792 = vmatpush2.bf16.xpose.msra.mxu0 0
        %1793 = vmatprep.mubr.bf16.mxu0 0
        %1794 = vmatmul.mubr.bf16.gmra.mxu0 %v1756
        %v1795 = vpop.f32.mrf.mxu0
        %v1796 = vadd.f32 0.0, %v1795
        %v1797 = vpop.f32.mrf.mxu0
        %v1798 = vpop.f32.mrf.mxu0
        %v1799 = vpop.f32.mrf.mxu0
        %1800 = vdwg.mxu0
        %1802 = vrot.lane.b32.xlu0 %v1185, 64
        %v1803 = vpop.permute.xlu0 %1802
        %1804 = vrot.lane.b32.xlu0 %v1185, 56
        %v1805 = vpop.permute.xlu0 %1804
        %v1807 = vsel %vm761, %v1803, 0
        %v1810 = vsel %vm761, %v1805, 0
        %1812 = vmatprep.subr.bf16.mxu0 0
        %1813 = vmatpush1.bf16.xpose.msra.mxu0 0
        %1814 = vmatprep.subr.bf16.mxu0 0
        %1815 = vmatpush1.bf16.xpose.msra.mxu0 0
        %1816 = vmatprep.subr.bf16.mxu0 0
        %1817 = vmatpush1.bf16.xpose.msra.mxu0 0
        %1818 = vmatprep.subr.bf16.mxu0 0
        %1819 = vmatpush1.bf16.xpose.msra.mxu0 0
        %1820 = vmatprep.subr.bf16.mxu0 0
        %1821 = vmatpush1.bf16.xpose.msra.mxu0 0
        %1822 = vmatprep.subr.bf16.mxu0 0
        %1823 = vmatpush1.bf16.xpose.msra.mxu0 0
        %1824 = vmatprep.subr.bf16.mxu0 0
        %1825 = vmatpush1.bf16.xpose.msra.mxu0 0
        %1826 = vmatprep.subr.bf16.mxu0 0
        %1827 = vmatpush1.bf16.xpose.msra.mxu0 %v1810
        %1828 = vmatprep.subr.bf16.mxu0 0
        %1829 = vmatpush2.bf16.xpose.msra.mxu0 0
        %1830 = vmatprep.subr.bf16.mxu0 0
        %1831 = vmatpush2.bf16.xpose.msra.mxu0 0
        %1832 = vmatprep.subr.bf16.mxu0 0
        %1833 = vmatpush2.bf16.xpose.msra.mxu0 0
        %1834 = vmatprep.subr.bf16.mxu0 0
        %1835 = vmatpush2.bf16.xpose.msra.mxu0 0
        %1836 = vmatprep.subr.bf16.mxu0 0
        %1837 = vmatpush2.bf16.xpose.msra.mxu0 0
        %1838 = vmatprep.subr.bf16.mxu0 0
        %1839 = vmatpush2.bf16.xpose.msra.mxu0 0
        %1840 = vmatprep.subr.bf16.mxu0 0
        %1841 = vmatpush2.bf16.xpose.msra.mxu0 0
        %1842 = vmatprep.subr.bf16.mxu0 0
        %1843 = vmatpush2.bf16.xpose.msra.mxu0 0
        %1844 = vmatprep.mubr.bf16.mxu0 0
        %1845 = vmatmul.mubr.bf16.gmra.mxu0 %v1807
        %v1846 = vpop.f32.mrf.mxu0
        %v1847 = vadd.f32 0.0, %v1846
        %v1848 = vpop.f32.mrf.mxu0
        %v1849 = vpop.f32.mrf.mxu0
        %v1850 = vpop.f32.mrf.mxu0
        %1851 = vdwg.mxu0
        %1853 = vrot.lane.b32.xlu0 %v1186, 64
        %v1854 = vpop.permute.xlu0 %1853
        %1855 = vrot.lane.b32.xlu0 %v1186, 56
        %v1856 = vpop.permute.xlu0 %1855
        %v1858 = vsel %vm761, %v1854, 0
        %v1861 = vsel %vm761, %v1856, 0
        %1863 = vmatprep.subr.bf16.mxu0 0
        %1864 = vmatpush1.bf16.xpose.msra.mxu0 0
        %1865 = vmatprep.subr.bf16.mxu0 0
        %1866 = vmatpush1.bf16.xpose.msra.mxu0 0
        %1867 = vmatprep.subr.bf16.mxu0 0
        %1868 = vmatpush1.bf16.xpose.msra.mxu0 0
        %1869 = vmatprep.subr.bf16.mxu0 0
        %1870 = vmatpush1.bf16.xpose.msra.mxu0 0
        %1871 = vmatprep.subr.bf16.mxu0 0
        %1872 = vmatpush1.bf16.xpose.msra.mxu0 0
        %1873 = vmatprep.subr.bf16.mxu0 0
        %1874 = vmatpush1.bf16.xpose.msra.mxu0 0
        %1875 = vmatprep.subr.bf16.mxu0 0
        %1876 = vmatpush1.bf16.xpose.msra.mxu0 0
        %1877 = vmatprep.subr.bf16.mxu0 0
        %1878 = vmatpush1.bf16.xpose.msra.mxu0 %v1861
        %1879 = vmatprep.subr.bf16.mxu0 0
        %1880 = vmatpush2.bf16.xpose.msra.mxu0 0
        %1881 = vmatprep.subr.bf16.mxu0 0
        %1882 = vmatpush2.bf16.xpose.msra.mxu0 0
        %1883 = vmatprep.subr.bf16.mxu0 0
        %1884 = vmatpush2.bf16.xpose.msra.mxu0 0
        %1885 = vmatprep.subr.bf16.mxu0 0
        %1886 = vmatpush2.bf16.xpose.msra.mxu0 0
        %1887 = vmatprep.subr.bf16.mxu0 0
        %1888 = vmatpush2.bf16.xpose.msra.mxu0 0
        %1889 = vmatprep.subr.bf16.mxu0 0
        %1890 = vmatpush2.bf16.xpose.msra.mxu0 0
        %1891 = vmatprep.subr.bf16.mxu0 0
        %1892 = vmatpush2.bf16.xpose.msra.mxu0 0
        %1893 = vmatprep.subr.bf16.mxu0 0
        %1894 = vmatpush2.bf16.xpose.msra.mxu0 0
        %1895 = vmatprep.mubr.bf16.mxu0 0
        %1896 = vmatmul.mubr.bf16.gmra.mxu0 %v1858
        %v1897 = vpop.f32.mrf.mxu0
        %v1898 = vadd.f32 0.0, %v1897
        %v1899 = vpop.f32.mrf.mxu0
        %v1900 = vpop.f32.mrf.mxu0
        %v1901 = vpop.f32.mrf.mxu0
        %1902 = vdwg.mxu0
        %1904 = vrot.lane.b32.xlu0 %v1187, 64
        %v1905 = vpop.permute.xlu0 %1904
        %1906 = vrot.lane.b32.xlu0 %v1187, 56
        %v1907 = vpop.permute.xlu0 %1906
        %v1909 = vsel %vm761, %v1905, 0
        %v1912 = vsel %vm761, %v1907, 0
        %1914 = vmatprep.subr.bf16.mxu0 0
        %1915 = vmatpush1.bf16.xpose.msra.mxu0 0
        %1916 = vmatprep.subr.bf16.mxu0 0
        %1917 = vmatpush1.bf16.xpose.msra.mxu0 0
        %1918 = vmatprep.subr.bf16.mxu0 0
        %1919 = vmatpush1.bf16.xpose.msra.mxu0 0
        %1920 = vmatprep.subr.bf16.mxu0 0
        %1921 = vmatpush1.bf16.xpose.msra.mxu0 0
        %1922 = vmatprep.subr.bf16.mxu0 0
        %1923 = vmatpush1.bf16.xpose.msra.mxu0 0
        %1924 = vmatprep.subr.bf16.mxu0 0
        %1925 = vmatpush1.bf16.xpose.msra.mxu0 0
        %1926 = vmatprep.subr.bf16.mxu0 0
        %1927 = vmatpush1.bf16.xpose.msra.mxu0 0
        %1928 = vmatprep.subr.bf16.mxu0 0
        %1929 = vmatpush1.bf16.xpose.msra.mxu0 %v1912
        %1930 = vmatprep.subr.bf16.mxu0 0
        %1931 = vmatpush2.bf16.xpose.msra.mxu0 0
        %1932 = vmatprep.subr.bf16.mxu0 0
        %1933 = vmatpush2.bf16.xpose.msra.mxu0 0
        %1934 = vmatprep.subr.bf16.mxu0 0
        %1935 = vmatpush2.bf16.xpose.msra.mxu0 0
        %1936 = vmatprep.subr.bf16.mxu0 0
        %1937 = vmatpush2.bf16.xpose.msra.mxu0 0
        %1938 = vmatprep.subr.bf16.mxu0 0
        %1939 = vmatpush2.bf16.xpose.msra.mxu0 0
        %1940 = vmatprep.subr.bf16.mxu0 0
        %1941 = vmatpush2.bf16.xpose.msra.mxu0 0
        %1942 = vmatprep.subr.bf16.mxu0 0
        %1943 = vmatpush2.bf16.xpose.msra.mxu0 0
        %1944 = vmatprep.subr.bf16.mxu0 0
        %1945 = vmatpush2.bf16.xpose.msra.mxu0 0
        %1946 = vmatprep.mubr.bf16.mxu0 0
        %1947 = vmatmul.mubr.bf16.gmra.mxu0 %v1909
        %v1948 = vpop.f32.mrf.mxu0
        %v1949 = vadd.f32 0.0, %v1948
        %v1950 = vpop.f32.mrf.mxu0
        %v1951 = vpop.f32.mrf.mxu0
        %v1952 = vpop.f32.mrf.mxu0
        %1953 = vdwg.mxu0
        %1955 = vrot.lane.b32.xlu0 %v1188, 64
        %v1956 = vpop.permute.xlu0 %1955
        %1957 = vrot.lane.b32.xlu0 %v1188, 56
        %v1958 = vpop.permute.xlu0 %1957
        %v1960 = vsel %vm761, %v1956, 0
        %v1963 = vsel %vm761, %v1958, 0
        %1965 = vmatprep.subr.bf16.mxu0 0
        %1966 = vmatpush1.bf16.xpose.msra.mxu0 0
        %1967 = vmatprep.subr.bf16.mxu0 0
        %1968 = vmatpush1.bf16.xpose.msra.mxu0 0
        %1969 = vmatprep.subr.bf16.mxu0 0
        %1970 = vmatpush1.bf16.xpose.msra.mxu0 0
        %1971 = vmatprep.subr.bf16.mxu0 0
        %1972 = vmatpush1.bf16.xpose.msra.mxu0 0
        %1973 = vmatprep.subr.bf16.mxu0 0
        %1974 = vmatpush1.bf16.xpose.msra.mxu0 0
        %1975 = vmatprep.subr.bf16.mxu0 0
        %1976 = vmatpush1.bf16.xpose.msra.mxu0 0
        %1977 = vmatprep.subr.bf16.mxu0 0
        %1978 = vmatpush1.bf16.xpose.msra.mxu0 0
        %1979 = vmatprep.subr.bf16.mxu0 0
        %1980 = vmatpush1.bf16.xpose.msra.mxu0 %v1963
        %1981 = vmatprep.subr.bf16.mxu0 0
        %1982 = vmatpush2.bf16.xpose.msra.mxu0 0
        %1983 = vmatprep.subr.bf16.mxu0 0
        %1984 = vmatpush2.bf16.xpose.msra.mxu0 0
        %1985 = vmatprep.subr.bf16.mxu0 0
        %1986 = vmatpush2.bf16.xpose.msra.mxu0 0
        %1987 = vmatprep.subr.bf16.mxu0 0
        %1988 = vmatpush2.bf16.xpose.msra.mxu0 0
        %1989 = vmatprep.subr.bf16.mxu0 0
        %1990 = vmatpush2.bf16.xpose.msra.mxu0 0
        %1991 = vmatprep.subr.bf16.mxu0 0
        %1992 = vmatpush2.bf16.xpose.msra.mxu0 0
        %1993 = vmatprep.subr.bf16.mxu0 0
        %1994 = vmatpush2.bf16.xpose.msra.mxu0 0
        %1995 = vmatprep.subr.bf16.mxu0 0
        %1996 = vmatpush2.bf16.xpose.msra.mxu0 0
        %1997 = vmatprep.mubr.bf16.mxu0 0
        %1998 = vmatmul.mubr.bf16.gmra.mxu0 %v1960
        %v1999 = vpop.f32.mrf.mxu0
        %v2000 = vadd.f32 0.0, %v1999
        %v2001 = vpop.f32.mrf.mxu0
        %v2002 = vpop.f32.mrf.mxu0
        %v2003 = vpop.f32.mrf.mxu0
        %2004 = vdwg.mxu0
        %v2005 = vlaneseq
        %v2006 = vshrl.u32 %v2005, 7
        %v2007 = vadd.s32 %v2006, 8
        %v2008 = vlaneseq
        %v2009 = vand.u32 %v2008, 127
        %vm2010 = vcmp.eq.s32.totalorder %v2006, %v2009
        %vm2011 = vcmp.eq.s32.totalorder %v2007, %v2009
        %v2012 = vsel %vm2010, -1e+30, %v803
        %v2013 = vsel %vm2011, -1e+30, %v806
        %v2014 = vsel %vm2010, -1e+30, %v855
        %v2015 = vsel %vm2011, -1e+30, %v858
        %v2016 = vsel %vm2010, -1e+30, %v907
        %v2017 = vsel %vm2011, -1e+30, %v910
        %v2018 = vsel %vm2010, -1e+30, %v959
        %v2019 = vsel %vm2011, -1e+30, %v962
        %v2020 = vsel %vm2010, -1e+30, %v1011
        %v2021 = vsel %vm2011, -1e+30, %v1014
        %v2022 = vsel %vm2010, -1e+30, %v1063
        %v2023 = vsel %vm2011, -1e+30, %v1066
        %v2024 = vsel %vm2010, -1e+30, %v1115
        %v2025 = vsel %vm2011, -1e+30, %v1118
        %v2026 = vsel %vm2010, -1e+30, %v1167
        %v2027 = vsel %vm2011, -1e+30, %v1170
        %vm2028 = vcmask 130048
        %v2029 = vsel %vm2028, %v2012, -inf
        %2030 = vmax.xlane.f32.xlu0 %v2029
        %v2031 = vpop.xlane.xlu0 %2030
        %v2032 = vsel %vm2028, %v2013, -inf
        %2033 = vmax.xlane.f32.xlu0 %v2032
        %v2034 = vpop.xlane.xlu0 %2033
        %v2035 = vsel %vm2028, %v2014, -inf
        %2036 = vmax.xlane.f32.xlu0 %v2035
        %v2037 = vpop.xlane.xlu0 %2036
        %v2038 = vsel %vm2028, %v2015, -inf
        %2039 = vmax.xlane.f32.xlu0 %v2038
        %v2040 = vpop.xlane.xlu0 %2039
        %v2041 = vsel %vm2028, %v2016, -inf
        %2042 = vmax.xlane.f32.xlu0 %v2041
        %v2043 = vpop.xlane.xlu0 %2042
        %v2044 = vsel %vm2028, %v2017, -inf
        %2045 = vmax.xlane.f32.xlu0 %v2044
        %v2046 = vpop.xlane.xlu0 %2045
        %v2047 = vsel %vm2028, %v2018, -inf
        %2048 = vmax.xlane.f32.xlu0 %v2047
        %v2049 = vpop.xlane.xlu0 %2048
        %v2050 = vsel %vm2028, %v2019, -inf
        %2051 = vmax.xlane.f32.xlu0 %v2050
        %v2052 = vpop.xlane.xlu0 %2051
        %v2053 = vsel %vm2028, %v2020, -inf
        %2054 = vmax.xlane.f32.xlu0 %v2053
        %v2055 = vpop.xlane.xlu0 %2054
        %v2056 = vsel %vm2028, %v2021, -inf
        %2057 = vmax.xlane.f32.xlu0 %v2056
        %v2058 = vpop.xlane.xlu0 %2057
        %v2059 = vsel %vm2028, %v2022, -inf
        %2060 = vmax.xlane.f32.xlu0 %v2059
        %v2061 = vpop.xlane.xlu0 %2060
        %v2062 = vsel %vm2028, %v2023, -inf
        %2063 = vmax.xlane.f32.xlu0 %v2062
        %v2064 = vpop.xlane.xlu0 %2063
        %v2065 = vsel %vm2028, %v2024, -inf
        %2066 = vmax.xlane.f32.xlu0 %v2065
        %v2067 = vpop.xlane.xlu0 %2066
        %v2068 = vsel %vm2028, %v2025, -inf
        %2069 = vmax.xlane.f32.xlu0 %v2068
        %v2070 = vpop.xlane.xlu0 %2069
        %v2071 = vsel %vm2028, %v2026, -inf
        %2072 = vmax.xlane.f32.xlu0 %v2071
        %v2073 = vpop.xlane.xlu0 %2072
        %v2074 = vsel %vm2028, %v2027, -inf
        %2075 = vmax.xlane.f32.xlu0 %v2074
        %v2076 = vpop.xlane.xlu0 %2075
        %v2077 = vsel %vm761, %v1235, -inf
        %2078 = vmax.xlane.f32.xlu0 %v2077
        %v2079 = vpop.xlane.xlu0 %2078
        %v2080 = vsel %vm761, %v1286, -inf
        %2081 = vmax.xlane.f32.xlu0 %v2080
        %v2082 = vpop.xlane.xlu0 %2081
        %v2083 = vsel %vm761, %v1337, -inf
        %2084 = vmax.xlane.f32.xlu0 %v2083
        %v2085 = vpop.xlane.xlu0 %2084
        %v2086 = vsel %vm761, %v1388, -inf
        %2087 = vmax.xlane.f32.xlu0 %v2086
        %v2088 = vpop.xlane.xlu0 %2087
        %v2089 = vsel %vm761, %v1439, -inf
        %2090 = vmax.xlane.f32.xlu0 %v2089
        %v2091 = vpop.xlane.xlu0 %2090
        %v2092 = vsel %vm761, %v1490, -inf
        %2093 = vmax.xlane.f32.xlu0 %v2092
        %v2094 = vpop.xlane.xlu0 %2093
        %v2095 = vsel %vm761, %v1541, -inf
        %2096 = vmax.xlane.f32.xlu0 %v2095
        %v2097 = vpop.xlane.xlu0 %2096
        %v2098 = vsel %vm761, %v1592, -inf
        %2099 = vmax.xlane.f32.xlu0 %v2098
        %v2100 = vpop.xlane.xlu0 %2099
        %v2101 = vsel %vm761, %v1643, -inf
        %2102 = vmax.xlane.f32.xlu0 %v2101
        %v2103 = vpop.xlane.xlu0 %2102
        %v2104 = vsel %vm761, %v1694, -inf
        %2105 = vmax.xlane.f32.xlu0 %v2104
        %v2106 = vpop.xlane.xlu0 %2105
        %v2107 = vsel %vm761, %v1745, -inf
        %2108 = vmax.xlane.f32.xlu0 %v2107
        %v2109 = vpop.xlane.xlu0 %2108
        %v2110 = vsel %vm761, %v1796, -inf
        %2111 = vmax.xlane.f32.xlu0 %v2110
        %v2112 = vpop.xlane.xlu0 %2111
        %v2113 = vsel %vm761, %v1847, -inf
        %2114 = vmax.xlane.f32.xlu0 %v2113
        %v2115 = vpop.xlane.xlu0 %2114
        %v2116 = vsel %vm761, %v1898, -inf
        %2117 = vmax.xlane.f32.xlu0 %v2116
        %v2118 = vpop.xlane.xlu0 %2117
        %v2119 = vsel %vm761, %v1949, -inf
        %2120 = vmax.xlane.f32.xlu0 %v2119
        %v2121 = vpop.xlane.xlu0 %2120
        %v2122 = vsel %vm761, %v2000, -inf
        %2123 = vmax.xlane.f32.xlu0 %v2122
        %v2124 = vpop.xlane.xlu0 %2123
        %v2141 = vlaneseq
        %v2142 = vshrl.u32 %v2141, 7
        %v2143 = vsub.s32 %v2009, %v2142
        %v2144 = vrot.slane %v2031, %v2143
        %v2145 = vadd.s32 %v2009, 4294967288
        %v2146 = vlaneseq
        %v2147 = vshrl.u32 %v2146, 7
        %v2148 = vsub.s32 %v2145, %v2147
        %v2149 = vrot.slane %v2034, %v2148
        %vm2150 = vcmask 130112
        %v2151 = vsel %vm2150, %v2149, %v2144
        %v2152 = vlaneseq
        %v2153 = vshrl.u32 %v2152, 7
        %v2154 = vsub.s32 %v2009, %v2153
        %v2155 = vrot.slane %v2037, %v2154
        %v2156 = vlaneseq
        %v2157 = vshrl.u32 %v2156, 7
        %v2158 = vsub.s32 %v2145, %v2157
        %v2159 = vrot.slane %v2040, %v2158
        %v2160 = vsel %vm2150, %v2159, %v2155
        %v2161 = vlaneseq
        %v2162 = vshrl.u32 %v2161, 7
        %v2163 = vsub.s32 %v2009, %v2162
        %v2164 = vrot.slane %v2043, %v2163
        %v2165 = vlaneseq
        %v2166 = vshrl.u32 %v2165, 7
        %v2167 = vsub.s32 %v2145, %v2166
        %v2168 = vrot.slane %v2046, %v2167
        %v2169 = vsel %vm2150, %v2168, %v2164
        %v2170 = vlaneseq
        %v2171 = vshrl.u32 %v2170, 7
        %v2172 = vsub.s32 %v2009, %v2171
        %v2173 = vrot.slane %v2049, %v2172
        %v2174 = vlaneseq
        %v2175 = vshrl.u32 %v2174, 7
        %v2176 = vsub.s32 %v2145, %v2175
        %v2177 = vrot.slane %v2052, %v2176
        %v2178 = vsel %vm2150, %v2177, %v2173
        %v2179 = vlaneseq
        %v2180 = vshrl.u32 %v2179, 7
        %v2181 = vsub.s32 %v2009, %v2180
        %v2182 = vrot.slane %v2055, %v2181
        %v2183 = vlaneseq
        %v2184 = vshrl.u32 %v2183, 7
        %v2185 = vsub.s32 %v2145, %v2184
        %v2186 = vrot.slane %v2058, %v2185
        %v2187 = vsel %vm2150, %v2186, %v2182
        %v2188 = vlaneseq
        %v2189 = vshrl.u32 %v2188, 7
        %v2190 = vsub.s32 %v2009, %v2189
        %v2191 = vrot.slane %v2061, %v2190
        %v2192 = vlaneseq
        %v2193 = vshrl.u32 %v2192, 7
        %v2194 = vsub.s32 %v2145, %v2193
        %v2195 = vrot.slane %v2064, %v2194
        %v2196 = vsel %vm2150, %v2195, %v2191
        %v2197 = vlaneseq
        %v2198 = vshrl.u32 %v2197, 7
        %v2199 = vsub.s32 %v2009, %v2198
        %v2200 = vrot.slane %v2067, %v2199
        %v2201 = vlaneseq
        %v2202 = vshrl.u32 %v2201, 7
        %v2203 = vsub.s32 %v2145, %v2202
        %v2204 = vrot.slane %v2070, %v2203
        %v2205 = vsel %vm2150, %v2204, %v2200
        %v2206 = vlaneseq
        %v2207 = vshrl.u32 %v2206, 7
        %v2208 = vsub.s32 %v2009, %v2207
        %v2209 = vrot.slane %v2073, %v2208
        %v2210 = vlaneseq
        %v2211 = vshrl.u32 %v2210, 7
        %v2212 = vsub.s32 %v2145, %v2211
        %v2213 = vrot.slane %v2076, %v2212
        %v2214 = vsel %vm2150, %v2213, %v2209
        %vm2215 = vcmask 1041409
        %v2216 = vsel %vm2215, %v2160, %v2151
        %vm2217 = vcmask 1042434
        %v2218 = vsel %vm2217, %v2169, %v2216
        %vm2219 = vcmask 1043459
        %v2220 = vsel %vm2219, %v2178, %v2218
        %vm2221 = vcmask 1044484
        %v2222 = vsel %vm2221, %v2187, %v2220
        %vm2223 = vcmask 1045509
        %v2224 = vsel %vm2223, %v2196, %v2222
        %vm2225 = vcmask 1046534
        %v2226 = vsel %vm2225, %v2205, %v2224
        %vm2227 = vcmask 1047559
        %v2228 = vsel %vm2227, %v2214, %v2226
        %2230 = vxpose.xlu0.b32.start [1/16] %v2228, 128
        %2231 = vxpose.xlu0.b32.cont [2/16] 0.0, 128
        %2232 = vxpose.xlu0.b32.cont [3/16] 0.0, 128
        %2233 = vxpose.xlu0.b32.cont [4/16] 0.0, 128
        %2234 = vxpose.xlu0.b32.cont [5/16] 0.0, 128
        %2235 = vxpose.xlu0.b32.cont [6/16] 0.0, 128
        %2236 = vxpose.xlu0.b32.cont [7/16] 0.0, 128
        %2237 = vxpose.xlu0.b32.cont [8/16] 0.0, 128
        %2238 = vxpose.xlu0.b32.cont [9/16] 0.0, 128
        %2239 = vxpose.xlu0.b32.cont [10/16] 0.0, 128
        %2240 = vxpose.xlu0.b32.cont [11/16] 0.0, 128
        %2241 = vxpose.xlu0.b32.cont [12/16] 0.0, 128
        %2242 = vxpose.xlu0.b32.cont [13/16] 0.0, 128
        %2243 = vxpose.xlu0.b32.cont [14/16] 0.0, 128
        %2244 = vxpose.xlu0.b32.cont [15/16] 0.0, 128
        %2245 = vxpose.xlu0.b32.end [16/16] 0.0, 128
        %v2246 = vpop.trf.xlu0
        %v2247 = vpop.trf.xlu0
        %v2248 = vpop.trf.xlu0
        %v2249 = vpop.trf.xlu0
        %v2250 = vpop.trf.xlu0
        %v2251 = vpop.trf.xlu0
        %v2252 = vpop.trf.xlu0
        %v2253 = vpop.trf.xlu0
        %v2254 = vpop.trf.xlu0
        %v2255 = vpop.trf.xlu0
        %v2256 = vpop.trf.xlu0
        %v2257 = vpop.trf.xlu0
        %v2258 = vpop.trf.xlu0
        %v2259 = vpop.trf.xlu0
        %v2260 = vpop.trf.xlu0
        %v2261 = vpop.trf.xlu0
        %v2278 = vlaneseq
        %v2279 = vshrl.u32 %v2278, 7
        %v2280 = vsub.s32 %v2009, %v2279
        %v2281 = vrot.slane %v2079, %v2280
        %v2282 = vlaneseq
        %v2283 = vshrl.u32 %v2282, 7
        %v2284 = vsub.s32 %v2009, %v2283
        %v2285 = vrot.slane %v2082, %v2284
        %v2286 = vlaneseq
        %v2287 = vshrl.u32 %v2286, 7
        %v2288 = vsub.s32 %v2009, %v2287
        %v2289 = vrot.slane %v2085, %v2288
        %v2290 = vlaneseq
        %v2291 = vshrl.u32 %v2290, 7
        %v2292 = vsub.s32 %v2009, %v2291
        %v2293 = vrot.slane %v2088, %v2292
        %v2294 = vlaneseq
        %v2295 = vshrl.u32 %v2294, 7
        %v2296 = vsub.s32 %v2009, %v2295
        %v2297 = vrot.slane %v2091, %v2296
        %v2298 = vlaneseq
        %v2299 = vshrl.u32 %v2298, 7
        %v2300 = vsub.s32 %v2009, %v2299
        %v2301 = vrot.slane %v2094, %v2300
        %v2302 = vlaneseq
        %v2303 = vshrl.u32 %v2302, 7
        %v2304 = vsub.s32 %v2009, %v2303
        %v2305 = vrot.slane %v2097, %v2304
        %v2306 = vlaneseq
        %v2307 = vshrl.u32 %v2306, 7
        %v2308 = vsub.s32 %v2009, %v2307
        %v2309 = vrot.slane %v2100, %v2308
        %v2310 = vlaneseq
        %v2311 = vshrl.u32 %v2310, 7
        %v2312 = vsub.s32 %v2009, %v2311
        %v2313 = vrot.slane %v2103, %v2312
        %v2314 = vlaneseq
        %v2315 = vshrl.u32 %v2314, 7
        %v2316 = vsub.s32 %v2009, %v2315
        %v2317 = vrot.slane %v2106, %v2316
        %v2318 = vlaneseq
        %v2319 = vshrl.u32 %v2318, 7
        %v2320 = vsub.s32 %v2009, %v2319
        %v2321 = vrot.slane %v2109, %v2320
        %v2322 = vlaneseq
        %v2323 = vshrl.u32 %v2322, 7
        %v2324 = vsub.s32 %v2009, %v2323
        %v2325 = vrot.slane %v2112, %v2324
        %v2326 = vlaneseq
        %v2327 = vshrl.u32 %v2326, 7
        %v2328 = vsub.s32 %v2009, %v2327
        %v2329 = vrot.slane %v2115, %v2328
        %v2330 = vlaneseq
        %v2331 = vshrl.u32 %v2330, 7
        %v2332 = vsub.s32 %v2009, %v2331
        %v2333 = vrot.slane %v2118, %v2332
        %v2334 = vlaneseq
        %v2335 = vshrl.u32 %v2334, 7
        %v2336 = vsub.s32 %v2009, %v2335
        %v2337 = vrot.slane %v2121, %v2336
        %v2338 = vlaneseq
        %v2339 = vshrl.u32 %v2338, 7
        %v2340 = vsub.s32 %v2009, %v2339
        %v2341 = vrot.slane %v2124, %v2340
        %v2342 = vsel %vm2215, %v2285, %v2281
        %v2343 = vsel %vm2217, %v2289, %v2342
        %v2344 = vsel %vm2219, %v2293, %v2343
        %v2345 = vsel %vm2221, %v2297, %v2344
        %v2346 = vsel %vm2223, %v2301, %v2345
        %v2347 = vsel %vm2225, %v2305, %v2346
        %v2348 = vsel %vm2227, %v2309, %v2347
        %v2349 = vsel %vm2215, %v2317, %v2313
        %v2350 = vsel %vm2217, %v2321, %v2349
        %v2351 = vsel %vm2219, %v2325, %v2350
        %v2352 = vsel %vm2221, %v2329, %v2351
        %v2353 = vsel %vm2223, %v2333, %v2352
        %v2354 = vsel %vm2225, %v2337, %v2353
        %v2355 = vsel %vm2227, %v2341, %v2354
        %v2358 = vmax.f32 %v2246, %v2348
        %v2359 = vmax.f32 %v2247, %v2355
        %2360 = vxpose.xlu0.b32.start [1/16] %v2358, 128
        %2361 = vxpose.xlu0.b32.cont [2/16] %v2359, 128
        %2362 = vxpose.xlu0.b32.cont [3/16] 0.0, 128
        %2363 = vxpose.xlu0.b32.cont [4/16] 0.0, 128
        %2364 = vxpose.xlu0.b32.cont [5/16] 0.0, 128
        %2365 = vxpose.xlu0.b32.cont [6/16] 0.0, 128
        %2366 = vxpose.xlu0.b32.cont [7/16] 0.0, 128
        %2367 = vxpose.xlu0.b32.cont [8/16] 0.0, 128
        %2368 = vxpose.xlu0.b32.cont [9/16] 0.0, 128
        %2369 = vxpose.xlu0.b32.cont [10/16] 0.0, 128
        %2370 = vxpose.xlu0.b32.cont [11/16] 0.0, 128
        %2371 = vxpose.xlu0.b32.cont [12/16] 0.0, 128
        %2372 = vxpose.xlu0.b32.cont [13/16] 0.0, 128
        %2373 = vxpose.xlu0.b32.cont [14/16] 0.0, 128
        %2374 = vxpose.xlu0.b32.cont [15/16] 0.0, 128
        %2375 = vxpose.xlu0.b32.end [16/16] 0.0, 128
        %v2376 = vpop.trf.xlu0
        %v2377 = vpop.trf.xlu0
        %v2378 = vpop.trf.xlu0
        %v2379 = vpop.trf.xlu0
        %v2380 = vpop.trf.xlu0
        %v2381 = vpop.trf.xlu0
        %v2382 = vpop.trf.xlu0
        %v2383 = vpop.trf.xlu0
        %v2384 = vpop.trf.xlu0
        %v2385 = vpop.trf.xlu0
        %v2386 = vpop.trf.xlu0
        %v2387 = vpop.trf.xlu0
        %v2388 = vpop.trf.xlu0
        %v2389 = vpop.trf.xlu0
        %v2390 = vpop.trf.xlu0
        %v2391 = vpop.trf.xlu0
        %v2392 = vlaneseq
        %v2393 = vshrl.u32 %v2392, 7
        %v2394 = vsub.s32 0, %v2393
        %v2395 = vrot.slane %v2376, %v2394
        %2397 = vbcast.lane.b32.xlu0 %v2395, 256
        %v2398 = vpop.permute.xlu0 %2397
        %s2400 = sor.u32 256, 8
        %2401 = vbcast.lane.b32.xlu0 %v2395, %s2400
        %v2402 = vpop.permute.xlu0 %2401
        %v2403 = vlaneseq
        %v2404 = vshrl.u32 %v2403, 7
        %v2405 = vsub.s32 1, %v2404
        %v2406 = vrot.slane %v2376, %v2405
        %2408 = vbcast.lane.b32.xlu0 %v2406, 256
        %v2409 = vpop.permute.xlu0 %2408
        %s2411 = sor.u32 256, 8
        %2412 = vbcast.lane.b32.xlu0 %v2406, %s2411
        %v2413 = vpop.permute.xlu0 %2412
        %v2414 = vlaneseq
        %v2415 = vshrl.u32 %v2414, 7
        %v2416 = vsub.s32 2, %v2415
        %v2417 = vrot.slane %v2376, %v2416
        %2419 = vbcast.lane.b32.xlu0 %v2417, 256
        %v2420 = vpop.permute.xlu0 %2419
        %s2422 = sor.u32 256, 8
        %2423 = vbcast.lane.b32.xlu0 %v2417, %s2422
        %v2424 = vpop.permute.xlu0 %2423
        %v2425 = vlaneseq
        %v2426 = vshrl.u32 %v2425, 7
        %v2427 = vsub.s32 3, %v2426
        %v2428 = vrot.slane %v2376, %v2427
        %2430 = vbcast.lane.b32.xlu0 %v2428, 256
        %v2431 = vpop.permute.xlu0 %2430
        %s2433 = sor.u32 256, 8
        %2434 = vbcast.lane.b32.xlu0 %v2428, %s2433
        %v2435 = vpop.permute.xlu0 %2434
        %v2436 = vlaneseq
        %v2437 = vshrl.u32 %v2436, 7
        %v2438 = vsub.s32 4, %v2437
        %v2439 = vrot.slane %v2376, %v2438
        %2441 = vbcast.lane.b32.xlu0 %v2439, 256
        %v2442 = vpop.permute.xlu0 %2441
        %s2444 = sor.u32 256, 8
        %2445 = vbcast.lane.b32.xlu0 %v2439, %s2444
        %v2446 = vpop.permute.xlu0 %2445
        %v2447 = vlaneseq
        %v2448 = vshrl.u32 %v2447, 7
        %v2449 = vsub.s32 5, %v2448
        %v2450 = vrot.slane %v2376, %v2449
        %2452 = vbcast.lane.b32.xlu0 %v2450, 256
        %v2453 = vpop.permute.xlu0 %2452
        %s2455 = sor.u32 256, 8
        %2456 = vbcast.lane.b32.xlu0 %v2450, %s2455
        %v2457 = vpop.permute.xlu0 %2456
        %v2458 = vlaneseq
        %v2459 = vshrl.u32 %v2458, 7
        %v2460 = vsub.s32 6, %v2459
        %v2461 = vrot.slane %v2376, %v2460
        %2463 = vbcast.lane.b32.xlu0 %v2461, 256
        %v2464 = vpop.permute.xlu0 %2463
        %s2466 = sor.u32 256, 8
        %2467 = vbcast.lane.b32.xlu0 %v2461, %s2466
        %v2468 = vpop.permute.xlu0 %2467
        %v2469 = vlaneseq
        %v2470 = vshrl.u32 %v2469, 7
        %v2471 = vsub.s32 7, %v2470
        %v2472 = vrot.slane %v2376, %v2471
        %2474 = vbcast.lane.b32.xlu0 %v2472, 256
        %v2475 = vpop.permute.xlu0 %2474
        %s2477 = sor.u32 256, 8
        %2478 = vbcast.lane.b32.xlu0 %v2472, %s2477
        %v2479 = vpop.permute.xlu0 %2478
        %v2480 = vsub.f32 %v2012, %v2398
        %v2481 = vsub.f32 %v2013, %v2402
        %v2482 = vsub.f32 %v2014, %v2409
        %v2483 = vsub.f32 %v2015, %v2413
        %v2484 = vsub.f32 %v2016, %v2420
        %v2485 = vsub.f32 %v2017, %v2424
        %v2486 = vsub.f32 %v2018, %v2431
        %v2487 = vsub.f32 %v2019, %v2435
        %v2488 = vsub.f32 %v2020, %v2442
        %v2489 = vsub.f32 %v2021, %v2446
        %v2490 = vsub.f32 %v2022, %v2453
        %v2491 = vsub.f32 %v2023, %v2457
        %v2492 = vsub.f32 %v2024, %v2464
        %v2493 = vsub.f32 %v2025, %v2468
        %v2494 = vsub.f32 %v2026, %v2475
        %v2495 = vsub.f32 %v2027, %v2479
        %v2496 = vmul.f32 %v2480, 1.442695
        %v2497 = vpow.pop %v2496
        %v2498 = vmul.f32 %v2481, 1.442695
        %v2499 = vpow.pop %v2498
        %v2500 = vmul.f32 %v2482, 1.442695
        %v2501 = vpow.pop %v2500
        %v2502 = vmul.f32 %v2483, 1.442695
        %v2503 = vpow.pop %v2502
        %v2504 = vmul.f32 %v2484, 1.442695
        %v2505 = vpow.pop %v2504
        %v2506 = vmul.f32 %v2485, 1.442695
        %v2507 = vpow.pop %v2506
        %v2508 = vmul.f32 %v2486, 1.442695
        %v2509 = vpow.pop %v2508
        %v2510 = vmul.f32 %v2487, 1.442695
        %v2511 = vpow.pop %v2510
        %v2512 = vmul.f32 %v2488, 1.442695
        %v2513 = vpow.pop %v2512
        %v2514 = vmul.f32 %v2489, 1.442695
        %v2515 = vpow.pop %v2514
        %v2516 = vmul.f32 %v2490, 1.442695
        %v2517 = vpow.pop %v2516
        %v2518 = vmul.f32 %v2491, 1.442695
        %v2519 = vpow.pop %v2518
        %v2520 = vmul.f32 %v2492, 1.442695
        %v2521 = vpow.pop %v2520
        %v2522 = vmul.f32 %v2493, 1.442695
        %v2523 = vpow.pop %v2522
        %v2524 = vmul.f32 %v2494, 1.442695
        %v2525 = vpow.pop %v2524
        %v2526 = vmul.f32 %v2495, 1.442695
        %v2527 = vpow.pop %v2526
        %v2528 = vlaneseq
        %v2529 = vshrl.u32 %v2528, 7
        %v2530 = vsub.s32 0, %v2529
        %v2531 = vrot.slane %v2358, %v2530
        %2533 = vbcast.lane.b32.xlu0 %v2531, 256
        %v2534 = vpop.permute.xlu0 %2533
        %v2535 = vlaneseq
        %v2536 = vshrl.u32 %v2535, 7
        %v2537 = vsub.s32 1, %v2536
        %v2538 = vrot.slane %v2358, %v2537
        %2540 = vbcast.lane.b32.xlu0 %v2538, 256
        %v2541 = vpop.permute.xlu0 %2540
        %v2542 = vlaneseq
        %v2543 = vshrl.u32 %v2542, 7
        %v2544 = vsub.s32 2, %v2543
        %v2545 = vrot.slane %v2358, %v2544
        %2547 = vbcast.lane.b32.xlu0 %v2545, 256
        %v2548 = vpop.permute.xlu0 %2547
        %v2549 = vlaneseq
        %v2550 = vshrl.u32 %v2549, 7
        %v2551 = vsub.s32 3, %v2550
        %v2552 = vrot.slane %v2358, %v2551
        %2554 = vbcast.lane.b32.xlu0 %v2552, 256
        %v2555 = vpop.permute.xlu0 %2554
        %v2556 = vlaneseq
        %v2557 = vshrl.u32 %v2556, 7
        %v2558 = vsub.s32 4, %v2557
        %v2559 = vrot.slane %v2358, %v2558
        %2561 = vbcast.lane.b32.xlu0 %v2559, 256
        %v2562 = vpop.permute.xlu0 %2561
        %v2563 = vlaneseq
        %v2564 = vshrl.u32 %v2563, 7
        %v2565 = vsub.s32 5, %v2564
        %v2566 = vrot.slane %v2358, %v2565
        %2568 = vbcast.lane.b32.xlu0 %v2566, 256
        %v2569 = vpop.permute.xlu0 %2568
        %v2570 = vlaneseq
        %v2571 = vshrl.u32 %v2570, 7
        %v2572 = vsub.s32 6, %v2571
        %v2573 = vrot.slane %v2358, %v2572
        %2575 = vbcast.lane.b32.xlu0 %v2573, 256
        %v2576 = vpop.permute.xlu0 %2575
        %v2577 = vlaneseq
        %v2578 = vshrl.u32 %v2577, 7
        %v2579 = vsub.s32 7, %v2578
        %v2580 = vrot.slane %v2358, %v2579
        %2582 = vbcast.lane.b32.xlu0 %v2580, 256
        %v2583 = vpop.permute.xlu0 %2582
        %v2584 = vlaneseq
        %v2585 = vshrl.u32 %v2584, 7
        %v2586 = vsub.s32 0, %v2585
        %v2587 = vrot.slane %v2359, %v2586
        %2589 = vbcast.lane.b32.xlu0 %v2587, 256
        %v2590 = vpop.permute.xlu0 %2589
        %v2591 = vlaneseq
        %v2592 = vshrl.u32 %v2591, 7
        %v2593 = vsub.s32 1, %v2592
        %v2594 = vrot.slane %v2359, %v2593
        %2596 = vbcast.lane.b32.xlu0 %v2594, 256
        %v2597 = vpop.permute.xlu0 %2596
        %v2598 = vlaneseq
        %v2599 = vshrl.u32 %v2598, 7
        %v2600 = vsub.s32 2, %v2599
        %v2601 = vrot.slane %v2359, %v2600
        %2603 = vbcast.lane.b32.xlu0 %v2601, 256
        %v2604 = vpop.permute.xlu0 %2603
        %v2605 = vlaneseq
        %v2606 = vshrl.u32 %v2605, 7
        %v2607 = vsub.s32 3, %v2606
        %v2608 = vrot.slane %v2359, %v2607
        %2610 = vbcast.lane.b32.xlu0 %v2608, 256
        %v2611 = vpop.permute.xlu0 %2610
        %v2612 = vlaneseq
        %v2613 = vshrl.u32 %v2612, 7
        %v2614 = vsub.s32 4, %v2613
        %v2615 = vrot.slane %v2359, %v2614
        %2617 = vbcast.lane.b32.xlu0 %v2615, 256
        %v2618 = vpop.permute.xlu0 %2617
        %v2619 = vlaneseq
        %v2620 = vshrl.u32 %v2619, 7
        %v2621 = vsub.s32 5, %v2620
        %v2622 = vrot.slane %v2359, %v2621
        %2624 = vbcast.lane.b32.xlu0 %v2622, 256
        %v2625 = vpop.permute.xlu0 %2624
        %v2626 = vlaneseq
        %v2627 = vshrl.u32 %v2626, 7
        %v2628 = vsub.s32 6, %v2627
        %v2629 = vrot.slane %v2359, %v2628
        %2631 = vbcast.lane.b32.xlu0 %v2629, 256
        %v2632 = vpop.permute.xlu0 %2631
        %v2633 = vlaneseq
        %v2634 = vshrl.u32 %v2633, 7
        %v2635 = vsub.s32 7, %v2634
        %v2636 = vrot.slane %v2359, %v2635
        %2638 = vbcast.lane.b32.xlu0 %v2636, 256
        %v2639 = vpop.permute.xlu0 %2638
        %v2640 = vsub.f32 %v1235, %v2534
        %v2641 = vsub.f32 %v1286, %v2541
        %v2642 = vsub.f32 %v1337, %v2548
        %v2643 = vsub.f32 %v1388, %v2555
        %v2644 = vsub.f32 %v1439, %v2562
        %v2645 = vsub.f32 %v1490, %v2569
        %v2646 = vsub.f32 %v1541, %v2576
        %v2647 = vsub.f32 %v1592, %v2583
        %v2648 = vsub.f32 %v1643, %v2590
        %v2649 = vsub.f32 %v1694, %v2597
        %v2650 = vsub.f32 %v1745, %v2604
        %v2651 = vsub.f32 %v1796, %v2611
        %v2652 = vsub.f32 %v1847, %v2618
        %v2653 = vsub.f32 %v1898, %v2625
        %v2654 = vsub.f32 %v1949, %v2632
        %v2655 = vsub.f32 %v2000, %v2639
        %v2656 = vmul.f32 %v2640, 1.442695
        %v2657 = vpow.pop %v2656
        %v2658 = vmul.f32 %v2641, 1.442695
        %v2659 = vpow.pop %v2658
        %v2660 = vmul.f32 %v2642, 1.442695
        %v2661 = vpow.pop %v2660
        %v2662 = vmul.f32 %v2643, 1.442695
        %v2663 = vpow.pop %v2662
        %v2664 = vmul.f32 %v2644, 1.442695
        %v2665 = vpow.pop %v2664
        %v2666 = vmul.f32 %v2645, 1.442695
        %v2667 = vpow.pop %v2666
        %v2668 = vmul.f32 %v2646, 1.442695
        %v2669 = vpow.pop %v2668
        %v2670 = vmul.f32 %v2647, 1.442695
        %v2671 = vpow.pop %v2670
        %v2672 = vmul.f32 %v2648, 1.442695
        %v2673 = vpow.pop %v2672
        %v2674 = vmul.f32 %v2649, 1.442695
        %v2675 = vpow.pop %v2674
        %v2676 = vmul.f32 %v2650, 1.442695
        %v2677 = vpow.pop %v2676
        %v2678 = vmul.f32 %v2651, 1.442695
        %v2679 = vpow.pop %v2678
        %v2680 = vmul.f32 %v2652, 1.442695
        %v2681 = vpow.pop %v2680
        %v2682 = vmul.f32 %v2653, 1.442695
        %v2683 = vpow.pop %v2682
        %v2684 = vmul.f32 %v2654, 1.442695
        %v2685 = vpow.pop %v2684
        %v2686 = vmul.f32 %v2655, 1.442695
        %v2687 = vpow.pop %v2686
        %v2688 = vsel %vm2028, %v2497, 0.0
        %2689 = vadd.xlane.f32.xlu0 %v2688
        %v2690 = vpop.xlane.xlu0 %2689
        %v2691 = vsel %vm2028, %v2499, 0.0
        %2692 = vadd.xlane.f32.xlu0 %v2691
        %v2693 = vpop.xlane.xlu0 %2692
        %v2694 = vsel %vm2028, %v2501, 0.0
        %2695 = vadd.xlane.f32.xlu0 %v2694
        %v2696 = vpop.xlane.xlu0 %2695
        %v2697 = vsel %vm2028, %v2503, 0.0
        %2698 = vadd.xlane.f32.xlu0 %v2697
        %v2699 = vpop.xlane.xlu0 %2698
        %v2700 = vsel %vm2028, %v2505, 0.0
        %2701 = vadd.xlane.f32.xlu0 %v2700
        %v2702 = vpop.xlane.xlu0 %2701
        %v2703 = vsel %vm2028, %v2507, 0.0
        %2704 = vadd.xlane.f32.xlu0 %v2703
        %v2705 = vpop.xlane.xlu0 %2704
        %v2706 = vsel %vm2028, %v2509, 0.0
        %2707 = vadd.xlane.f32.xlu0 %v2706
        %v2708 = vpop.xlane.xlu0 %2707
        %v2709 = vsel %vm2028, %v2511, 0.0
        %2710 = vadd.xlane.f32.xlu0 %v2709
        %v2711 = vpop.xlane.xlu0 %2710
        %v2712 = vsel %vm2028, %v2513, 0.0
        %2713 = vadd.xlane.f32.xlu0 %v2712
        %v2714 = vpop.xlane.xlu0 %2713
        %v2715 = vsel %vm2028, %v2515, 0.0
        %2716 = vadd.xlane.f32.xlu0 %v2715
        %v2717 = vpop.xlane.xlu0 %2716
        %v2718 = vsel %vm2028, %v2517, 0.0
        %2719 = vadd.xlane.f32.xlu0 %v2718
        %v2720 = vpop.xlane.xlu0 %2719
        %v2721 = vsel %vm2028, %v2519, 0.0
        %2722 = vadd.xlane.f32.xlu0 %v2721
        %v2723 = vpop.xlane.xlu0 %2722
        %v2724 = vsel %vm2028, %v2521, 0.0
        %2725 = vadd.xlane.f32.xlu0 %v2724
        %v2726 = vpop.xlane.xlu0 %2725
        %v2727 = vsel %vm2028, %v2523, 0.0
        %2728 = vadd.xlane.f32.xlu0 %v2727
        %v2729 = vpop.xlane.xlu0 %2728
        %v2730 = vsel %vm2028, %v2525, 0.0
        %2731 = vadd.xlane.f32.xlu0 %v2730
        %v2732 = vpop.xlane.xlu0 %2731
        %v2733 = vsel %vm2028, %v2527, 0.0
        %2734 = vadd.xlane.f32.xlu0 %v2733
        %v2735 = vpop.xlane.xlu0 %2734
        %v2752 = vlaneseq
        %v2753 = vshrl.u32 %v2752, 7
        %v2754 = vsub.s32 %v2009, %v2753
        %v2755 = vrot.slane %v2690, %v2754
        %v2756 = vlaneseq
        %v2757 = vshrl.u32 %v2756, 7
        %v2758 = vsub.s32 %v2145, %v2757
        %v2759 = vrot.slane %v2693, %v2758
        %v2760 = vsel %vm2150, %v2759, %v2755
        %v2761 = vlaneseq
        %v2762 = vshrl.u32 %v2761, 7
        %v2763 = vsub.s32 %v2009, %v2762
        %v2764 = vrot.slane %v2696, %v2763
        %v2765 = vlaneseq
        %v2766 = vshrl.u32 %v2765, 7
        %v2767 = vsub.s32 %v2145, %v2766
        %v2768 = vrot.slane %v2699, %v2767
        %v2769 = vsel %vm2150, %v2768, %v2764
        %v2770 = vlaneseq
        %v2771 = vshrl.u32 %v2770, 7
        %v2772 = vsub.s32 %v2009, %v2771
        %v2773 = vrot.slane %v2702, %v2772
        %v2774 = vlaneseq
        %v2775 = vshrl.u32 %v2774, 7
        %v2776 = vsub.s32 %v2145, %v2775
        %v2777 = vrot.slane %v2705, %v2776
        %v2778 = vsel %vm2150, %v2777, %v2773
        %v2779 = vlaneseq
        %v2780 = vshrl.u32 %v2779, 7
        %v2781 = vsub.s32 %v2009, %v2780
        %v2782 = vrot.slane %v2708, %v2781
        %v2783 = vlaneseq
        %v2784 = vshrl.u32 %v2783, 7
        %v2785 = vsub.s32 %v2145, %v2784
        %v2786 = vrot.slane %v2711, %v2785
        %v2787 = vsel %vm2150, %v2786, %v2782
        %v2788 = vlaneseq
        %v2789 = vshrl.u32 %v2788, 7
        %v2790 = vsub.s32 %v2009, %v2789
        %v2791 = vrot.slane %v2714, %v2790
        %v2792 = vlaneseq
        %v2793 = vshrl.u32 %v2792, 7
        %v2794 = vsub.s32 %v2145, %v2793
        %v2795 = vrot.slane %v2717, %v2794
        %v2796 = vsel %vm2150, %v2795, %v2791
        %v2797 = vlaneseq
        %v2798 = vshrl.u32 %v2797, 7
        %v2799 = vsub.s32 %v2009, %v2798
        %v2800 = vrot.slane %v2720, %v2799
        %v2801 = vlaneseq
        %v2802 = vshrl.u32 %v2801, 7
        %v2803 = vsub.s32 %v2145, %v2802
        %v2804 = vrot.slane %v2723, %v2803
        %v2805 = vsel %vm2150, %v2804, %v2800
        %v2806 = vlaneseq
        %v2807 = vshrl.u32 %v2806, 7
        %v2808 = vsub.s32 %v2009, %v2807
        %v2809 = vrot.slane %v2726, %v2808
        %v2810 = vlaneseq
        %v2811 = vshrl.u32 %v2810, 7
        %v2812 = vsub.s32 %v2145, %v2811
        %v2813 = vrot.slane %v2729, %v2812
        %v2814 = vsel %vm2150, %v2813, %v2809
        %v2815 = vlaneseq
        %v2816 = vshrl.u32 %v2815, 7
        %v2817 = vsub.s32 %v2009, %v2816
        %v2818 = vrot.slane %v2732, %v2817
        %v2819 = vlaneseq
        %v2820 = vshrl.u32 %v2819, 7
        %v2821 = vsub.s32 %v2145, %v2820
        %v2822 = vrot.slane %v2735, %v2821
        %v2823 = vsel %vm2150, %v2822, %v2818
        %v2824 = vsel %vm2215, %v2769, %v2760
        %v2825 = vsel %vm2217, %v2778, %v2824
        %v2826 = vsel %vm2219, %v2787, %v2825
        %v2827 = vsel %vm2221, %v2796, %v2826
        %v2828 = vsel %vm2223, %v2805, %v2827
        %v2829 = vsel %vm2225, %v2814, %v2828
        %v2830 = vsel %vm2227, %v2823, %v2829
        %2832 = vxpose.xlu0.b32.start [1/16] %v2830, 128
        %2833 = vxpose.xlu0.b32.cont [2/16] 0.0, 128
        %2834 = vxpose.xlu0.b32.cont [3/16] 0.0, 128
        %2835 = vxpose.xlu0.b32.cont [4/16] 0.0, 128
        %2836 = vxpose.xlu0.b32.cont [5/16] 0.0, 128
        %2837 = vxpose.xlu0.b32.cont [6/16] 0.0, 128
        %2838 = vxpose.xlu0.b32.cont [7/16] 0.0, 128
        %2839 = vxpose.xlu0.b32.cont [8/16] 0.0, 128
        %2840 = vxpose.xlu0.b32.cont [9/16] 0.0, 128
        %2841 = vxpose.xlu0.b32.cont [10/16] 0.0, 128
        %2842 = vxpose.xlu0.b32.cont [11/16] 0.0, 128
        %2843 = vxpose.xlu0.b32.cont [12/16] 0.0, 128
        %2844 = vxpose.xlu0.b32.cont [13/16] 0.0, 128
        %2845 = vxpose.xlu0.b32.cont [14/16] 0.0, 128
        %2846 = vxpose.xlu0.b32.cont [15/16] 0.0, 128
        %2847 = vxpose.xlu0.b32.end [16/16] 0.0, 128
        %v2848 = vpop.trf.xlu0
        %v2849 = vpop.trf.xlu0
        %v2850 = vpop.trf.xlu0
        %v2851 = vpop.trf.xlu0
        %v2852 = vpop.trf.xlu0
        %v2853 = vpop.trf.xlu0
        %v2854 = vpop.trf.xlu0
        %v2855 = vpop.trf.xlu0
        %v2856 = vpop.trf.xlu0
        %v2857 = vpop.trf.xlu0
        %v2858 = vpop.trf.xlu0
        %v2859 = vpop.trf.xlu0
        %v2860 = vpop.trf.xlu0
        %v2861 = vpop.trf.xlu0
        %v2862 = vpop.trf.xlu0
        %v2863 = vpop.trf.xlu0
        %v2864 = vsel %vm761, %v2657, 0.0
        %2865 = vadd.xlane.f32.xlu0 %v2864
        %v2866 = vpop.xlane.xlu0 %2865
        %v2867 = vsel %vm761, %v2659, 0.0
        %2868 = vadd.xlane.f32.xlu0 %v2867
        %v2869 = vpop.xlane.xlu0 %2868
        %v2870 = vsel %vm761, %v2661, 0.0
        %2871 = vadd.xlane.f32.xlu0 %v2870
        %v2872 = vpop.xlane.xlu0 %2871
        %v2873 = vsel %vm761, %v2663, 0.0
        %2874 = vadd.xlane.f32.xlu0 %v2873
        %v2875 = vpop.xlane.xlu0 %2874
        %v2876 = vsel %vm761, %v2665, 0.0
        %2877 = vadd.xlane.f32.xlu0 %v2876
        %v2878 = vpop.xlane.xlu0 %2877
        %v2879 = vsel %vm761, %v2667, 0.0
        %2880 = vadd.xlane.f32.xlu0 %v2879
        %v2881 = vpop.xlane.xlu0 %2880
        %v2882 = vsel %vm761, %v2669, 0.0
        %2883 = vadd.xlane.f32.xlu0 %v2882
        %v2884 = vpop.xlane.xlu0 %2883
        %v2885 = vsel %vm761, %v2671, 0.0
        %2886 = vadd.xlane.f32.xlu0 %v2885
        %v2887 = vpop.xlane.xlu0 %2886
        %v2888 = vsel %vm761, %v2673, 0.0
        %2889 = vadd.xlane.f32.xlu0 %v2888
        %v2890 = vpop.xlane.xlu0 %2889
        %v2891 = vsel %vm761, %v2675, 0.0
        %2892 = vadd.xlane.f32.xlu0 %v2891
        %v2893 = vpop.xlane.xlu0 %2892
        %v2894 = vsel %vm761, %v2677, 0.0
        %2895 = vadd.xlane.f32.xlu0 %v2894
        %v2896 = vpop.xlane.xlu0 %2895
        %v2897 = vsel %vm761, %v2679, 0.0
        %2898 = vadd.xlane.f32.xlu0 %v2897
        %v2899 = vpop.xlane.xlu0 %2898
        %v2900 = vsel %vm761, %v2681, 0.0
        %2901 = vadd.xlane.f32.xlu0 %v2900
        %v2902 = vpop.xlane.xlu0 %2901
        %v2903 = vsel %vm761, %v2683, 0.0
        %2904 = vadd.xlane.f32.xlu0 %v2903
        %v2905 = vpop.xlane.xlu0 %2904
        %v2906 = vsel %vm761, %v2685, 0.0
        %2907 = vadd.xlane.f32.xlu0 %v2906
        %v2908 = vpop.xlane.xlu0 %2907
        %v2909 = vsel %vm761, %v2687, 0.0
        %2910 = vadd.xlane.f32.xlu0 %v2909
        %v2911 = vpop.xlane.xlu0 %2910
        %v2928 = vlaneseq
        %v2929 = vshrl.u32 %v2928, 7
        %v2930 = vsub.s32 %v2009, %v2929
        %v2931 = vrot.slane %v2866, %v2930
        %v2932 = vlaneseq
        %v2933 = vshrl.u32 %v2932, 7
        %v2934 = vsub.s32 %v2009, %v2933
        %v2935 = vrot.slane %v2869, %v2934
        %v2936 = vlaneseq
        %v2937 = vshrl.u32 %v2936, 7
        %v2938 = vsub.s32 %v2009, %v2937
        %v2939 = vrot.slane %v2872, %v2938
        %v2940 = vlaneseq
        %v2941 = vshrl.u32 %v2940, 7
        %v2942 = vsub.s32 %v2009, %v2941
        %v2943 = vrot.slane %v2875, %v2942
        %v2944 = vlaneseq
        %v2945 = vshrl.u32 %v2944, 7
        %v2946 = vsub.s32 %v2009, %v2945
        %v2947 = vrot.slane %v2878, %v2946
        %v2948 = vlaneseq
        %v2949 = vshrl.u32 %v2948, 7
        %v2950 = vsub.s32 %v2009, %v2949
        %v2951 = vrot.slane %v2881, %v2950
        %v2952 = vlaneseq
        %v2953 = vshrl.u32 %v2952, 7
        %v2954 = vsub.s32 %v2009, %v2953
        %v2955 = vrot.slane %v2884, %v2954
        %v2956 = vlaneseq
        %v2957 = vshrl.u32 %v2956, 7
        %v2958 = vsub.s32 %v2009, %v2957
        %v2959 = vrot.slane %v2887, %v2958
        %v2960 = vlaneseq
        %v2961 = vshrl.u32 %v2960, 7
        %v2962 = vsub.s32 %v2009, %v2961
        %v2963 = vrot.slane %v2890, %v2962
        %v2964 = vlaneseq
        %v2965 = vshrl.u32 %v2964, 7
        %v2966 = vsub.s32 %v2009, %v2965
        %v2967 = vrot.slane %v2893, %v2966
        %v2968 = vlaneseq
        %v2969 = vshrl.u32 %v2968, 7
        %v2970 = vsub.s32 %v2009, %v2969
        %v2971 = vrot.slane %v2896, %v2970
        %v2972 = vlaneseq
        %v2973 = vshrl.u32 %v2972, 7
        %v2974 = vsub.s32 %v2009, %v2973
        %v2975 = vrot.slane %v2899, %v2974
        %v2976 = vlaneseq
        %v2977 = vshrl.u32 %v2976, 7
        %v2978 = vsub.s32 %v2009, %v2977
        %v2979 = vrot.slane %v2902, %v2978
        %v2980 = vlaneseq
        %v2981 = vshrl.u32 %v2980, 7
        %v2982 = vsub.s32 %v2009, %v2981
        %v2983 = vrot.slane %v2905, %v2982
        %v2984 = vlaneseq
        %v2985 = vshrl.u32 %v2984, 7
        %v2986 = vsub.s32 %v2009, %v2985
        %v2987 = vrot.slane %v2908, %v2986
        %v2988 = vlaneseq
        %v2989 = vshrl.u32 %v2988, 7
        %v2990 = vsub.s32 %v2009, %v2989
        %v2991 = vrot.slane %v2911, %v2990
        %v2992 = vsel %vm2215, %v2935, %v2931
        %v2993 = vsel %vm2217, %v2939, %v2992
        %v2994 = vsel %vm2219, %v2943, %v2993
        %v2995 = vsel %vm2221, %v2947, %v2994
        %v2996 = vsel %vm2223, %v2951, %v2995
        %v2997 = vsel %vm2225, %v2955, %v2996
        %v2998 = vsel %vm2227, %v2959, %v2997
        %v2999 = vsel %vm2215, %v2967, %v2963
        %v3000 = vsel %vm2217, %v2971, %v2999
        %v3001 = vsel %vm2219, %v2975, %v3000
        %v3002 = vsel %vm2221, %v2979, %v3001
        %v3003 = vsel %vm2223, %v2983, %v3002
        %v3004 = vsel %vm2225, %v2987, %v3003
        %v3005 = vsel %vm2227, %v2991, %v3004
        %v3008 = vadd.f32 %v2848, %v2998
        %v3009 = vadd.f32 %v2849, %v3005
        %v3010 = vrcp.pop %v3008
        %v3011 = vrcp.pop %v3009
        %3012 = vxpose.xlu0.b32.start [1/16] %v3010, 128
        %3013 = vxpose.xlu0.b32.cont [2/16] %v3011, 128
        %3014 = vxpose.xlu0.b32.cont [3/16] 0.0, 128
        %3015 = vxpose.xlu0.b32.cont [4/16] 0.0, 128
        %3016 = vxpose.xlu0.b32.cont [5/16] 0.0, 128
        %3017 = vxpose.xlu0.b32.cont [6/16] 0.0, 128
        %3018 = vxpose.xlu0.b32.cont [7/16] 0.0, 128
        %3019 = vxpose.xlu0.b32.cont [8/16] 0.0, 128
        %3020 = vxpose.xlu0.b32.cont [9/16] 0.0, 128
        %3021 = vxpose.xlu0.b32.cont [10/16] 0.0, 128
        %3022 = vxpose.xlu0.b32.cont [11/16] 0.0, 128
        %3023 = vxpose.xlu0.b32.cont [12/16] 0.0, 128
        %3024 = vxpose.xlu0.b32.cont [13/16] 0.0, 128
        %3025 = vxpose.xlu0.b32.cont [14/16] 0.0, 128
        %3026 = vxpose.xlu0.b32.cont [15/16] 0.0, 128
        %3027 = vxpose.xlu0.b32.end [16/16] 0.0, 128
        %v3028 = vpop.trf.xlu0
        %v3029 = vpop.trf.xlu0
        %v3030 = vpop.trf.xlu0
        %v3031 = vpop.trf.xlu0
        %v3032 = vpop.trf.xlu0
        %v3033 = vpop.trf.xlu0
        %v3034 = vpop.trf.xlu0
        %v3035 = vpop.trf.xlu0
        %v3036 = vpop.trf.xlu0
        %v3037 = vpop.trf.xlu0
        %v3038 = vpop.trf.xlu0
        %v3039 = vpop.trf.xlu0
        %v3040 = vpop.trf.xlu0
        %v3041 = vpop.trf.xlu0
        %v3042 = vpop.trf.xlu0
        %v3043 = vpop.trf.xlu0
        %v3044 = vlaneseq
        %v3045 = vshrl.u32 %v3044, 7
        %v3046 = vsub.s32 0, %v3045
        %v3047 = vrot.slane %v3028, %v3046
        %3049 = vbcast.lane.b32.xlu0 %v3047, 256
        %v3050 = vpop.permute.xlu0 %3049
        %s3052 = sor.u32 256, 8
        %3053 = vbcast.lane.b32.xlu0 %v3047, %s3052
        %v3054 = vpop.permute.xlu0 %3053
        %v3055 = vlaneseq
        %v3056 = vshrl.u32 %v3055, 7
        %v3057 = vsub.s32 1, %v3056
        %v3058 = vrot.slane %v3028, %v3057
        %3060 = vbcast.lane.b32.xlu0 %v3058, 256
        %v3061 = vpop.permute.xlu0 %3060
        %s3063 = sor.u32 256, 8
        %3064 = vbcast.lane.b32.xlu0 %v3058, %s3063
        %v3065 = vpop.permute.xlu0 %3064
        %v3066 = vlaneseq
        %v3067 = vshrl.u32 %v3066, 7
        %v3068 = vsub.s32 2, %v3067
        %v3069 = vrot.slane %v3028, %v3068
        %3071 = vbcast.lane.b32.xlu0 %v3069, 256
        %v3072 = vpop.permute.xlu0 %3071
        %s3074 = sor.u32 256, 8
        %3075 = vbcast.lane.b32.xlu0 %v3069, %s3074
        %v3076 = vpop.permute.xlu0 %3075
        %v3077 = vlaneseq
        %v3078 = vshrl.u32 %v3077, 7
        %v3079 = vsub.s32 3, %v3078
        %v3080 = vrot.slane %v3028, %v3079
        %3082 = vbcast.lane.b32.xlu0 %v3080, 256
        %v3083 = vpop.permute.xlu0 %3082
        %s3085 = sor.u32 256, 8
        %3086 = vbcast.lane.b32.xlu0 %v3080, %s3085
        %v3087 = vpop.permute.xlu0 %3086
        %v3088 = vlaneseq
        %v3089 = vshrl.u32 %v3088, 7
        %v3090 = vsub.s32 4, %v3089
        %v3091 = vrot.slane %v3028, %v3090
        %3093 = vbcast.lane.b32.xlu0 %v3091, 256
        %v3094 = vpop.permute.xlu0 %3093
        %s3096 = sor.u32 256, 8
        %3097 = vbcast.lane.b32.xlu0 %v3091, %s3096
        %v3098 = vpop.permute.xlu0 %3097
        %v3099 = vlaneseq
        %v3100 = vshrl.u32 %v3099, 7
        %v3101 = vsub.s32 5, %v3100
        %v3102 = vrot.slane %v3028, %v3101
        %3104 = vbcast.lane.b32.xlu0 %v3102, 256
        %v3105 = vpop.permute.xlu0 %3104
        %s3107 = sor.u32 256, 8
        %3108 = vbcast.lane.b32.xlu0 %v3102, %s3107
        %v3109 = vpop.permute.xlu0 %3108
        %v3110 = vlaneseq
        %v3111 = vshrl.u32 %v3110, 7
        %v3112 = vsub.s32 6, %v3111
        %v3113 = vrot.slane %v3028, %v3112
        %3115 = vbcast.lane.b32.xlu0 %v3113, 256
        %v3116 = vpop.permute.xlu0 %3115
        %s3118 = sor.u32 256, 8
        %3119 = vbcast.lane.b32.xlu0 %v3113, %s3118
        %v3120 = vpop.permute.xlu0 %3119
        %v3121 = vlaneseq
        %v3122 = vshrl.u32 %v3121, 7
        %v3123 = vsub.s32 7, %v3122
        %v3124 = vrot.slane %v3028, %v3123
        %3126 = vbcast.lane.b32.xlu0 %v3124, 256
        %v3127 = vpop.permute.xlu0 %3126
        %s3129 = sor.u32 256, 8
        %3130 = vbcast.lane.b32.xlu0 %v3124, %s3129
        %v3131 = vpop.permute.xlu0 %3130
        %v3132 = vmul.f32 %v2497, %v3050
        %v3133 = vmul.f32 %v2499, %v3054
        %v3134 = vmul.f32 %v2501, %v3061
        %v3135 = vmul.f32 %v2503, %v3065
        %v3136 = vmul.f32 %v2505, %v3072
        %v3137 = vmul.f32 %v2507, %v3076
        %v3138 = vmul.f32 %v2509, %v3083
        %v3139 = vmul.f32 %v2511, %v3087
        %v3140 = vmul.f32 %v2513, %v3094
        %v3141 = vmul.f32 %v2515, %v3098
        %v3142 = vmul.f32 %v2517, %v3105
        %v3143 = vmul.f32 %v2519, %v3109
        %v3144 = vmul.f32 %v2521, %v3116
        %v3145 = vmul.f32 %v2523, %v3120
        %v3146 = vmul.f32 %v2525, %v3127
        %v3147 = vmul.f32 %v2527, %v3131
        %v3148 = vpack.c.bf16 %v3133, %v3132
        %v3149 = vpack.c.bf16 %v3135, %v3134
        %v3150 = vpack.c.bf16 %v3137, %v3136
        %v3151 = vpack.c.bf16 %v3139, %v3138
        %v3152 = vpack.c.bf16 %v3141, %v3140
        %v3153 = vpack.c.bf16 %v3143, %v3142
        %v3154 = vpack.c.bf16 %v3145, %v3144
        %v3155 = vpack.c.bf16 %v3147, %v3146
        %v3156 = vlaneseq
        %v3157 = vshrl.u32 %v3156, 7
        %v3158 = vsub.s32 0, %v3157
        %v3159 = vrot.slane %v3010, %v3158
        %3161 = vbcast.lane.b32.xlu0 %v3159, 256
        %v3162 = vpop.permute.xlu0 %3161
        %v3163 = vlaneseq
        %v3164 = vshrl.u32 %v3163, 7
        %v3165 = vsub.s32 1, %v3164
        %v3166 = vrot.slane %v3010, %v3165
        %3168 = vbcast.lane.b32.xlu0 %v3166, 256
        %v3169 = vpop.permute.xlu0 %3168
        %v3170 = vlaneseq
        %v3171 = vshrl.u32 %v3170, 7
        %v3172 = vsub.s32 2, %v3171
        %v3173 = vrot.slane %v3010, %v3172
        %3175 = vbcast.lane.b32.xlu0 %v3173, 256
        %v3176 = vpop.permute.xlu0 %3175
        %v3177 = vlaneseq
        %v3178 = vshrl.u32 %v3177, 7
        %v3179 = vsub.s32 3, %v3178
        %v3180 = vrot.slane %v3010, %v3179
        %3182 = vbcast.lane.b32.xlu0 %v3180, 256
        %v3183 = vpop.permute.xlu0 %3182
        %v3184 = vlaneseq
        %v3185 = vshrl.u32 %v3184, 7
        %v3186 = vsub.s32 4, %v3185
        %v3187 = vrot.slane %v3010, %v3186
        %3189 = vbcast.lane.b32.xlu0 %v3187, 256
        %v3190 = vpop.permute.xlu0 %3189
        %v3191 = vlaneseq
        %v3192 = vshrl.u32 %v3191, 7
        %v3193 = vsub.s32 5, %v3192
        %v3194 = vrot.slane %v3010, %v3193
        %3196 = vbcast.lane.b32.xlu0 %v3194, 256
        %v3197 = vpop.permute.xlu0 %3196
        %v3198 = vlaneseq
        %v3199 = vshrl.u32 %v3198, 7
        %v3200 = vsub.s32 6, %v3199
        %v3201 = vrot.slane %v3010, %v3200
        %3203 = vbcast.lane.b32.xlu0 %v3201, 256
        %v3204 = vpop.permute.xlu0 %3203
        %v3205 = vlaneseq
        %v3206 = vshrl.u32 %v3205, 7
        %v3207 = vsub.s32 7, %v3206
        %v3208 = vrot.slane %v3010, %v3207
        %3210 = vbcast.lane.b32.xlu0 %v3208, 256
        %v3211 = vpop.permute.xlu0 %3210
        %v3212 = vlaneseq
        %v3213 = vshrl.u32 %v3212, 7
        %v3214 = vsub.s32 0, %v3213
        %v3215 = vrot.slane %v3011, %v3214
        %3217 = vbcast.lane.b32.xlu0 %v3215, 256
        %v3218 = vpop.permute.xlu0 %3217
        %v3219 = vlaneseq
        %v3220 = vshrl.u32 %v3219, 7
        %v3221 = vsub.s32 1, %v3220
        %v3222 = vrot.slane %v3011, %v3221
        %3224 = vbcast.lane.b32.xlu0 %v3222, 256
        %v3225 = vpop.permute.xlu0 %3224
        %v3226 = vlaneseq
        %v3227 = vshrl.u32 %v3226, 7
        %v3228 = vsub.s32 2, %v3227
        %v3229 = vrot.slane %v3011, %v3228
        %3231 = vbcast.lane.b32.xlu0 %v3229, 256
        %v3232 = vpop.permute.xlu0 %3231
        %v3233 = vlaneseq
        %v3234 = vshrl.u32 %v3233, 7
        %v3235 = vsub.s32 3, %v3234
        %v3236 = vrot.slane %v3011, %v3235
        %3238 = vbcast.lane.b32.xlu0 %v3236, 256
        %v3239 = vpop.permute.xlu0 %3238
        %v3240 = vlaneseq
        %v3241 = vshrl.u32 %v3240, 7
        %v3242 = vsub.s32 4, %v3241
        %v3243 = vrot.slane %v3011, %v3242
        %3245 = vbcast.lane.b32.xlu0 %v3243, 256
        %v3246 = vpop.permute.xlu0 %3245
        %v3247 = vlaneseq
        %v3248 = vshrl.u32 %v3247, 7
        %v3249 = vsub.s32 5, %v3248
        %v3250 = vrot.slane %v3011, %v3249
        %3252 = vbcast.lane.b32.xlu0 %v3250, 256
        %v3253 = vpop.permute.xlu0 %3252
        %v3254 = vlaneseq
        %v3255 = vshrl.u32 %v3254, 7
        %v3256 = vsub.s32 6, %v3255
        %v3257 = vrot.slane %v3011, %v3256
        %3259 = vbcast.lane.b32.xlu0 %v3257, 256
        %v3260 = vpop.permute.xlu0 %3259
        %v3261 = vlaneseq
        %v3262 = vshrl.u32 %v3261, 7
        %v3263 = vsub.s32 7, %v3262
        %v3264 = vrot.slane %v3011, %v3263
        %3266 = vbcast.lane.b32.xlu0 %v3264, 256
        %v3267 = vpop.permute.xlu0 %3266
        %v3268 = vmul.f32 %v2657, %v3162
        %v3269 = vmul.f32 %v2659, %v3169
        %v3270 = vmul.f32 %v2661, %v3176
        %v3271 = vmul.f32 %v2663, %v3183
        %v3272 = vmul.f32 %v2665, %v3190
        %v3273 = vmul.f32 %v2667, %v3197
        %v3274 = vmul.f32 %v2669, %v3204
        %v3275 = vmul.f32 %v2671, %v3211
        %v3276 = vmul.f32 %v2673, %v3218
        %v3277 = vmul.f32 %v2675, %v3225
        %v3278 = vmul.f32 %v2677, %v3232
        %v3279 = vmul.f32 %v2679, %v3239
        %v3280 = vmul.f32 %v2681, %v3246
        %v3281 = vmul.f32 %v2683, %v3253
        %v3282 = vmul.f32 %v2685, %v3260
        %v3283 = vmul.f32 %v2687, %v3267
        %v3284 = vpack.c.bf16 %v3268, %v3268
        %v3285 = vpack.c.bf16 %v3269, %v3269
        %v3286 = vpack.c.bf16 %v3270, %v3270
        %v3287 = vpack.c.bf16 %v3271, %v3271
        %v3288 = vpack.c.bf16 %v3272, %v3272
        %v3289 = vpack.c.bf16 %v3273, %v3273
        %v3290 = vpack.c.bf16 %v3274, %v3274
        %v3291 = vpack.c.bf16 %v3275, %v3275
        %v3292 = vpack.c.bf16 %v3276, %v3276
        %v3293 = vpack.c.bf16 %v3277, %v3277
        %v3294 = vpack.c.bf16 %v3278, %v3278
        %v3295 = vpack.c.bf16 %v3279, %v3279
        %v3296 = vpack.c.bf16 %v3280, %v3280
        %v3297 = vpack.c.bf16 %v3281, %v3281
        %v3298 = vpack.c.bf16 %v3282, %v3282
        %v3299 = vpack.c.bf16 %v3283, %v3283
        %v3301 = vsel %vm2028, %v3148, 0
        %3303 = vmatprep.subr.bf16.mxu0 0
        %3304 = vmatpush1.bf16.msra.mxu0 0
        %3305 = vmatprep.subr.bf16.mxu0 0
        %3306 = vmatpush1.bf16.msra.mxu0 0
        %3307 = vmatprep.subr.bf16.mxu0 0
        %3308 = vmatpush1.bf16.msra.mxu0 0
        %3309 = vmatprep.subr.bf16.mxu0 0
        %3310 = vmatpush1.bf16.msra.mxu0 0
        %3311 = vmatprep.subr.bf16.mxu0 0
        %3312 = vmatpush1.bf16.msra.mxu0 0
        %3313 = vmatprep.subr.bf16.mxu0 0
        %3314 = vmatpush1.bf16.msra.mxu0 0
        %3315 = vmatprep.subr.bf16.mxu0 0
        %3316 = vmatpush1.bf16.msra.mxu0 0
        %3317 = vmatprep.subr.bf16.mxu0 0
        %3318 = vmatpush1.bf16.msra.mxu0 %v748
        %3319 = vmatprep.subr.bf16.mxu0 0
        %3320 = vmatpush2.bf16.msra.mxu0 0
        %3321 = vmatprep.subr.bf16.mxu0 0
        %3322 = vmatpush2.bf16.msra.mxu0 0
        %3323 = vmatprep.subr.bf16.mxu0 0
        %3324 = vmatpush2.bf16.msra.mxu0 0
        %3325 = vmatprep.subr.bf16.mxu0 0
        %3326 = vmatpush2.bf16.msra.mxu0 0
        %3327 = vmatprep.subr.bf16.mxu0 0
        %3328 = vmatpush2.bf16.msra.mxu0 0
        %3329 = vmatprep.subr.bf16.mxu0 0
        %3330 = vmatpush2.bf16.msra.mxu0 0
        %3331 = vmatprep.subr.bf16.mxu0 0
        %3332 = vmatpush2.bf16.msra.mxu0 0
        %3333 = vmatprep.subr.bf16.mxu0 0
        %3334 = vmatpush2.bf16.msra.mxu0 0
        %3335 = vmatprep.mubr.bf16.mxu0 0
        %3336 = vmatmul.mubr.bf16.gmra.mxu0 %v3301
        %v3337 = vpop.f32.mrf.mxu0
        %v3338 = vadd.f32 0.0, %v3337
        %v3339 = vpop.f32.mrf.mxu0
        %v3340 = vpop.f32.mrf.mxu0
        %v3341 = vadd.f32 0.0, %v3340
        %v3342 = vpop.f32.mrf.mxu0
        %3343 = vdwg.mxu0
        %v3345 = vsel %vm2028, %v3149, 0
        %3347 = vmatprep.subr.bf16.mxu0 0
        %3348 = vmatpush1.bf16.msra.mxu0 0
        %3349 = vmatprep.subr.bf16.mxu0 0
        %3350 = vmatpush1.bf16.msra.mxu0 0
        %3351 = vmatprep.subr.bf16.mxu0 0
        %3352 = vmatpush1.bf16.msra.mxu0 0
        %3353 = vmatprep.subr.bf16.mxu0 0
        %3354 = vmatpush1.bf16.msra.mxu0 0
        %3355 = vmatprep.subr.bf16.mxu0 0
        %3356 = vmatpush1.bf16.msra.mxu0 0
        %3357 = vmatprep.subr.bf16.mxu0 0
        %3358 = vmatpush1.bf16.msra.mxu0 0
        %3359 = vmatprep.subr.bf16.mxu0 0
        %3360 = vmatpush1.bf16.msra.mxu0 0
        %3361 = vmatprep.subr.bf16.mxu0 0
        %3362 = vmatpush1.bf16.msra.mxu0 %v749
        %3363 = vmatprep.subr.bf16.mxu0 0
        %3364 = vmatpush2.bf16.msra.mxu0 0
        %3365 = vmatprep.subr.bf16.mxu0 0
        %3366 = vmatpush2.bf16.msra.mxu0 0
        %3367 = vmatprep.subr.bf16.mxu0 0
        %3368 = vmatpush2.bf16.msra.mxu0 0
        %3369 = vmatprep.subr.bf16.mxu0 0
        %3370 = vmatpush2.bf16.msra.mxu0 0
        %3371 = vmatprep.subr.bf16.mxu0 0
        %3372 = vmatpush2.bf16.msra.mxu0 0
        %3373 = vmatprep.subr.bf16.mxu0 0
        %3374 = vmatpush2.bf16.msra.mxu0 0
        %3375 = vmatprep.subr.bf16.mxu0 0
        %3376 = vmatpush2.bf16.msra.mxu0 0
        %3377 = vmatprep.subr.bf16.mxu0 0
        %3378 = vmatpush2.bf16.msra.mxu0 0
        %3379 = vmatprep.mubr.bf16.mxu0 0
        %3380 = vmatmul.mubr.bf16.gmra.mxu0 %v3345
        %v3381 = vpop.f32.mrf.mxu0
        %v3382 = vadd.f32 0.0, %v3381
        %v3383 = vpop.f32.mrf.mxu0
        %v3384 = vpop.f32.mrf.mxu0
        %v3385 = vadd.f32 0.0, %v3384
        %v3386 = vpop.f32.mrf.mxu0
        %3387 = vdwg.mxu0
        %v3389 = vsel %vm2028, %v3150, 0
        %3391 = vmatprep.subr.bf16.mxu0 0
        %3392 = vmatpush1.bf16.msra.mxu0 0
        %3393 = vmatprep.subr.bf16.mxu0 0
        %3394 = vmatpush1.bf16.msra.mxu0 0
        %3395 = vmatprep.subr.bf16.mxu0 0
        %3396 = vmatpush1.bf16.msra.mxu0 0
        %3397 = vmatprep.subr.bf16.mxu0 0
        %3398 = vmatpush1.bf16.msra.mxu0 0
        %3399 = vmatprep.subr.bf16.mxu0 0
        %3400 = vmatpush1.bf16.msra.mxu0 0
        %3401 = vmatprep.subr.bf16.mxu0 0
        %3402 = vmatpush1.bf16.msra.mxu0 0
        %3403 = vmatprep.subr.bf16.mxu0 0
        %3404 = vmatpush1.bf16.msra.mxu0 0
        %3405 = vmatprep.subr.bf16.mxu0 0
        %3406 = vmatpush1.bf16.msra.mxu0 %v750
        %3407 = vmatprep.subr.bf16.mxu0 0
        %3408 = vmatpush2.bf16.msra.mxu0 0
        %3409 = vmatprep.subr.bf16.mxu0 0
        %3410 = vmatpush2.bf16.msra.mxu0 0
        %3411 = vmatprep.subr.bf16.mxu0 0
        %3412 = vmatpush2.bf16.msra.mxu0 0
        %3413 = vmatprep.subr.bf16.mxu0 0
        %3414 = vmatpush2.bf16.msra.mxu0 0
        %3415 = vmatprep.subr.bf16.mxu0 0
        %3416 = vmatpush2.bf16.msra.mxu0 0
        %3417 = vmatprep.subr.bf16.mxu0 0
        %3418 = vmatpush2.bf16.msra.mxu0 0
        %3419 = vmatprep.subr.bf16.mxu0 0
        %3420 = vmatpush2.bf16.msra.mxu0 0
        %3421 = vmatprep.subr.bf16.mxu0 0
        %3422 = vmatpush2.bf16.msra.mxu0 0
        %3423 = vmatprep.mubr.bf16.mxu0 0
        %3424 = vmatmul.mubr.bf16.gmra.mxu0 %v3389
        %v3425 = vpop.f32.mrf.mxu0
        %v3426 = vadd.f32 0.0, %v3425
        %v3427 = vpop.f32.mrf.mxu0
        %v3428 = vpop.f32.mrf.mxu0
        %v3429 = vadd.f32 0.0, %v3428
        %v3430 = vpop.f32.mrf.mxu0
        %3431 = vdwg.mxu0
        %v3433 = vsel %vm2028, %v3151, 0
        %3435 = vmatprep.subr.bf16.mxu0 0
        %3436 = vmatpush1.bf16.msra.mxu0 0
        %3437 = vmatprep.subr.bf16.mxu0 0
        %3438 = vmatpush1.bf16.msra.mxu0 0
        %3439 = vmatprep.subr.bf16.mxu0 0
        %3440 = vmatpush1.bf16.msra.mxu0 0
        %3441 = vmatprep.subr.bf16.mxu0 0
        %3442 = vmatpush1.bf16.msra.mxu0 0
        %3443 = vmatprep.subr.bf16.mxu0 0
        %3444 = vmatpush1.bf16.msra.mxu0 0
        %3445 = vmatprep.subr.bf16.mxu0 0
        %3446 = vmatpush1.bf16.msra.mxu0 0
        %3447 = vmatprep.subr.bf16.mxu0 0
        %3448 = vmatpush1.bf16.msra.mxu0 0
        %3449 = vmatprep.subr.bf16.mxu0 0
        %3450 = vmatpush1.bf16.msra.mxu0 %v751
        %3451 = vmatprep.subr.bf16.mxu0 0
        %3452 = vmatpush2.bf16.msra.mxu0 0
        %3453 = vmatprep.subr.bf16.mxu0 0
        %3454 = vmatpush2.bf16.msra.mxu0 0
        %3455 = vmatprep.subr.bf16.mxu0 0
        %3456 = vmatpush2.bf16.msra.mxu0 0
        %3457 = vmatprep.subr.bf16.mxu0 0
        %3458 = vmatpush2.bf16.msra.mxu0 0
        %3459 = vmatprep.subr.bf16.mxu0 0
        %3460 = vmatpush2.bf16.msra.mxu0 0
        %3461 = vmatprep.subr.bf16.mxu0 0
        %3462 = vmatpush2.bf16.msra.mxu0 0
        %3463 = vmatprep.subr.bf16.mxu0 0
        %3464 = vmatpush2.bf16.msra.mxu0 0
        %3465 = vmatprep.subr.bf16.mxu0 0
        %3466 = vmatpush2.bf16.msra.mxu0 0
        %3467 = vmatprep.mubr.bf16.mxu0 0
        %3468 = vmatmul.mubr.bf16.gmra.mxu0 %v3433
        %v3469 = vpop.f32.mrf.mxu0
        %v3470 = vadd.f32 0.0, %v3469
        %v3471 = vpop.f32.mrf.mxu0
        %v3472 = vpop.f32.mrf.mxu0
        %v3473 = vadd.f32 0.0, %v3472
        %v3474 = vpop.f32.mrf.mxu0
        %3475 = vdwg.mxu0
        %v3477 = vsel %vm2028, %v3152, 0
        %3479 = vmatprep.subr.bf16.mxu0 0
        %3480 = vmatpush1.bf16.msra.mxu0 0
        %3481 = vmatprep.subr.bf16.mxu0 0
        %3482 = vmatpush1.bf16.msra.mxu0 0
        %3483 = vmatprep.subr.bf16.mxu0 0
        %3484 = vmatpush1.bf16.msra.mxu0 0
        %3485 = vmatprep.subr.bf16.mxu0 0
        %3486 = vmatpush1.bf16.msra.mxu0 0
        %3487 = vmatprep.subr.bf16.mxu0 0
        %3488 = vmatpush1.bf16.msra.mxu0 0
        %3489 = vmatprep.subr.bf16.mxu0 0
        %3490 = vmatpush1.bf16.msra.mxu0 0
        %3491 = vmatprep.subr.bf16.mxu0 0
        %3492 = vmatpush1.bf16.msra.mxu0 0
        %3493 = vmatprep.subr.bf16.mxu0 0
        %3494 = vmatpush1.bf16.msra.mxu0 %v752
        %3495 = vmatprep.subr.bf16.mxu0 0
        %3496 = vmatpush2.bf16.msra.mxu0 0
        %3497 = vmatprep.subr.bf16.mxu0 0
        %3498 = vmatpush2.bf16.msra.mxu0 0
        %3499 = vmatprep.subr.bf16.mxu0 0
        %3500 = vmatpush2.bf16.msra.mxu0 0
        %3501 = vmatprep.subr.bf16.mxu0 0
        %3502 = vmatpush2.bf16.msra.mxu0 0
        %3503 = vmatprep.subr.bf16.mxu0 0
        %3504 = vmatpush2.bf16.msra.mxu0 0
        %3505 = vmatprep.subr.bf16.mxu0 0
        %3506 = vmatpush2.bf16.msra.mxu0 0
        %3507 = vmatprep.subr.bf16.mxu0 0
        %3508 = vmatpush2.bf16.msra.mxu0 0
        %3509 = vmatprep.subr.bf16.mxu0 0
        %3510 = vmatpush2.bf16.msra.mxu0 0
        %3511 = vmatprep.mubr.bf16.mxu0 0
        %3512 = vmatmul.mubr.bf16.gmra.mxu0 %v3477
        %v3513 = vpop.f32.mrf.mxu0
        %v3514 = vadd.f32 0.0, %v3513
        %v3515 = vpop.f32.mrf.mxu0
        %v3516 = vpop.f32.mrf.mxu0
        %v3517 = vadd.f32 0.0, %v3516
        %v3518 = vpop.f32.mrf.mxu0
        %3519 = vdwg.mxu0
        %v3521 = vsel %vm2028, %v3153, 0
        %3523 = vmatprep.subr.bf16.mxu0 0
        %3524 = vmatpush1.bf16.msra.mxu0 0
        %3525 = vmatprep.subr.bf16.mxu0 0
        %3526 = vmatpush1.bf16.msra.mxu0 0
        %3527 = vmatprep.subr.bf16.mxu0 0
        %3528 = vmatpush1.bf16.msra.mxu0 0
        %3529 = vmatprep.subr.bf16.mxu0 0
        %3530 = vmatpush1.bf16.msra.mxu0 0
        %3531 = vmatprep.subr.bf16.mxu0 0
        %3532 = vmatpush1.bf16.msra.mxu0 0
        %3533 = vmatprep.subr.bf16.mxu0 0
        %3534 = vmatpush1.bf16.msra.mxu0 0
        %3535 = vmatprep.subr.bf16.mxu0 0
        %3536 = vmatpush1.bf16.msra.mxu0 0
        %3537 = vmatprep.subr.bf16.mxu0 0
        %3538 = vmatpush1.bf16.msra.mxu0 %v753
        %3539 = vmatprep.subr.bf16.mxu0 0
        %3540 = vmatpush2.bf16.msra.mxu0 0
        %3541 = vmatprep.subr.bf16.mxu0 0
        %3542 = vmatpush2.bf16.msra.mxu0 0
        %3543 = vmatprep.subr.bf16.mxu0 0
        %3544 = vmatpush2.bf16.msra.mxu0 0
        %3545 = vmatprep.subr.bf16.mxu0 0
        %3546 = vmatpush2.bf16.msra.mxu0 0
        %3547 = vmatprep.subr.bf16.mxu0 0
        %3548 = vmatpush2.bf16.msra.mxu0 0
        %3549 = vmatprep.subr.bf16.mxu0 0
        %3550 = vmatpush2.bf16.msra.mxu0 0
        %3551 = vmatprep.subr.bf16.mxu0 0
        %3552 = vmatpush2.bf16.msra.mxu0 0
        %3553 = vmatprep.subr.bf16.mxu0 0
        %3554 = vmatpush2.bf16.msra.mxu0 0
        %3555 = vmatprep.mubr.bf16.mxu0 0
        %3556 = vmatmul.mubr.bf16.gmra.mxu0 %v3521
        %v3557 = vpop.f32.mrf.mxu0
        %v3558 = vadd.f32 0.0, %v3557
        %v3559 = vpop.f32.mrf.mxu0
        %v3560 = vpop.f32.mrf.mxu0
        %v3561 = vadd.f32 0.0, %v3560
        %v3562 = vpop.f32.mrf.mxu0
        %3563 = vdwg.mxu0
        %v3565 = vsel %vm2028, %v3154, 0
        %3567 = vmatprep.subr.bf16.mxu0 0
        %3568 = vmatpush1.bf16.msra.mxu0 0
        %3569 = vmatprep.subr.bf16.mxu0 0
        %3570 = vmatpush1.bf16.msra.mxu0 0
        %3571 = vmatprep.subr.bf16.mxu0 0
        %3572 = vmatpush1.bf16.msra.mxu0 0
        %3573 = vmatprep.subr.bf16.mxu0 0
        %3574 = vmatpush1.bf16.msra.mxu0 0
        %3575 = vmatprep.subr.bf16.mxu0 0
        %3576 = vmatpush1.bf16.msra.mxu0 0
        %3577 = vmatprep.subr.bf16.mxu0 0
        %3578 = vmatpush1.bf16.msra.mxu0 0
        %3579 = vmatprep.subr.bf16.mxu0 0
        %3580 = vmatpush1.bf16.msra.mxu0 0
        %3581 = vmatprep.subr.bf16.mxu0 0
        %3582 = vmatpush1.bf16.msra.mxu0 %v754
        %3583 = vmatprep.subr.bf16.mxu0 0
        %3584 = vmatpush2.bf16.msra.mxu0 0
        %3585 = vmatprep.subr.bf16.mxu0 0
        %3586 = vmatpush2.bf16.msra.mxu0 0
        %3587 = vmatprep.subr.bf16.mxu0 0
        %3588 = vmatpush2.bf16.msra.mxu0 0
        %3589 = vmatprep.subr.bf16.mxu0 0
        %3590 = vmatpush2.bf16.msra.mxu0 0
        %3591 = vmatprep.subr.bf16.mxu0 0
        %3592 = vmatpush2.bf16.msra.mxu0 0
        %3593 = vmatprep.subr.bf16.mxu0 0
        %3594 = vmatpush2.bf16.msra.mxu0 0
        %3595 = vmatprep.subr.bf16.mxu0 0
        %3596 = vmatpush2.bf16.msra.mxu0 0
        %3597 = vmatprep.subr.bf16.mxu0 0
        %3598 = vmatpush2.bf16.msra.mxu0 0
        %3599 = vmatprep.mubr.bf16.mxu0 0
        %3600 = vmatmul.mubr.bf16.gmra.mxu0 %v3565
        %v3601 = vpop.f32.mrf.mxu0
        %v3602 = vadd.f32 0.0, %v3601
        %v3603 = vpop.f32.mrf.mxu0
        %v3604 = vpop.f32.mrf.mxu0
        %v3605 = vadd.f32 0.0, %v3604
        %v3606 = vpop.f32.mrf.mxu0
        %3607 = vdwg.mxu0
        %v3609 = vsel %vm2028, %v3155, 0
        %3611 = vmatprep.subr.bf16.mxu0 0
        %3612 = vmatpush1.bf16.msra.mxu0 0
        %3613 = vmatprep.subr.bf16.mxu0 0
        %3614 = vmatpush1.bf16.msra.mxu0 0
        %3615 = vmatprep.subr.bf16.mxu0 0
        %3616 = vmatpush1.bf16.msra.mxu0 0
        %3617 = vmatprep.subr.bf16.mxu0 0
        %3618 = vmatpush1.bf16.msra.mxu0 0
        %3619 = vmatprep.subr.bf16.mxu0 0
        %3620 = vmatpush1.bf16.msra.mxu0 0
        %3621 = vmatprep.subr.bf16.mxu0 0
        %3622 = vmatpush1.bf16.msra.mxu0 0
        %3623 = vmatprep.subr.bf16.mxu0 0
        %3624 = vmatpush1.bf16.msra.mxu0 0
        %3625 = vmatprep.subr.bf16.mxu0 0
        %3626 = vmatpush1.bf16.msra.mxu0 %v755
        %3627 = vmatprep.subr.bf16.mxu0 0
        %3628 = vmatpush2.bf16.msra.mxu0 0
        %3629 = vmatprep.subr.bf16.mxu0 0
        %3630 = vmatpush2.bf16.msra.mxu0 0
        %3631 = vmatprep.subr.bf16.mxu0 0
        %3632 = vmatpush2.bf16.msra.mxu0 0
        %3633 = vmatprep.subr.bf16.mxu0 0
        %3634 = vmatpush2.bf16.msra.mxu0 0
        %3635 = vmatprep.subr.bf16.mxu0 0
        %3636 = vmatpush2.bf16.msra.mxu0 0
        %3637 = vmatprep.subr.bf16.mxu0 0
        %3638 = vmatpush2.bf16.msra.mxu0 0
        %3639 = vmatprep.subr.bf16.mxu0 0
        %3640 = vmatpush2.bf16.msra.mxu0 0
        %3641 = vmatprep.subr.bf16.mxu0 0
        %3642 = vmatpush2.bf16.msra.mxu0 0
        %3643 = vmatprep.mubr.bf16.mxu0 0
        %3644 = vmatmul.mubr.bf16.gmra.mxu0 %v3609
        %v3645 = vpop.f32.mrf.mxu0
        %v3646 = vadd.f32 0.0, %v3645
        %v3647 = vpop.f32.mrf.mxu0
        %v3648 = vpop.f32.mrf.mxu0
        %v3649 = vadd.f32 0.0, %v3648
        %v3650 = vpop.f32.mrf.mxu0
        %3651 = vdwg.mxu0
        %v3653 = vsel %vm761, %v3284, 0
        %vm3655 = vcmask 1043456
        %v3657 = vsel %vm3655, %v1173, 0
        %3659 = vmatprep.subr.bf16.mxu0 0
        %3660 = vmatpush1.bf16.msra.mxu0 0
        %3661 = vmatprep.subr.bf16.mxu0 0
        %3662 = vmatpush1.bf16.msra.mxu0 0
        %3663 = vmatprep.subr.bf16.mxu0 0
        %3664 = vmatpush1.bf16.msra.mxu0 0
        %3665 = vmatprep.subr.bf16.mxu0 0
        %3666 = vmatpush1.bf16.msra.mxu0 0
        %3667 = vmatprep.subr.bf16.mxu0 0
        %3668 = vmatpush1.bf16.msra.mxu0 0
        %3669 = vmatprep.subr.bf16.mxu0 0
        %3670 = vmatpush1.bf16.msra.mxu0 0
        %3671 = vmatprep.subr.bf16.mxu0 0
        %3672 = vmatpush1.bf16.msra.mxu0 0
        %3673 = vmatprep.subr.bf16.mxu0 0
        %3674 = vmatpush1.bf16.msra.mxu0 %v3657
        %3675 = vmatprep.subr.bf16.mxu0 0
        %3676 = vmatpush2.bf16.msra.mxu0 0
        %3677 = vmatprep.subr.bf16.mxu0 0
        %3678 = vmatpush2.bf16.msra.mxu0 0
        %3679 = vmatprep.subr.bf16.mxu0 0
        %3680 = vmatpush2.bf16.msra.mxu0 0
        %3681 = vmatprep.subr.bf16.mxu0 0
        %3682 = vmatpush2.bf16.msra.mxu0 0
        %3683 = vmatprep.subr.bf16.mxu0 0
        %3684 = vmatpush2.bf16.msra.mxu0 0
        %3685 = vmatprep.subr.bf16.mxu0 0
        %3686 = vmatpush2.bf16.msra.mxu0 0
        %3687 = vmatprep.subr.bf16.mxu0 0
        %3688 = vmatpush2.bf16.msra.mxu0 0
        %3689 = vmatprep.subr.bf16.mxu0 0
        %3690 = vmatpush2.bf16.msra.mxu0 0
        %3691 = vmatprep.mubr.bf16.mxu0 0
        %3692 = vmatmul.mubr.bf16.gmra.mxu0 %v3653
        %v3693 = vpop.f32.mrf.mxu0
        %v3694 = vadd.f32 0.0, %v3693
        %v3695 = vpop.f32.mrf.mxu0
        %v3696 = vpop.f32.mrf.mxu0
        %v3697 = vpop.f32.mrf.mxu0
        %3698 = vdwg.mxu0
        %v3700 = vsel %vm761, %v3285, 0
        %v3703 = vsel %vm3655, %v1174, 0
        %3705 = vmatprep.subr.bf16.mxu0 0
        %3706 = vmatpush1.bf16.msra.mxu0 0
        %3707 = vmatprep.subr.bf16.mxu0 0
        %3708 = vmatpush1.bf16.msra.mxu0 0
        %3709 = vmatprep.subr.bf16.mxu0 0
        %3710 = vmatpush1.bf16.msra.mxu0 0
        %3711 = vmatprep.subr.bf16.mxu0 0
        %3712 = vmatpush1.bf16.msra.mxu0 0
        %3713 = vmatprep.subr.bf16.mxu0 0
        %3714 = vmatpush1.bf16.msra.mxu0 0
        %3715 = vmatprep.subr.bf16.mxu0 0
        %3716 = vmatpush1.bf16.msra.mxu0 0
        %3717 = vmatprep.subr.bf16.mxu0 0
        %3718 = vmatpush1.bf16.msra.mxu0 0
        %3719 = vmatprep.subr.bf16.mxu0 0
        %3720 = vmatpush1.bf16.msra.mxu0 %v3703
        %3721 = vmatprep.subr.bf16.mxu0 0
        %3722 = vmatpush2.bf16.msra.mxu0 0
        %3723 = vmatprep.subr.bf16.mxu0 0
        %3724 = vmatpush2.bf16.msra.mxu0 0
        %3725 = vmatprep.subr.bf16.mxu0 0
        %3726 = vmatpush2.bf16.msra.mxu0 0
        %3727 = vmatprep.subr.bf16.mxu0 0
        %3728 = vmatpush2.bf16.msra.mxu0 0
        %3729 = vmatprep.subr.bf16.mxu0 0
        %3730 = vmatpush2.bf16.msra.mxu0 0
        %3731 = vmatprep.subr.bf16.mxu0 0
        %3732 = vmatpush2.bf16.msra.mxu0 0
        %3733 = vmatprep.subr.bf16.mxu0 0
        %3734 = vmatpush2.bf16.msra.mxu0 0
        %3735 = vmatprep.subr.bf16.mxu0 0
        %3736 = vmatpush2.bf16.msra.mxu0 0
        %3737 = vmatprep.mubr.bf16.mxu0 0
        %3738 = vmatmul.mubr.bf16.gmra.mxu0 %v3700
        %v3739 = vpop.f32.mrf.mxu0
        %v3740 = vadd.f32 0.0, %v3739
        %v3741 = vpop.f32.mrf.mxu0
        %v3742 = vpop.f32.mrf.mxu0
        %v3743 = vpop.f32.mrf.mxu0
        %3744 = vdwg.mxu0
        %v3746 = vsel %vm761, %v3286, 0
        %v3749 = vsel %vm3655, %v1175, 0
        %3751 = vmatprep.subr.bf16.mxu0 0
        %3752 = vmatpush1.bf16.msra.mxu0 0
        %3753 = vmatprep.subr.bf16.mxu0 0
        %3754 = vmatpush1.bf16.msra.mxu0 0
        %3755 = vmatprep.subr.bf16.mxu0 0
        %3756 = vmatpush1.bf16.msra.mxu0 0
        %3757 = vmatprep.subr.bf16.mxu0 0
        %3758 = vmatpush1.bf16.msra.mxu0 0
        %3759 = vmatprep.subr.bf16.mxu0 0
        %3760 = vmatpush1.bf16.msra.mxu0 0
        %3761 = vmatprep.subr.bf16.mxu0 0
        %3762 = vmatpush1.bf16.msra.mxu0 0
        %3763 = vmatprep.subr.bf16.mxu0 0
        %3764 = vmatpush1.bf16.msra.mxu0 0
        %3765 = vmatprep.subr.bf16.mxu0 0
        %3766 = vmatpush1.bf16.msra.mxu0 %v3749
        %3767 = vmatprep.subr.bf16.mxu0 0
        %3768 = vmatpush2.bf16.msra.mxu0 0
        %3769 = vmatprep.subr.bf16.mxu0 0
        %3770 = vmatpush2.bf16.msra.mxu0 0
        %3771 = vmatprep.subr.bf16.mxu0 0
        %3772 = vmatpush2.bf16.msra.mxu0 0
        %3773 = vmatprep.subr.bf16.mxu0 0
        %3774 = vmatpush2.bf16.msra.mxu0 0
        %3775 = vmatprep.subr.bf16.mxu0 0
        %3776 = vmatpush2.bf16.msra.mxu0 0
        %3777 = vmatprep.subr.bf16.mxu0 0
        %3778 = vmatpush2.bf16.msra.mxu0 0
        %3779 = vmatprep.subr.bf16.mxu0 0
        %3780 = vmatpush2.bf16.msra.mxu0 0
        %3781 = vmatprep.subr.bf16.mxu0 0
        %3782 = vmatpush2.bf16.msra.mxu0 0
        %3783 = vmatprep.mubr.bf16.mxu0 0
        %3784 = vmatmul.mubr.bf16.gmra.mxu0 %v3746
        %v3785 = vpop.f32.mrf.mxu0
        %v3786 = vadd.f32 0.0, %v3785
        %v3787 = vpop.f32.mrf.mxu0
        %v3788 = vpop.f32.mrf.mxu0
        %v3789 = vpop.f32.mrf.mxu0
        %3790 = vdwg.mxu0
        %v3792 = vsel %vm761, %v3287, 0
        %v3795 = vsel %vm3655, %v1176, 0
        %3797 = vmatprep.subr.bf16.mxu0 0
        %3798 = vmatpush1.bf16.msra.mxu0 0
        %3799 = vmatprep.subr.bf16.mxu0 0
        %3800 = vmatpush1.bf16.msra.mxu0 0
        %3801 = vmatprep.subr.bf16.mxu0 0
        %3802 = vmatpush1.bf16.msra.mxu0 0
        %3803 = vmatprep.subr.bf16.mxu0 0
        %3804 = vmatpush1.bf16.msra.mxu0 0
        %3805 = vmatprep.subr.bf16.mxu0 0
        %3806 = vmatpush1.bf16.msra.mxu0 0
        %3807 = vmatprep.subr.bf16.mxu0 0
        %3808 = vmatpush1.bf16.msra.mxu0 0
        %3809 = vmatprep.subr.bf16.mxu0 0
        %3810 = vmatpush1.bf16.msra.mxu0 0
        %3811 = vmatprep.subr.bf16.mxu0 0
        %3812 = vmatpush1.bf16.msra.mxu0 %v3795
        %3813 = vmatprep.subr.bf16.mxu0 0
        %3814 = vmatpush2.bf16.msra.mxu0 0
        %3815 = vmatprep.subr.bf16.mxu0 0
        %3816 = vmatpush2.bf16.msra.mxu0 0
        %3817 = vmatprep.subr.bf16.mxu0 0
        %3818 = vmatpush2.bf16.msra.mxu0 0
        %3819 = vmatprep.subr.bf16.mxu0 0
        %3820 = vmatpush2.bf16.msra.mxu0 0
        %3821 = vmatprep.subr.bf16.mxu0 0
        %3822 = vmatpush2.bf16.msra.mxu0 0
        %3823 = vmatprep.subr.bf16.mxu0 0
        %3824 = vmatpush2.bf16.msra.mxu0 0
        %3825 = vmatprep.subr.bf16.mxu0 0
        %3826 = vmatpush2.bf16.msra.mxu0 0
        %3827 = vmatprep.subr.bf16.mxu0 0
        %3828 = vmatpush2.bf16.msra.mxu0 0
        %3829 = vmatprep.mubr.bf16.mxu0 0
        %3830 = vmatmul.mubr.bf16.gmra.mxu0 %v3792
        %v3831 = vpop.f32.mrf.mxu0
        %v3832 = vadd.f32 0.0, %v3831
        %v3833 = vpop.f32.mrf.mxu0
        %v3834 = vpop.f32.mrf.mxu0
        %v3835 = vpop.f32.mrf.mxu0
        %3836 = vdwg.mxu0
        %v3838 = vsel %vm761, %v3288, 0
        %v3841 = vsel %vm3655, %v1177, 0
        %3843 = vmatprep.subr.bf16.mxu0 0
        %3844 = vmatpush1.bf16.msra.mxu0 0
        %3845 = vmatprep.subr.bf16.mxu0 0
        %3846 = vmatpush1.bf16.msra.mxu0 0
        %3847 = vmatprep.subr.bf16.mxu0 0
        %3848 = vmatpush1.bf16.msra.mxu0 0
        %3849 = vmatprep.subr.bf16.mxu0 0
        %3850 = vmatpush1.bf16.msra.mxu0 0
        %3851 = vmatprep.subr.bf16.mxu0 0
        %3852 = vmatpush1.bf16.msra.mxu0 0
        %3853 = vmatprep.subr.bf16.mxu0 0
        %3854 = vmatpush1.bf16.msra.mxu0 0
        %3855 = vmatprep.subr.bf16.mxu0 0
        %3856 = vmatpush1.bf16.msra.mxu0 0
        %3857 = vmatprep.subr.bf16.mxu0 0
        %3858 = vmatpush1.bf16.msra.mxu0 %v3841
        %3859 = vmatprep.subr.bf16.mxu0 0
        %3860 = vmatpush2.bf16.msra.mxu0 0
        %3861 = vmatprep.subr.bf16.mxu0 0
        %3862 = vmatpush2.bf16.msra.mxu0 0
        %3863 = vmatprep.subr.bf16.mxu0 0
        %3864 = vmatpush2.bf16.msra.mxu0 0
        %3865 = vmatprep.subr.bf16.mxu0 0
        %3866 = vmatpush2.bf16.msra.mxu0 0
        %3867 = vmatprep.subr.bf16.mxu0 0
        %3868 = vmatpush2.bf16.msra.mxu0 0
        %3869 = vmatprep.subr.bf16.mxu0 0
        %3870 = vmatpush2.bf16.msra.mxu0 0
        %3871 = vmatprep.subr.bf16.mxu0 0
        %3872 = vmatpush2.bf16.msra.mxu0 0
        %3873 = vmatprep.subr.bf16.mxu0 0
        %3874 = vmatpush2.bf16.msra.mxu0 0
        %3875 = vmatprep.mubr.bf16.mxu0 0
        %3876 = vmatmul.mubr.bf16.gmra.mxu0 %v3838
        %v3877 = vpop.f32.mrf.mxu0
        %v3878 = vadd.f32 0.0, %v3877
        %v3879 = vpop.f32.mrf.mxu0
        %v3880 = vpop.f32.mrf.mxu0
        %v3881 = vpop.f32.mrf.mxu0
        %3882 = vdwg.mxu0
        %v3884 = vsel %vm761, %v3289, 0
        %v3887 = vsel %vm3655, %v1178, 0
        %3889 = vmatprep.subr.bf16.mxu0 0
        %3890 = vmatpush1.bf16.msra.mxu0 0
        %3891 = vmatprep.subr.bf16.mxu0 0
        %3892 = vmatpush1.bf16.msra.mxu0 0
        %3893 = vmatprep.subr.bf16.mxu0 0
        %3894 = vmatpush1.bf16.msra.mxu0 0
        %3895 = vmatprep.subr.bf16.mxu0 0
        %3896 = vmatpush1.bf16.msra.mxu0 0
        %3897 = vmatprep.subr.bf16.mxu0 0
        %3898 = vmatpush1.bf16.msra.mxu0 0
        %3899 = vmatprep.subr.bf16.mxu0 0
        %3900 = vmatpush1.bf16.msra.mxu0 0
        %3901 = vmatprep.subr.bf16.mxu0 0
        %3902 = vmatpush1.bf16.msra.mxu0 0
        %3903 = vmatprep.subr.bf16.mxu0 0
        %3904 = vmatpush1.bf16.msra.mxu0 %v3887
        %3905 = vmatprep.subr.bf16.mxu0 0
        %3906 = vmatpush2.bf16.msra.mxu0 0
        %3907 = vmatprep.subr.bf16.mxu0 0
        %3908 = vmatpush2.bf16.msra.mxu0 0
        %3909 = vmatprep.subr.bf16.mxu0 0
        %3910 = vmatpush2.bf16.msra.mxu0 0
        %3911 = vmatprep.subr.bf16.mxu0 0
        %3912 = vmatpush2.bf16.msra.mxu0 0
        %3913 = vmatprep.subr.bf16.mxu0 0
        %3914 = vmatpush2.bf16.msra.mxu0 0
        %3915 = vmatprep.subr.bf16.mxu0 0
        %3916 = vmatpush2.bf16.msra.mxu0 0
        %3917 = vmatprep.subr.bf16.mxu0 0
        %3918 = vmatpush2.bf16.msra.mxu0 0
        %3919 = vmatprep.subr.bf16.mxu0 0
        %3920 = vmatpush2.bf16.msra.mxu0 0
        %3921 = vmatprep.mubr.bf16.mxu0 0
        %3922 = vmatmul.mubr.bf16.gmra.mxu0 %v3884
        %v3923 = vpop.f32.mrf.mxu0
        %v3924 = vadd.f32 0.0, %v3923
        %v3925 = vpop.f32.mrf.mxu0
        %v3926 = vpop.f32.mrf.mxu0
        %v3927 = vpop.f32.mrf.mxu0
        %3928 = vdwg.mxu0
        %v3930 = vsel %vm761, %v3290, 0
        %v3933 = vsel %vm3655, %v1179, 0
        %3935 = vmatprep.subr.bf16.mxu0 0
        %3936 = vmatpush1.bf16.msra.mxu0 0
        %3937 = vmatprep.subr.bf16.mxu0 0
        %3938 = vmatpush1.bf16.msra.mxu0 0
        %3939 = vmatprep.subr.bf16.mxu0 0
        %3940 = vmatpush1.bf16.msra.mxu0 0
        %3941 = vmatprep.subr.bf16.mxu0 0
        %3942 = vmatpush1.bf16.msra.mxu0 0
        %3943 = vmatprep.subr.bf16.mxu0 0
        %3944 = vmatpush1.bf16.msra.mxu0 0
        %3945 = vmatprep.subr.bf16.mxu0 0
        %3946 = vmatpush1.bf16.msra.mxu0 0
        %3947 = vmatprep.subr.bf16.mxu0 0
        %3948 = vmatpush1.bf16.msra.mxu0 0
        %3949 = vmatprep.subr.bf16.mxu0 0
        %3950 = vmatpush1.bf16.msra.mxu0 %v3933
        %3951 = vmatprep.subr.bf16.mxu0 0
        %3952 = vmatpush2.bf16.msra.mxu0 0
        %3953 = vmatprep.subr.bf16.mxu0 0
        %3954 = vmatpush2.bf16.msra.mxu0 0
        %3955 = vmatprep.subr.bf16.mxu0 0
        %3956 = vmatpush2.bf16.msra.mxu0 0
        %3957 = vmatprep.subr.bf16.mxu0 0
        %3958 = vmatpush2.bf16.msra.mxu0 0
        %3959 = vmatprep.subr.bf16.mxu0 0
        %3960 = vmatpush2.bf16.msra.mxu0 0
        %3961 = vmatprep.subr.bf16.mxu0 0
        %3962 = vmatpush2.bf16.msra.mxu0 0
        %3963 = vmatprep.subr.bf16.mxu0 0
        %3964 = vmatpush2.bf16.msra.mxu0 0
        %3965 = vmatprep.subr.bf16.mxu0 0
        %3966 = vmatpush2.bf16.msra.mxu0 0
        %3967 = vmatprep.mubr.bf16.mxu0 0
        %3968 = vmatmul.mubr.bf16.gmra.mxu0 %v3930
        %v3969 = vpop.f32.mrf.mxu0
        %v3970 = vadd.f32 0.0, %v3969
        %v3971 = vpop.f32.mrf.mxu0
        %v3972 = vpop.f32.mrf.mxu0
        %v3973 = vpop.f32.mrf.mxu0
        %3974 = vdwg.mxu0
        %v3976 = vsel %vm761, %v3291, 0
        %v3979 = vsel %vm3655, %v1180, 0
        %3981 = vmatprep.subr.bf16.mxu0 0
        %3982 = vmatpush1.bf16.msra.mxu0 0
        %3983 = vmatprep.subr.bf16.mxu0 0
        %3984 = vmatpush1.bf16.msra.mxu0 0
        %3985 = vmatprep.subr.bf16.mxu0 0
        %3986 = vmatpush1.bf16.msra.mxu0 0
        %3987 = vmatprep.subr.bf16.mxu0 0
        %3988 = vmatpush1.bf16.msra.mxu0 0
        %3989 = vmatprep.subr.bf16.mxu0 0
        %3990 = vmatpush1.bf16.msra.mxu0 0
        %3991 = vmatprep.subr.bf16.mxu0 0
        %3992 = vmatpush1.bf16.msra.mxu0 0
        %3993 = vmatprep.subr.bf16.mxu0 0
        %3994 = vmatpush1.bf16.msra.mxu0 0
        %3995 = vmatprep.subr.bf16.mxu0 0
        %3996 = vmatpush1.bf16.msra.mxu0 %v3979
        %3997 = vmatprep.subr.bf16.mxu0 0
        %3998 = vmatpush2.bf16.msra.mxu0 0
        %3999 = vmatprep.subr.bf16.mxu0 0
        %4000 = vmatpush2.bf16.msra.mxu0 0
        %4001 = vmatprep.subr.bf16.mxu0 0
        %4002 = vmatpush2.bf16.msra.mxu0 0
        %4003 = vmatprep.subr.bf16.mxu0 0
        %4004 = vmatpush2.bf16.msra.mxu0 0
        %4005 = vmatprep.subr.bf16.mxu0 0
        %4006 = vmatpush2.bf16.msra.mxu0 0
        %4007 = vmatprep.subr.bf16.mxu0 0
        %4008 = vmatpush2.bf16.msra.mxu0 0
        %4009 = vmatprep.subr.bf16.mxu0 0
        %4010 = vmatpush2.bf16.msra.mxu0 0
        %4011 = vmatprep.subr.bf16.mxu0 0
        %4012 = vmatpush2.bf16.msra.mxu0 0
        %4013 = vmatprep.mubr.bf16.mxu0 0
        %4014 = vmatmul.mubr.bf16.gmra.mxu0 %v3976
        %v4015 = vpop.f32.mrf.mxu0
        %v4016 = vadd.f32 0.0, %v4015
        %v4017 = vpop.f32.mrf.mxu0
        %v4018 = vpop.f32.mrf.mxu0
        %v4019 = vpop.f32.mrf.mxu0
        %4020 = vdwg.mxu0
        %v4022 = vsel %vm761, %v3292, 0
        %v4025 = vsel %vm3655, %v1181, 0
        %4027 = vmatprep.subr.bf16.mxu0 0
        %4028 = vmatpush1.bf16.msra.mxu0 0
        %4029 = vmatprep.subr.bf16.mxu0 0
        %4030 = vmatpush1.bf16.msra.mxu0 0
        %4031 = vmatprep.subr.bf16.mxu0 0
        %4032 = vmatpush1.bf16.msra.mxu0 0
        %4033 = vmatprep.subr.bf16.mxu0 0
        %4034 = vmatpush1.bf16.msra.mxu0 0
        %4035 = vmatprep.subr.bf16.mxu0 0
        %4036 = vmatpush1.bf16.msra.mxu0 0
        %4037 = vmatprep.subr.bf16.mxu0 0
        %4038 = vmatpush1.bf16.msra.mxu0 0
        %4039 = vmatprep.subr.bf16.mxu0 0
        %4040 = vmatpush1.bf16.msra.mxu0 0
        %4041 = vmatprep.subr.bf16.mxu0 0
        %4042 = vmatpush1.bf16.msra.mxu0 %v4025
        %4043 = vmatprep.subr.bf16.mxu0 0
        %4044 = vmatpush2.bf16.msra.mxu0 0
        %4045 = vmatprep.subr.bf16.mxu0 0
        %4046 = vmatpush2.bf16.msra.mxu0 0
        %4047 = vmatprep.subr.bf16.mxu0 0
        %4048 = vmatpush2.bf16.msra.mxu0 0
        %4049 = vmatprep.subr.bf16.mxu0 0
        %4050 = vmatpush2.bf16.msra.mxu0 0
        %4051 = vmatprep.subr.bf16.mxu0 0
        %4052 = vmatpush2.bf16.msra.mxu0 0
        %4053 = vmatprep.subr.bf16.mxu0 0
        %4054 = vmatpush2.bf16.msra.mxu0 0
        %4055 = vmatprep.subr.bf16.mxu0 0
        %4056 = vmatpush2.bf16.msra.mxu0 0
        %4057 = vmatprep.subr.bf16.mxu0 0
        %4058 = vmatpush2.bf16.msra.mxu0 0
        %4059 = vmatprep.mubr.bf16.mxu0 0
        %4060 = vmatmul.mubr.bf16.gmra.mxu0 %v4022
        %v4061 = vpop.f32.mrf.mxu0
        %v4062 = vadd.f32 0.0, %v4061
        %v4063 = vpop.f32.mrf.mxu0
        %v4064 = vpop.f32.mrf.mxu0
        %v4065 = vpop.f32.mrf.mxu0
        %4066 = vdwg.mxu0
        %v4068 = vsel %vm761, %v3293, 0
        %v4071 = vsel %vm3655, %v1182, 0
        %4073 = vmatprep.subr.bf16.mxu0 0
        %4074 = vmatpush1.bf16.msra.mxu0 0
        %4075 = vmatprep.subr.bf16.mxu0 0
        %4076 = vmatpush1.bf16.msra.mxu0 0
        %4077 = vmatprep.subr.bf16.mxu0 0
        %4078 = vmatpush1.bf16.msra.mxu0 0
        %4079 = vmatprep.subr.bf16.mxu0 0
        %4080 = vmatpush1.bf16.msra.mxu0 0
        %4081 = vmatprep.subr.bf16.mxu0 0
        %4082 = vmatpush1.bf16.msra.mxu0 0
        %4083 = vmatprep.subr.bf16.mxu0 0
        %4084 = vmatpush1.bf16.msra.mxu0 0
        %4085 = vmatprep.subr.bf16.mxu0 0
        %4086 = vmatpush1.bf16.msra.mxu0 0
        %4087 = vmatprep.subr.bf16.mxu0 0
        %4088 = vmatpush1.bf16.msra.mxu0 %v4071
        %4089 = vmatprep.subr.bf16.mxu0 0
        %4090 = vmatpush2.bf16.msra.mxu0 0
        %4091 = vmatprep.subr.bf16.mxu0 0
        %4092 = vmatpush2.bf16.msra.mxu0 0
        %4093 = vmatprep.subr.bf16.mxu0 0
        %4094 = vmatpush2.bf16.msra.mxu0 0
        %4095 = vmatprep.subr.bf16.mxu0 0
        %4096 = vmatpush2.bf16.msra.mxu0 0
        %4097 = vmatprep.subr.bf16.mxu0 0
        %4098 = vmatpush2.bf16.msra.mxu0 0
        %4099 = vmatprep.subr.bf16.mxu0 0
        %4100 = vmatpush2.bf16.msra.mxu0 0
        %4101 = vmatprep.subr.bf16.mxu0 0
        %4102 = vmatpush2.bf16.msra.mxu0 0
        %4103 = vmatprep.subr.bf16.mxu0 0
        %4104 = vmatpush2.bf16.msra.mxu0 0
        %4105 = vmatprep.mubr.bf16.mxu0 0
        %4106 = vmatmul.mubr.bf16.gmra.mxu0 %v4068
        %v4107 = vpop.f32.mrf.mxu0
        %v4108 = vadd.f32 0.0, %v4107
        %v4109 = vpop.f32.mrf.mxu0
        %v4110 = vpop.f32.mrf.mxu0
        %v4111 = vpop.f32.mrf.mxu0
        %4112 = vdwg.mxu0
        %v4114 = vsel %vm761, %v3294, 0
        %v4117 = vsel %vm3655, %v1183, 0
        %4119 = vmatprep.subr.bf16.mxu0 0
        %4120 = vmatpush1.bf16.msra.mxu0 0
        %4121 = vmatprep.subr.bf16.mxu0 0
        %4122 = vmatpush1.bf16.msra.mxu0 0
        %4123 = vmatprep.subr.bf16.mxu0 0
        %4124 = vmatpush1.bf16.msra.mxu0 0
        %4125 = vmatprep.subr.bf16.mxu0 0
        %4126 = vmatpush1.bf16.msra.mxu0 0
        %4127 = vmatprep.subr.bf16.mxu0 0
        %4128 = vmatpush1.bf16.msra.mxu0 0
        %4129 = vmatprep.subr.bf16.mxu0 0
        %4130 = vmatpush1.bf16.msra.mxu0 0
        %4131 = vmatprep.subr.bf16.mxu0 0
        %4132 = vmatpush1.bf16.msra.mxu0 0
        %4133 = vmatprep.subr.bf16.mxu0 0
        %4134 = vmatpush1.bf16.msra.mxu0 %v4117
        %4135 = vmatprep.subr.bf16.mxu0 0
        %4136 = vmatpush2.bf16.msra.mxu0 0
        %4137 = vmatprep.subr.bf16.mxu0 0
        %4138 = vmatpush2.bf16.msra.mxu0 0
        %4139 = vmatprep.subr.bf16.mxu0 0
        %4140 = vmatpush2.bf16.msra.mxu0 0
        %4141 = vmatprep.subr.bf16.mxu0 0
        %4142 = vmatpush2.bf16.msra.mxu0 0
        %4143 = vmatprep.subr.bf16.mxu0 0
        %4144 = vmatpush2.bf16.msra.mxu0 0
        %4145 = vmatprep.subr.bf16.mxu0 0
        %4146 = vmatpush2.bf16.msra.mxu0 0
        %4147 = vmatprep.subr.bf16.mxu0 0
        %4148 = vmatpush2.bf16.msra.mxu0 0
        %4149 = vmatprep.subr.bf16.mxu0 0
        %4150 = vmatpush2.bf16.msra.mxu0 0
        %4151 = vmatprep.mubr.bf16.mxu0 0
        %4152 = vmatmul.mubr.bf16.gmra.mxu0 %v4114
        %v4153 = vpop.f32.mrf.mxu0
        %v4154 = vadd.f32 0.0, %v4153
        %v4155 = vpop.f32.mrf.mxu0
        %v4156 = vpop.f32.mrf.mxu0
        %v4157 = vpop.f32.mrf.mxu0
        %4158 = vdwg.mxu0
        %v4160 = vsel %vm761, %v3295, 0
        %v4163 = vsel %vm3655, %v1184, 0
        %4165 = vmatprep.subr.bf16.mxu0 0
        %4166 = vmatpush1.bf16.msra.mxu0 0
        %4167 = vmatprep.subr.bf16.mxu0 0
        %4168 = vmatpush1.bf16.msra.mxu0 0
        %4169 = vmatprep.subr.bf16.mxu0 0
        %4170 = vmatpush1.bf16.msra.mxu0 0
        %4171 = vmatprep.subr.bf16.mxu0 0
        %4172 = vmatpush1.bf16.msra.mxu0 0
        %4173 = vmatprep.subr.bf16.mxu0 0
        %4174 = vmatpush1.bf16.msra.mxu0 0
        %4175 = vmatprep.subr.bf16.mxu0 0
        %4176 = vmatpush1.bf16.msra.mxu0 0
        %4177 = vmatprep.subr.bf16.mxu0 0
        %4178 = vmatpush1.bf16.msra.mxu0 0
        %4179 = vmatprep.subr.bf16.mxu0 0
        %4180 = vmatpush1.bf16.msra.mxu0 %v4163
        %4181 = vmatprep.subr.bf16.mxu0 0
        %4182 = vmatpush2.bf16.msra.mxu0 0
        %4183 = vmatprep.subr.bf16.mxu0 0
        %4184 = vmatpush2.bf16.msra.mxu0 0
        %4185 = vmatprep.subr.bf16.mxu0 0
        %4186 = vmatpush2.bf16.msra.mxu0 0
        %4187 = vmatprep.subr.bf16.mxu0 0
        %4188 = vmatpush2.bf16.msra.mxu0 0
        %4189 = vmatprep.subr.bf16.mxu0 0
        %4190 = vmatpush2.bf16.msra.mxu0 0
        %4191 = vmatprep.subr.bf16.mxu0 0
        %4192 = vmatpush2.bf16.msra.mxu0 0
        %4193 = vmatprep.subr.bf16.mxu0 0
        %4194 = vmatpush2.bf16.msra.mxu0 0
        %4195 = vmatprep.subr.bf16.mxu0 0
        %4196 = vmatpush2.bf16.msra.mxu0 0
        %4197 = vmatprep.mubr.bf16.mxu0 0
        %4198 = vmatmul.mubr.bf16.gmra.mxu0 %v4160
        %v4199 = vpop.f32.mrf.mxu0
        %v4200 = vadd.f32 0.0, %v4199
        %v4201 = vpop.f32.mrf.mxu0
        %v4202 = vpop.f32.mrf.mxu0
        %v4203 = vpop.f32.mrf.mxu0
        %4204 = vdwg.mxu0
        %v4206 = vsel %vm761, %v3296, 0
        %v4209 = vsel %vm3655, %v1185, 0
        %4211 = vmatprep.subr.bf16.mxu0 0
        %4212 = vmatpush1.bf16.msra.mxu0 0
        %4213 = vmatprep.subr.bf16.mxu0 0
        %4214 = vmatpush1.bf16.msra.mxu0 0
        %4215 = vmatprep.subr.bf16.mxu0 0
        %4216 = vmatpush1.bf16.msra.mxu0 0
        %4217 = vmatprep.subr.bf16.mxu0 0
        %4218 = vmatpush1.bf16.msra.mxu0 0
        %4219 = vmatprep.subr.bf16.mxu0 0
        %4220 = vmatpush1.bf16.msra.mxu0 0
        %4221 = vmatprep.subr.bf16.mxu0 0
        %4222 = vmatpush1.bf16.msra.mxu0 0
        %4223 = vmatprep.subr.bf16.mxu0 0
        %4224 = vmatpush1.bf16.msra.mxu0 0
        %4225 = vmatprep.subr.bf16.mxu0 0
        %4226 = vmatpush1.bf16.msra.mxu0 %v4209
        %4227 = vmatprep.subr.bf16.mxu0 0
        %4228 = vmatpush2.bf16.msra.mxu0 0
        %4229 = vmatprep.subr.bf16.mxu0 0
        %4230 = vmatpush2.bf16.msra.mxu0 0
        %4231 = vmatprep.subr.bf16.mxu0 0
        %4232 = vmatpush2.bf16.msra.mxu0 0
        %4233 = vmatprep.subr.bf16.mxu0 0
        %4234 = vmatpush2.bf16.msra.mxu0 0
        %4235 = vmatprep.subr.bf16.mxu0 0
        %4236 = vmatpush2.bf16.msra.mxu0 0
        %4237 = vmatprep.subr.bf16.mxu0 0
        %4238 = vmatpush2.bf16.msra.mxu0 0
        %4239 = vmatprep.subr.bf16.mxu0 0
        %4240 = vmatpush2.bf16.msra.mxu0 0
        %4241 = vmatprep.subr.bf16.mxu0 0
        %4242 = vmatpush2.bf16.msra.mxu0 0
        %4243 = vmatprep.mubr.bf16.mxu0 0
        %4244 = vmatmul.mubr.bf16.gmra.mxu0 %v4206
        %v4245 = vpop.f32.mrf.mxu0
        %v4246 = vadd.f32 0.0, %v4245
        %v4247 = vpop.f32.mrf.mxu0
        %v4248 = vpop.f32.mrf.mxu0
        %v4249 = vpop.f32.mrf.mxu0
        %4250 = vdwg.mxu0
        %v4252 = vsel %vm761, %v3297, 0
        %v4255 = vsel %vm3655, %v1186, 0
        %4257 = vmatprep.subr.bf16.mxu0 0
        %4258 = vmatpush1.bf16.msra.mxu0 0
        %4259 = vmatprep.subr.bf16.mxu0 0
        %4260 = vmatpush1.bf16.msra.mxu0 0
        %4261 = vmatprep.subr.bf16.mxu0 0
        %4262 = vmatpush1.bf16.msra.mxu0 0
        %4263 = vmatprep.subr.bf16.mxu0 0
        %4264 = vmatpush1.bf16.msra.mxu0 0
        %4265 = vmatprep.subr.bf16.mxu0 0
        %4266 = vmatpush1.bf16.msra.mxu0 0
        %4267 = vmatprep.subr.bf16.mxu0 0
        %4268 = vmatpush1.bf16.msra.mxu0 0
        %4269 = vmatprep.subr.bf16.mxu0 0
        %4270 = vmatpush1.bf16.msra.mxu0 0
        %4271 = vmatprep.subr.bf16.mxu0 0
        %4272 = vmatpush1.bf16.msra.mxu0 %v4255
        %4273 = vmatprep.subr.bf16.mxu0 0
        %4274 = vmatpush2.bf16.msra.mxu0 0
        %4275 = vmatprep.subr.bf16.mxu0 0
        %4276 = vmatpush2.bf16.msra.mxu0 0
        %4277 = vmatprep.subr.bf16.mxu0 0
        %4278 = vmatpush2.bf16.msra.mxu0 0
        %4279 = vmatprep.subr.bf16.mxu0 0
        %4280 = vmatpush2.bf16.msra.mxu0 0
        %4281 = vmatprep.subr.bf16.mxu0 0
        %4282 = vmatpush2.bf16.msra.mxu0 0
        %4283 = vmatprep.subr.bf16.mxu0 0
        %4284 = vmatpush2.bf16.msra.mxu0 0
        %4285 = vmatprep.subr.bf16.mxu0 0
        %4286 = vmatpush2.bf16.msra.mxu0 0
        %4287 = vmatprep.subr.bf16.mxu0 0
        %4288 = vmatpush2.bf16.msra.mxu0 0
        %4289 = vmatprep.mubr.bf16.mxu0 0
        %4290 = vmatmul.mubr.bf16.gmra.mxu0 %v4252
        %v4291 = vpop.f32.mrf.mxu0
        %v4292 = vadd.f32 0.0, %v4291
        %v4293 = vpop.f32.mrf.mxu0
        %v4294 = vpop.f32.mrf.mxu0
        %v4295 = vpop.f32.mrf.mxu0
        %4296 = vdwg.mxu0
        %v4298 = vsel %vm761, %v3298, 0
        %v4301 = vsel %vm3655, %v1187, 0
        %4303 = vmatprep.subr.bf16.mxu0 0
        %4304 = vmatpush1.bf16.msra.mxu0 0
        %4305 = vmatprep.subr.bf16.mxu0 0
        %4306 = vmatpush1.bf16.msra.mxu0 0
        %4307 = vmatprep.subr.bf16.mxu0 0
        %4308 = vmatpush1.bf16.msra.mxu0 0
        %4309 = vmatprep.subr.bf16.mxu0 0
        %4310 = vmatpush1.bf16.msra.mxu0 0
        %4311 = vmatprep.subr.bf16.mxu0 0
        %4312 = vmatpush1.bf16.msra.mxu0 0
        %4313 = vmatprep.subr.bf16.mxu0 0
        %4314 = vmatpush1.bf16.msra.mxu0 0
        %4315 = vmatprep.subr.bf16.mxu0 0
        %4316 = vmatpush1.bf16.msra.mxu0 0
        %4317 = vmatprep.subr.bf16.mxu0 0
        %4318 = vmatpush1.bf16.msra.mxu0 %v4301
        %4319 = vmatprep.subr.bf16.mxu0 0
        %4320 = vmatpush2.bf16.msra.mxu0 0
        %4321 = vmatprep.subr.bf16.mxu0 0
        %4322 = vmatpush2.bf16.msra.mxu0 0
        %4323 = vmatprep.subr.bf16.mxu0 0
        %4324 = vmatpush2.bf16.msra.mxu0 0
        %4325 = vmatprep.subr.bf16.mxu0 0
        %4326 = vmatpush2.bf16.msra.mxu0 0
        %4327 = vmatprep.subr.bf16.mxu0 0
        %4328 = vmatpush2.bf16.msra.mxu0 0
        %4329 = vmatprep.subr.bf16.mxu0 0
        %4330 = vmatpush2.bf16.msra.mxu0 0
        %4331 = vmatprep.subr.bf16.mxu0 0
        %4332 = vmatpush2.bf16.msra.mxu0 0
        %4333 = vmatprep.subr.bf16.mxu0 0
        %4334 = vmatpush2.bf16.msra.mxu0 0
        %4335 = vmatprep.mubr.bf16.mxu0 0
        %4336 = vmatmul.mubr.bf16.gmra.mxu0 %v4298
        %v4337 = vpop.f32.mrf.mxu0
        %v4338 = vadd.f32 0.0, %v4337
        %v4339 = vpop.f32.mrf.mxu0
        %v4340 = vpop.f32.mrf.mxu0
        %v4341 = vpop.f32.mrf.mxu0
        %4342 = vdwg.mxu0
        %v4344 = vsel %vm761, %v3299, 0
        %v4347 = vsel %vm3655, %v1188, 0
        %4349 = vmatprep.subr.bf16.mxu0 0
        %4350 = vmatpush1.bf16.msra.mxu0 0
        %4351 = vmatprep.subr.bf16.mxu0 0
        %4352 = vmatpush1.bf16.msra.mxu0 0
        %4353 = vmatprep.subr.bf16.mxu0 0
        %4354 = vmatpush1.bf16.msra.mxu0 0
        %4355 = vmatprep.subr.bf16.mxu0 0
        %4356 = vmatpush1.bf16.msra.mxu0 0
        %4357 = vmatprep.subr.bf16.mxu0 0
        %4358 = vmatpush1.bf16.msra.mxu0 0
        %4359 = vmatprep.subr.bf16.mxu0 0
        %4360 = vmatpush1.bf16.msra.mxu0 0
        %4361 = vmatprep.subr.bf16.mxu0 0
        %4362 = vmatpush1.bf16.msra.mxu0 0
        %4363 = vmatprep.subr.bf16.mxu0 0
        %4364 = vmatpush1.bf16.msra.mxu0 %v4347
        %4365 = vmatprep.subr.bf16.mxu0 0
        %4366 = vmatpush2.bf16.msra.mxu0 0
        %4367 = vmatprep.subr.bf16.mxu0 0
        %4368 = vmatpush2.bf16.msra.mxu0 0
        %4369 = vmatprep.subr.bf16.mxu0 0
        %4370 = vmatpush2.bf16.msra.mxu0 0
        %4371 = vmatprep.subr.bf16.mxu0 0
        %4372 = vmatpush2.bf16.msra.mxu0 0
        %4373 = vmatprep.subr.bf16.mxu0 0
        %4374 = vmatpush2.bf16.msra.mxu0 0
        %4375 = vmatprep.subr.bf16.mxu0 0
        %4376 = vmatpush2.bf16.msra.mxu0 0
        %4377 = vmatprep.subr.bf16.mxu0 0
        %4378 = vmatpush2.bf16.msra.mxu0 0
        %4379 = vmatprep.subr.bf16.mxu0 0
        %4380 = vmatpush2.bf16.msra.mxu0 0
        %4381 = vmatprep.mubr.bf16.mxu0 0
        %4382 = vmatmul.mubr.bf16.gmra.mxu0 %v4344
        %v4383 = vpop.f32.mrf.mxu0
        %v4384 = vadd.f32 0.0, %v4383
        %v4385 = vpop.f32.mrf.mxu0
        %v4386 = vpop.f32.mrf.mxu0
        %v4387 = vpop.f32.mrf.mxu0
        %4388 = vdwg.mxu0
        %v4389 = vstv %s337
        %v4390 = vmul.f32 %v4389, %v3694
        %v4391 = vmul.f32 %v4389, %v3740
        %v4392 = vmul.f32 %v4389, %v3786
        %v4393 = vmul.f32 %v4389, %v3832
        %v4394 = vmul.f32 %v4389, %v3878
        %v4395 = vmul.f32 %v4389, %v3924
        %v4396 = vmul.f32 %v4389, %v3970
        %v4397 = vmul.f32 %v4389, %v4016
        %v4398 = vmul.f32 %v4389, %v4062
        %v4399 = vmul.f32 %v4389, %v4108
        %v4400 = vmul.f32 %v4389, %v4154
        %v4401 = vmul.f32 %v4389, %v4200
        %v4402 = vmul.f32 %v4389, %v4246
        %v4403 = vmul.f32 %v4389, %v4292
        %v4404 = vmul.f32 %v4389, %v4338
        %v4405 = vmul.f32 %v4389, %v4384
        %v4406 = vadd.f32 %v4390, %v338
        %v4407 = vadd.f32 %v4391, %v339
        %v4408 = vadd.f32 %v4392, %v340
        %v4409 = vadd.f32 %v4393, %v341
        %v4410 = vadd.f32 %v4394, %v342
        %v4411 = vadd.f32 %v4395, %v343
        %v4412 = vadd.f32 %v4396, %v344
        %v4413 = vadd.f32 %v4397, %v345
        %v4414 = vadd.f32 %v4398, %v346
        %v4415 = vadd.f32 %v4399, %v347
        %v4416 = vadd.f32 %v4400, %v348
        %v4417 = vadd.f32 %v4401, %v349
        %v4418 = vadd.f32 %v4402, %v350
        %v4419 = vadd.f32 %v4403, %v351
        %v4420 = vadd.f32 %v4404, %v352
        %v4421 = vadd.f32 %v4405, %v353
        %4422 = vst.msk [vmem:[%s328] sm:$0xff] %vm465, %v4406
        %4423 = vst.msk [vmem:[%s328 + $0x8] sm:$0xff] %vm465, %v4407
        %4424 = vst.msk [vmem:[%s328 + $0x10] sm:$0xff] %vm465, %v4408
        %4425 = vst.msk [vmem:[%s328 + $0x18] sm:$0xff] %vm465, %v4409
        %4426 = vst.msk [vmem:[%s328 + $0x20] sm:$0xff] %vm465, %v4410
        %4427 = vst.msk [vmem:[%s328 + $0x28] sm:$0xff] %vm465, %v4411
        %4428 = vst.msk [vmem:[%s328 + $0x30] sm:$0xff] %vm465, %v4412
        %4429 = vst.msk [vmem:[%s328 + $0x38] sm:$0xff] %vm465, %v4413
        %4430 = vst.msk [vmem:[%s328 + $0x40] sm:$0xff] %vm465, %v4414
        %4431 = vst.msk [vmem:[%s328 + $0x48] sm:$0xff] %vm465, %v4415
        %4432 = vst.msk [vmem:[%s328 + $0x50] sm:$0xff] %vm465, %v4416
        %4433 = vst.msk [vmem:[%s328 + $0x58] sm:$0xff] %vm465, %v4417
        %4434 = vst.msk [vmem:[%s328 + $0x60] sm:$0xff] %vm465, %v4418
        %4435 = vst.msk [vmem:[%s328 + $0x68] sm:$0xff] %vm465, %v4419
        %4436 = vst.msk [vmem:[%s328 + $0x70] sm:$0xff] %vm465, %v4420
        %4437 = vst.msk [vmem:[%s328 + $0x78] sm:$0xff] %vm465, %v4421
        %v4438 = vmul.f32 %v4389, %v3338
        %v4439 = vmul.f32 %v4389, %v3341
        %v4440 = vmul.f32 %v4389, %v3382
        %v4441 = vmul.f32 %v4389, %v3385
        %v4442 = vmul.f32 %v4389, %v3426
        %v4443 = vmul.f32 %v4389, %v3429
        %v4444 = vmul.f32 %v4389, %v3470
        %v4445 = vmul.f32 %v4389, %v3473
        %v4446 = vmul.f32 %v4389, %v3514
        %v4447 = vmul.f32 %v4389, %v3517
        %v4448 = vmul.f32 %v4389, %v3558
        %v4449 = vmul.f32 %v4389, %v3561
        %v4450 = vmul.f32 %v4389, %v3602
        %v4451 = vmul.f32 %v4389, %v3605
        %v4452 = vmul.f32 %v4389, %v3646
        %v4453 = vmul.f32 %v4389, %v3649
        %4454 = vst.msk [vmem:[%s335] sm:$0xff] %vm465, %v4438
        %4455 = vst.msk [vmem:[%s335 + $0x8] sm:$0xff] %vm465, %v4439
        %4456 = vst.msk [vmem:[%s335 + $0x10] sm:$0xff] %vm465, %v4440
        %4457 = vst.msk [vmem:[%s335 + $0x18] sm:$0xff] %vm465, %v4441
        %4458 = vst.msk [vmem:[%s335 + $0x20] sm:$0xff] %vm465, %v4442
        %4459 = vst.msk [vmem:[%s335 + $0x28] sm:$0xff] %vm465, %v4443
        %4460 = vst.msk [vmem:[%s335 + $0x30] sm:$0xff] %vm465, %v4444
        %4461 = vst.msk [vmem:[%s335 + $0x38] sm:$0xff] %vm465, %v4445
        %4462 = vst.msk [vmem:[%s335 + $0x40] sm:$0xff] %vm465, %v4446
        %4463 = vst.msk [vmem:[%s335 + $0x48] sm:$0xff] %vm465, %v4447
        %4464 = vst.msk [vmem:[%s335 + $0x50] sm:$0xff] %vm465, %v4448
        %4465 = vst.msk [vmem:[%s335 + $0x58] sm:$0xff] %vm465, %v4449
        %4466 = vst.msk [vmem:[%s335 + $0x60] sm:$0xff] %vm465, %v4450
        %4467 = vst.msk [vmem:[%s335 + $0x68] sm:$0xff] %vm465, %v4451
        %4468 = vst.msk [vmem:[%s335 + $0x70] sm:$0xff] %vm465, %v4452
        %4469 = vst.msk [vmem:[%s335 + $0x78] sm:$0xff] %vm465, %v4453
        %s4470 = sand.u32 %s154, 1
        %s4471 = scalar_lea.sflag [#allocation5], %s4470
        %s4472 = sand.u32 %s154, 1
        %s4473 = smul.addr %s4472, 128
        %s4474 = scalar_lea.vmem [#allocation9], %s4473
        %s4475 = sand.u32 %s180, 1
        %s4476 = scalar_lea.sflag [#allocation11], %s4475
        %s4477 = sand.u32 %s180, 1
        %s4478 = smul.addr %s4477, 128
        %s4479 = scalar_lea.vmem [#allocation10], %s4478
        // Predicated region
        $region53: #{tpu_custom_call.1} parent=39 // pred_check
          %p4480 = pneg %p164
        $region54: #{tpu_custom_call.1} parent=39 // pred_check_branch
          %4482 = sbr.rel (%p4480) target = $region56
        $region55: #{tpu_custom_call.1} parent=39 // pred_region
          %s4484 = ssub.s32 2048, 2048
          %4485 = vsyncadd %s4471, %s4484
          %s4486 = smul.addr %s31, 16
          %s4487 = smul.addr %s4486, 128
          %s4488 = scalar_lea.hbm %s5, %s4487
          %s4489 = sshll.u32 %s4474, 4
          %s4490 = int_to_ptr.vmem [resolvable:$true] %s4489
          %4495 = dma.vmem_to_hbm [thread:$0]  %s4490, 2048, %s4488, %s4471, 128, 128, 8
        $region56: #{tpu_custom_call.1} parent=39 // pred_fallthru
          _
        // Predicated region
        $region57: #{tpu_custom_call.1} parent=39 // pred_check
          %p4496 = pneg %p190
        $region58: #{tpu_custom_call.1} parent=39 // pred_check_branch
          %4498 = sbr.rel (%p4496) target = $region60
        $region59: #{tpu_custom_call.1} parent=39 // pred_region
          %s4500 = ssub.s32 2048, 2048
          %4501 = vsyncadd %s4476, %s4500
          %s4502 = smul.addr %s31, 16
          %s4503 = smul.addr %s4502, 128
          %s4504 = scalar_lea.hbm %s6, %s4503
          %s4505 = sshll.u32 %s4479, 4
          %s4506 = int_to_ptr.vmem [resolvable:$true] %s4505
          %4511 = dma.vmem_to_hbm [thread:$0]  %s4506, 2048, %s4504, %s4476, 128, 128, 8
        $region60: #{tpu_custom_call.1} parent=39 // pred_fallthru
          _
      $region40: #{tpu_custom_call.1} parent=5 // pred_fallthru
        _
      %p4512 = scmp.le.s32.totalorder 2, %s26
      // Predicated region
      $region61: #{tpu_custom_call.1} parent=5 // pred_check
        %p4513 = pneg %p4512
      $region62: #{tpu_custom_call.1} parent=5 // pred_check_branch
        %4515 = sbr.rel (%p4513) target = $region64
      $region63: #{tpu_custom_call.1} parent=5 // pred_region
        %s4516 = ssub.s32 %s26, 2
        // Predicated region
        $region65: #{tpu_custom_call.1} parent=63 // pred_check
          %p4517 = pneg %p170
        $region66: #{tpu_custom_call.1} parent=63 // pred_check_branch
          %4519 = sbr.rel (%p4517) target = $region68
        $region67: #{tpu_custom_call.1} parent=63 // pred_region
          %s4520 = sand.u32 %s155, 1
          %s4521 = scalar_lea.sflag [#allocation5], %s4520
          %s4522 = sand.u32 %s155, 1
          %s4523 = smul.addr %s4522, 128
          %s4524 = scalar_lea.vmem [#allocation9], %s4523
          %4525 = dma.done %s4521, 2048
        $region68: #{tpu_custom_call.1} parent=63 // pred_fallthru
          _
        // Predicated region
        $region69: #{tpu_custom_call.1} parent=63 // pred_check
          %p4526 = pneg %p196
        $region70: #{tpu_custom_call.1} parent=63 // pred_check_branch
          %4528 = sbr.rel (%p4526) target = $region72
        $region71: #{tpu_custom_call.1} parent=63 // pred_region
          %s4529 = sand.u32 %s181, 1
          %s4530 = scalar_lea.sflag [#allocation11], %s4529
          %s4531 = sand.u32 %s181, 1
          %s4532 = smul.addr %s4531, 128
          %s4533 = scalar_lea.vmem [#allocation10], %s4532
          %4534 = dma.done %s4530, 2048
        $region72: #{tpu_custom_call.1} parent=63 // pred_fallthru
          _
      $region64: #{tpu_custom_call.1} parent=5 // pred_fallthru
        _
    $region6: #{tpu_custom_call.1} parent=1 // loop_footer
      %s30 = sadd.s32 1, %s26
    $region7: #{tpu_custom_call.1} parent=1 // loop_footer_branch
      %25 = sbr.rel target = $region3
    $region8: #{tpu_custom_call.1} parent=1 // loop_exit
      _
    %4535 = vsyncpa [#allocation4], 1
    %s4536 = scalar_lea.sflag [#allocation4], 1
    %4537 = vsyncpa %s4536, 1
    %4538 = vsyncpa [#allocation7], 1
    %s4539 = scalar_lea.sflag [#allocation7], 1
    %4540 = vsyncpa %s4539, 1
    %4541 = vsyncpa [#allocation5], 1
    %s4542 = scalar_lea.sflag [#allocation5], 1
    %4543 = vsyncpa %s4542, 1
    %4544 = vsyncpa [#allocation11], 1
    %s4545 = scalar_lea.sflag [#allocation11], 1
    %4546 = vsyncpa %s4545, 1

</llo_original>
